<compile_context>
chip_gen: v5e
topology: v5e:2x2
jax: 0.10.0
libtpu: 0.0.40
codegen_flags: <defaults>
</compile_context>

<pallas_src>
import functools

import jax
import jax.numpy as jnp
from jax.experimental import pallas as pl
from jax.experimental.pallas import tpu as pltpu


def _conv_out_len(length, k, stride, pad):
    return (length + 2 * pad - k) // stride + 1


def _ru8(n):
    return ((n + 7) // 8) * 8


# ---------------------------------------------------------------------------
# Fused whole-network kernel (one grid step == B_TILE batch elements)
# ---------------------------------------------------------------------------
def _resnet1d_kernel(x1_ref,
                     w1_ref, b1_ref,
                     l2c1_w_ref, l2c1_b_ref, l2c2_w_ref, l2c2_b_ref,
                     l2ds_w_ref, l2ds_b_ref,
                     l3c1_w_ref, l3c1_b_ref, l3c2_w_ref, l3c2_b_ref,
                     l3ds_w_ref, l3ds_b_ref,
                     fc1_w_ref, fc1_b_ref, fc2_w_ref, fc2_b_ref,
                     o_ref,
                     s1_ref, s2_ref, s3_ref, s4_ref, s5_ref,
                     *, dims, b_tile):
    (l1, l1e, lp, lpe, l2, l2e, l3, l3e) = dims
    mdt = w1_ref.dtype            # MXU operand dtype (f32, or bf16 on v6e/v7x)

    # -- zero ONLY the pad rows (interiors are always overwritten below).
    #    Re-done every step: with a "parallel" grid axis each TensorCore has a
    #    private scratch copy, so gating on program_id(0)==0 would leave the
    #    second core's pads uninitialised. --
    def zero_pads(ref, valid):
        rows, ch = ref.shape[1], ref.shape[2]
        ref[:, pl.ds(0, 1), :] = jnp.zeros((b_tile, 1, ch), jnp.float32)
        hi = rows - (1 + valid)
        if hi > 0:
            ref[:, pl.ds(1 + valid, hi), :] = jnp.zeros((b_tile, hi, ch),
                                                        jnp.float32)

    zero_pads(s1_ref, l1)
    zero_pads(s2_ref, lp)
    zero_pads(s3_ref, l2)
    zero_pads(s4_ref, l2)
    zero_pads(s5_ref, l3)

    def conv3(src_ref, w_ref, l_eff, stride):
        """k-tap Conv1d as a sum of tap matmuls with M = b_tile * l_eff."""
        k, cin, _ = w_ref.shape
        acc = None
        for j in range(k):
            if stride > 1:
                win = src_ref[:, pl.ds(j, l_eff, stride=stride), :]
            else:
                win = src_ref[:, pl.ds(j, l_eff), :]
            part = jnp.dot(win.reshape(b_tile * l_eff, cin).astype(mdt),
                           w_ref[j], preferred_element_type=jnp.float32)
            acc = part if acc is None else acc + part
        return acc

    # ---- layer1: Conv1d(1,32,k=7,s=2,p=3) + BN + ReLU.
    #      Input was im2col'ed in the wrapper -> one matmul, M = b_tile*l1e. ----
    y = jnp.dot(x1_ref[...].astype(mdt), w1_ref[...],
                preferred_element_type=jnp.float32)
    y = jnp.maximum(y + b1_ref[...], 0.0)                        # (b*l1e, 32)
    s1_ref[:, pl.ds(1, l1), :] = y.reshape(b_tile, l1e, -1)[:, :l1, :]

    # ---- layer1: MaxPool1d(k=3,s=2,p=1).  Post-ReLU values are >= 0, so zero
    #      padding is equivalent to PyTorch's -inf padding. ----
    pooled = jnp.maximum(
        jnp.maximum(s1_ref[:, pl.ds(0, lpe, stride=2), :],
                    s1_ref[:, pl.ds(1, lpe, stride=2), :]),
        s1_ref[:, pl.ds(2, lpe, stride=2), :])                   # (b, lpe, 32)
    s2_ref[:, pl.ds(1, lp), :] = pooled[:, :lp, :]

    def res_block(src_ref, mid_ref, c1w, c1b, c2w, c2b, dsw, dsb,
                  l_out, l_eff):
        """ResidualBlock1D(stride=2) with 1x1-conv downsample; BN pre-folded."""
        cin, cmid = c1w.shape[1], c1w.shape[2]
        ident = jnp.dot(
            src_ref[:, pl.ds(1, l_eff, stride=2), :]
            .reshape(b_tile * l_eff, cin).astype(mdt),
            dsw[...], preferred_element_type=jnp.float32) + dsb[...]
        y = jnp.maximum(conv3(src_ref, c1w, l_eff, 2) + c1b[...], 0.0)
        mid_ref[:, pl.ds(1, l_out), :] = (
            y.reshape(b_tile, l_eff, cmid)[:, :l_out, :])
        y = conv3(mid_ref, c2w, l_eff, 1) + c2b[...]
        return jnp.maximum(y + ident, 0.0)                       # (b*l_eff, C)

    # ---- layer2: ResidualBlock1D(32 -> 64, stride=2) ----
    out2 = res_block(s2_ref, s3_ref, l2c1_w_ref, l2c1_b_ref,
                     l2c2_w_ref, l2c2_b_ref, l2ds_w_ref, l2ds_b_ref, l2, l2e)
    s4_ref[:, pl.ds(1, l2), :] = out2.reshape(b_tile, l2e, -1)[:, :l2, :]

    # ---- layer3: ResidualBlock1D(64 -> 128, stride=2) ----
    out3 = res_block(s4_ref, s5_ref, l3c1_w_ref, l3c1_b_ref,
                     l3c2_w_ref, l3c2_b_ref, l3ds_w_ref, l3ds_b_ref, l3, l3e)

    # ---- global average pool + classifier (fc1 + ReLU + fc2), fully fused ----
    gp = jnp.mean(out3.reshape(b_tile, l3e, -1)[:, :l3, :], axis=1)   # (b, 128)
    h = jnp.dot(gp.astype(mdt), fc1_w_ref[...],
                preferred_element_type=jnp.float32)
    h = jnp.maximum(h + fc1_b_ref[...], 0.0)                     # (b, 64)
    # TODO(synk): Dropout(0.3) is a no-op in eval mode; training-mode stochastic
    # masking is not implemented.
    o_ref[...] = jnp.dot(h.astype(mdt), fc2_w_ref[...],
                         preferred_element_type=jnp.float32) + fc2_b_ref[...]


# ---------------------------------------------------------------------------
# Trace-time weight prep (BN folding) + pallas_call wrapper
# ---------------------------------------------------------------------------
def _fold_conv_bn(w, b, bn):
    """PyTorch Conv1d weight (Cout,Cin,K)+bias and eval-BN (scale, shift) ->
    tap-major (K,Cin,Cout) weight with BN scale folded in, plus fused bias:
    (x*W + b)*s + t == x*(W*s) + (b*s + t)."""
    scale, shift = bn
    wf = jnp.transpose(w, (2, 1, 0)).astype(jnp.float32) * scale[None, None, :]
    bf = (b * scale + shift).reshape(1, -1).astype(jnp.float32)
    return wf, bf


def resnet1d_forward(params, x_ncw, *, b_tile=8, mxu_dtype=jnp.float32):
    batch, cin, l0 = x_ncw.shape
    assert cin == 1
    assert b_tile % 8 == 0, "b_tile must be a multiple of 8 (sublane tile)"

    l1 = _conv_out_len(l0, 7, 2, 3)      # conv1
    lp = _conv_out_len(l1, 3, 2, 1)      # maxpool
    l2 = _conv_out_len(lp, 3, 2, 1)      # layer2
    l3 = _conv_out_len(l2, 3, 2, 1)      # layer3
    l1e, lpe, l2e, l3e = _ru8(l1), _ru8(lp), _ru8(l2), _ru8(l3)

    num_steps = -(-batch // b_tile)
    batch_p = num_steps * b_tile

    # --- batch padding + conv1 im2col (pure layout plumbing, done by XLA) ---
    x = x_ncw.astype(jnp.float32).reshape(batch, l0)
    if batch_p != batch:
        x = jnp.pad(x, ((0, batch_p - batch), (0, 0)))
    xp = jnp.pad(x, ((0, 0), (3, 3)))
    x1 = jnp.stack([xp[:, j:j + 2 * l1:2] for j in range(7)], axis=-1)  # (B,l1,7)
    if l1e != l1:
        x1 = jnp.pad(x1, ((0, 0), (0, l1e - l1), (0, 0)))
    x1 = x1.reshape(batch_p * l1e, 7)

    # --- BN folding (eval-mode running stats) + weight layout prep ---
    p2, p3 = params['l2'], params['l3']
    w1, b1 = _fold_conv_bn(params['c1_w'], params['c1_b'], params['bn1'])
    w1 = w1.reshape(7, -1)                                       # (7, 32)
    l2c1_w, l2c1_b = _fold_conv_bn(p2['c1_w'], p2['c1_b'], p2['bn1'])
    l2c2_w, l2c2_b = _fold_conv_bn(p2['c2_w'], p2['c2_b'], p2['bn2'])
    l2ds_w, l2ds_b = _fold_conv_bn(p2['ds_w'], p2['ds_b'], p2['ds_bn'])
    l3c1_w, l3c1_b = _fold_conv_bn(p3['c1_w'], p3['c1_b'], p3['bn1'])
    l3c2_w, l3c2_b = _fold_conv_bn(p3['c2_w'], p3['c2_b'], p3['bn2'])
    l3ds_w, l3ds_b = _fold_conv_bn(p3['ds_w'], p3['ds_b'], p3['ds_bn'])
    l2ds_w, l3ds_w = l2ds_w[0], l3ds_w[0]                        # k=1 -> (Cin,Cout)
    fc1_w = params['fc1_w'].T.astype(jnp.float32)                # (128, 64)
    fc1_b = params['fc1_b'].reshape(1, -1).astype(jnp.float32)
    fc2_w = params['fc2_w'].T.astype(jnp.float32)                # (64, nc)
    fc2_b = params['fc2_b'].reshape(1, -1).astype(jnp.float32)

    def mx(w):        # matmul-operand weights (bf16 on v6e/v7x if requested)
        return w.astype(mxu_dtype)

    weights = [mx(w1), b1,
               mx(l2c1_w), l2c1_b, mx(l2c2_w), l2c2_b, mx(l2ds_w), l2ds_b,
               mx(l3c1_w), l3c1_b, mx(l3c2_w), l3c2_b, mx(l3ds_w), l3ds_b,
               mx(fc1_w), fc1_b, mx(fc2_w), fc2_b]

    c1, c2, c3 = w1.shape[1], l2c1_w.shape[2], l3c1_w.shape[2]   # 32, 64, 128
    num_classes = fc2_w.shape[1]

    # Staging-buffer rows: enough for the padded input AND for reading
    # round_up(L_out, 8) conv windows (extra rows stay zero -> garbage outputs
    # are sliced away before staging, keeping all reshapes layout-preserving).
    r1 = max(l1 + 2, 2 * (lpe - 1) + 3)
    r2 = max(lp + 2, 2 * (l2e - 1) + 3)
    r3 = max(l2 + 2, (l2e - 1) + 3)
    r4 = max(l2 + 2, 2 * (l3e - 1) + 3)
    r5 = max(l3 + 2, (l3e - 1) + 3)

    def full_spec(a):
        ndim = a.ndim
        return pl.BlockSpec(a.shape, lambda g: (0,) * ndim)     # no re-DMA

    kernel = functools.partial(
        _resnet1d_kernel,
        dims=(l1, l1e, lp, lpe, l2, l2e, l3, l3e), b_tile=b_tile)

    out = pl.pallas_call(
        kernel,
        out_shape=jax.ShapeDtypeStruct((batch_p, num_classes), jnp.float32),
        grid=(num_steps,),
        in_specs=[pl.BlockSpec((b_tile * l1e, 7), lambda g: (g, 0))]
                 + [full_spec(a) for a in weights],
        out_specs=pl.BlockSpec((b_tile, num_classes), lambda g: (g, 0)),
        scratch_shapes=[
            pltpu.VMEM((b_tile, r1, c1), jnp.float32),   # conv1 out (padded)
            pltpu.VMEM((b_tile, r2, c1), jnp.float32),   # maxpool out (padded)
            pltpu.VMEM((b_tile, r3, c2), jnp.float32),   # layer2 conv1 out
            pltpu.VMEM((b_tile, r4, c2), jnp.float32),   # layer2 block out
            pltpu.VMEM((b_tile, r5, c3), jnp.float32),   # layer3 conv1 out
        ],
        compiler_params=pltpu.CompilerParams(
            dimension_semantics=("parallel",),           # v7x: 2 TCs split steps
            vmem_limit_bytes=32 * 1024 * 1024),
    )(x1, *weights)
    return out[:batch]


# ---------------------------------------------------------------------------
# Pure-JAX (XLA) reference for validation
# ---------------------------------------------------------------------------
def _ref_forward(params, x_ncw):
    def conv_bn(x, w, b, bn, stride, padding, relu):
        scale, shift = bn
        y = jax.lax.conv_general_dilated(
            x, w, window_strides=(stride,), padding=[(padding, padding)],
            dimension_numbers=("NCH", "OIH", "NCH"))
        y = (y + b[None, :, None]) * scale[None, :, None] + shift[None, :, None]
        return jnp.maximum(y, 0.0) if relu else y

    def block(x, p):
        identity = conv_bn(x, p['ds_w'], p['ds_b'], p['ds_bn'], 2, 0, False)
        out = conv_bn(x, p['c1_w'], p['c1_b'], p['bn1'], 2, 1, True)
        out = conv_bn(out, p['c2_w'], p['c2_b'], p['bn2'], 1, 1, False)
        return jnp.maximum(out + identity, 0.0)

    x = x_ncw.astype(jnp.float32)
    x = conv_bn(x, params['c1_w'], params['c1_b'], params['bn1'], 2, 3, True)
    x = jax.lax.reduce_window(x, -jnp.inf, jax.lax.max,
                              (1, 1, 3), (1, 1, 2), [(0, 0), (0, 0), (1, 1)])
    x = block(x, params['l2'])
    x = block(x, params['l3'])
    pooled = jnp.mean(x, axis=2)
    h = jnp.maximum(pooled @ params['fc1_w'].T + params['fc1_b'], 0.0)
    return h @ params['fc2_w'].T + params['fc2_b']


# ---------------------------------------------------------------------------
# Parameters (deterministic synthetic init, BN folded to eval scale/shift)
# ---------------------------------------------------------------------------
def init_params(key):
    keys = iter(jax.random.split(key, 64))

    def conv(cout, cin, k):
        w = 0.1 * jax.random.normal(next(keys), (cout, cin, k), jnp.float32)
        b = 0.1 * jax.random.normal(next(keys), (cout,), jnp.float32)
        return w, b

    def bn(c, eps=1e-5):
        gamma = 1.0 + 0.1 * jax.random.normal(next(keys), (c,), jnp.float32)
        beta = 0.1 * jax.random.normal(next(keys), (c,), jnp.float32)
        mean = 0.1 * jax.random.normal(next(keys), (c,), jnp.float32)
        var = jax.random.uniform(next(keys), (c,), jnp.float32, 0.5, 1.5)
        scale = gamma / jnp.sqrt(var + eps)
        shift = beta - mean * scale
        return scale, shift

    def res_block(cin, cout):
        c1w, c1b = conv(cout, cin, 3)
        c2w, c2b = conv(cout, cout, 3)
        dsw, dsb = conv(cout, cin, 1)
        return dict(c1_w=c1w, c1_b=c1b, bn1=bn(cout),
                    c2_w=c2w, c2_b=c2b, bn2=bn(cout),
                    ds_w=dsw, ds_b=dsb, ds_bn=bn(cout))

    c1w, c1b = conv(32, 1, 7)
    return dict(
        c1_w=c1w, c1_b=c1b, bn1=bn(32),
        l2=res_block(32, 64),
        l3=res_block(64, 128),
        fc1_w=0.1 * jax.random.normal(next(keys), (64, 128), jnp.float32),
        fc1_b=0.1 * jax.random.normal(next(keys), (64,), jnp.float32),
        fc2_w=0.1 * jax.random.normal(next(keys), (2, 64), jnp.float32),
        fc2_b=0.1 * jax.random.normal(next(keys), (2,), jnp.float32),
    )


if __name__ == "__main__":
    key = jax.random.PRNGKey(0)
    pkey, xkey = jax.random.split(key)
    params = init_params(pkey)
    # PyTorch-style NCW input: (batch=12, in_channels=1, length=64).
    # batch=12 with b_tile=8 exercises batch padding AND gives a 2-step parallel
    # grid (so v7x's second TensorCore is not idle).
    x = jax.random.normal(xkey, (12, 1, 64), jnp.float32)

    fwd = jax.jit(functools.partial(resnet1d_forward, params, b_tile=8))
    out = jax.block_until_ready(fwd(x))
    assert out.shape == (12, 2), out.shape
    assert bool(jnp.all(jnp.isfinite(out)))

    ref = _ref_forward(params, x)
    max_diff = float(jnp.max(jnp.abs(out - ref)))
    assert jnp.allclose(out, ref, rtol=1e-3, atol=1e-3), (
        f"kernel/ref mismatch (f32), max abs diff = {max_diff}")

    # bf16-MXU-operand fast path (v6e/v7x); elementwise/accumulation stay f32.
    fwd_bf16 = jax.jit(functools.partial(resnet1d_forward, params, b_tile=8,
                                         mxu_dtype=jnp.bfloat16))
    out_bf16 = jax.block_until_ready(fwd_bf16(x))
    max_diff_bf16 = float(jnp.max(jnp.abs(out_bf16 - ref)))
    assert jnp.allclose(out_bf16, ref, rtol=5e-2, atol=5e-2), (
        f"kernel/ref mismatch (bf16 MXU), max abs diff = {max_diff_bf16}")

    print("KERNEL_OK")
</pallas_src>

<mosaic_0001>
module attributes {stable_mosaic.version = 11 : i64} {
  func.func @_resnet1d_kernel(%arg0: i32, %arg1: memref<256x7xf32, #tpu.memory_space<vmem>>, %arg2: memref<7x32xf32, #tpu.memory_space<vmem>>, %arg3: memref<1x32xf32, #tpu.memory_space<vmem>>, %arg4: memref<3x32x64xf32, #tpu.memory_space<vmem>>, %arg5: memref<1x64xf32, #tpu.memory_space<vmem>>, %arg6: memref<3x64x64xf32, #tpu.memory_space<vmem>>, %arg7: memref<1x64xf32, #tpu.memory_space<vmem>>, %arg8: memref<32x64xf32, #tpu.memory_space<vmem>>, %arg9: memref<1x64xf32, #tpu.memory_space<vmem>>, %arg10: memref<3x64x128xf32, #tpu.memory_space<vmem>>, %arg11: memref<1x128xf32, #tpu.memory_space<vmem>>, %arg12: memref<3x128x128xf32, #tpu.memory_space<vmem>>, %arg13: memref<1x128xf32, #tpu.memory_space<vmem>>, %arg14: memref<64x128xf32, #tpu.memory_space<vmem>>, %arg15: memref<1x128xf32, #tpu.memory_space<vmem>>, %arg16: memref<128x64xf32, #tpu.memory_space<vmem>>, %arg17: memref<1x64xf32, #tpu.memory_space<vmem>>, %arg18: memref<64x2xf32, #tpu.memory_space<vmem>>, %arg19: memref<1x2xf32, #tpu.memory_space<vmem>>, %arg20: memref<8x2xf32, #tpu.memory_space<vmem>>, %arg21: memref<8x34x32xf32, #tpu.memory_space<vmem>>, %arg22: memref<8x18x32xf32, #tpu.memory_space<vmem>>, %arg23: memref<8x10x64xf32, #tpu.memory_space<vmem>>, %arg24: memref<8x17x64xf32, #tpu.memory_space<vmem>>, %arg25: memref<8x10x128xf32, #tpu.memory_space<vmem>>) attributes {dimension_semantics = [#tpu.dimension_semantics<parallel>], iteration_bounds = array<i64: 2>, scalar_prefetch = 0 : i64, scratch_operands = 5 : i64, tpu.core_type = #tpu.core_type<tc>, window_params = [{transform_indices = @transform_0, window_bounds = array<i64: 256, 7>}, {pipeline_mode = #tpu.pipeline_mode<synchronous>, transform_indices = @transform_1, window_bounds = array<i64: 7, 32>}, {pipeline_mode = #tpu.pipeline_mode<synchronous>, transform_indices = @transform_2, window_bounds = array<i64: 1, 32>}, {pipeline_mode = #tpu.pipeline_mode<synchronous>, transform_indices = @transform_3, window_bounds = array<i64: 3, 32, 64>}, {pipeline_mode = #tpu.pipeline_mode<synchronous>, transform_indices = @transform_4, window_bounds = array<i64: 1, 64>}, {pipeline_mode = #tpu.pipeline_mode<synchronous>, transform_indices = @transform_5, window_bounds = array<i64: 3, 64, 64>}, {pipeline_mode = #tpu.pipeline_mode<synchronous>, transform_indices = @transform_6, window_bounds = array<i64: 1, 64>}, {pipeline_mode = #tpu.pipeline_mode<synchronous>, transform_indices = @transform_7, window_bounds = array<i64: 32, 64>}, {pipeline_mode = #tpu.pipeline_mode<synchronous>, transform_indices = @transform_8, window_bounds = array<i64: 1, 64>}, {pipeline_mode = #tpu.pipeline_mode<synchronous>, transform_indices = @transform_9, window_bounds = array<i64: 3, 64, 128>}, {pipeline_mode = #tpu.pipeline_mode<synchronous>, transform_indices = @transform_10, window_bounds = array<i64: 1, 128>}, {pipeline_mode = #tpu.pipeline_mode<synchronous>, transform_indices = @transform_11, window_bounds = array<i64: 3, 128, 128>}, {pipeline_mode = #tpu.pipeline_mode<synchronous>, transform_indices = @transform_12, window_bounds = array<i64: 1, 128>}, {pipeline_mode = #tpu.pipeline_mode<synchronous>, transform_indices = @transform_13, window_bounds = array<i64: 64, 128>}, {pipeline_mode = #tpu.pipeline_mode<synchronous>, transform_indices = @transform_14, window_bounds = array<i64: 1, 128>}, {pipeline_mode = #tpu.pipeline_mode<synchronous>, transform_indices = @transform_15, window_bounds = array<i64: 128, 64>}, {pipeline_mode = #tpu.pipeline_mode<synchronous>, transform_indices = @transform_16, window_bounds = array<i64: 1, 64>}, {pipeline_mode = #tpu.pipeline_mode<synchronous>, transform_indices = @transform_17, window_bounds = array<i64: 64, 2>}, {pipeline_mode = #tpu.pipeline_mode<synchronous>, transform_indices = @transform_18, window_bounds = array<i64: 1, 2>}, {transform_indices = @transform_19, window_bounds = array<i64: 8, 2>}]} {
    %cst = arith.constant 0.000000e+00 : f32
    %0 = vector.broadcast %cst : f32 to vector<8x1x32xf32>
    %c0 = arith.constant 0 : index
    %c0_0 = arith.constant 0 : index
    %c0_1 = arith.constant 0 : index
    %1 = vector.load %arg21[%c0, %c0_0, %c0_1] : memref<8x34x32xf32, #tpu.memory_space<vmem>>, vector<8x1x32xf32>
    tpu.vector_store %arg21[%c0, %c0_0, %c0_1], %0 {strides = array<i32>} : memref<8x34x32xf32, #tpu.memory_space<vmem>>, vector<8x1x32xf32>,
    %cst_2 = arith.constant 0.000000e+00 : f32
    %2 = vector.broadcast %cst_2 : f32 to vector<8x1x32xf32>
    %c0_3 = arith.constant 0 : index
    %c33 = arith.constant 33 : index
    %c0_4 = arith.constant 0 : index
    %3 = vector.load %arg21[%c0_3, %c33, %c0_4] : memref<8x34x32xf32, #tpu.memory_space<vmem>>, vector<8x1x32xf32>
    tpu.vector_store %arg21[%c0_3, %c33, %c0_4], %2 {strides = array<i32>} : memref<8x34x32xf32, #tpu.memory_space<vmem>>, vector<8x1x32xf32>,
    %cst_5 = arith.constant 0.000000e+00 : f32
    %4 = vector.broadcast %cst_5 : f32 to vector<8x1x32xf32>
    %c0_6 = arith.constant 0 : index
    %c0_7 = arith.constant 0 : index
    %c0_8 = arith.constant 0 : index
    %5 = vector.load %arg22[%c0_6, %c0_7, %c0_8] : memref<8x18x32xf32, #tpu.memory_space<vmem>>, vector<8x1x32xf32>
    tpu.vector_store %arg22[%c0_6, %c0_7, %c0_8], %4 {strides = array<i32>} : memref<8x18x32xf32, #tpu.memory_space<vmem>>, vector<8x1x32xf32>,
    %cst_9 = arith.constant 0.000000e+00 : f32
    %6 = vector.broadcast %cst_9 : f32 to vector<8x1x32xf32>
    %c0_10 = arith.constant 0 : index
    %c17 = arith.constant 17 : index
    %c0_11 = arith.constant 0 : index
    %7 = vector.load %arg22[%c0_10, %c17, %c0_11] : memref<8x18x32xf32, #tpu.memory_space<vmem>>, vector<8x1x32xf32>
    tpu.vector_store %arg22[%c0_10, %c17, %c0_11], %6 {strides = array<i32>} : memref<8x18x32xf32, #tpu.memory_space<vmem>>, vector<8x1x32xf32>,
    %cst_12 = arith.constant 0.000000e+00 : f32
    %8 = vector.broadcast %cst_12 : f32 to vector<8x1x64xf32>
    %c0_13 = arith.constant 0 : index
    %c0_14 = arith.constant 0 : index
    %c0_15 = arith.constant 0 : index
    %9 = vector.load %arg23[%c0_13, %c0_14, %c0_15] : memref<8x10x64xf32, #tpu.memory_space<vmem>>, vector<8x1x64xf32>
    tpu.vector_store %arg23[%c0_13, %c0_14, %c0_15], %8 {strides = array<i32>} : memref<8x10x64xf32, #tpu.memory_space<vmem>>, vector<8x1x64xf32>,
    %cst_16 = arith.constant 0.000000e+00 : f32
    %10 = vector.broadcast %cst_16 : f32 to vector<8x1x64xf32>
    %c0_17 = arith.constant 0 : index
    %c9 = arith.constant 9 : index
    %c0_18 = arith.constant 0 : index
    %11 = vector.load %arg23[%c0_17, %c9, %c0_18] : memref<8x10x64xf32, #tpu.memory_space<vmem>>, vector<8x1x64xf32>
    tpu.vector_store %arg23[%c0_17, %c9, %c0_18], %10 {strides = array<i32>} : memref<8x10x64xf32, #tpu.memory_space<vmem>>, vector<8x1x64xf32>,
    %cst_19 = arith.constant 0.000000e+00 : f32
    %12 = vector.broadcast %cst_19 : f32 to vector<8x1x64xf32>
    %c0_20 = arith.constant 0 : index
    %c0_21 = arith.constant 0 : index
    %c0_22 = arith.constant 0 : index
    %13 = vector.load %arg24[%c0_20, %c0_21, %c0_22] : memref<8x17x64xf32, #tpu.memory_space<vmem>>, vector<8x1x64xf32>
    tpu.vector_store %arg24[%c0_20, %c0_21, %c0_22], %12 {strides = array<i32>} : memref<8x17x64xf32, #tpu.memory_space<vmem>>, vector<8x1x64xf32>,
    %cst_23 = arith.constant 0.000000e+00 : f32
    %14 = vector.broadcast %cst_23 : f32 to vector<8x8x64xf32>
    %c0_24 = arith.constant 0 : index
    %c9_25 = arith.constant 9 : index
    %c0_26 = arith.constant 0 : index
    %15 = vector.load %arg24[%c0_24, %c9_25, %c0_26] : memref<8x17x64xf32, #tpu.memory_space<vmem>>, vector<8x8x64xf32>
    tpu.vector_store %arg24[%c0_24, %c9_25, %c0_26], %14 {strides = array<i32>} : memref<8x17x64xf32, #tpu.memory_space<vmem>>, vector<8x8x64xf32>,
    %cst_27 = arith.constant 0.000000e+00 : f32
    %16 = vector.broadcast %cst_27 : f32 to vector<8x1x128xf32>
    %c0_28 = arith.constant 0 : index
    %c0_29 = arith.constant 0 : index
    %c0_30 = arith.constant 0 : index
    %17 = vector.load %arg25[%c0_28, %c0_29, %c0_30] : memref<8x10x128xf32, #tpu.memory_space<vmem>>, vector<8x1x128xf32>
    tpu.vector_store %arg25[%c0_28, %c0_29, %c0_30], %16 {strides = array<i32>} : memref<8x10x128xf32, #tpu.memory_space<vmem>>, vector<8x1x128xf32>,
    %cst_31 = arith.constant 0.000000e+00 : f32
    %18 = vector.broadcast %cst_31 : f32 to vector<8x5x128xf32>
    %c0_32 = arith.constant 0 : index
    %c5 = arith.constant 5 : index
    %c0_33 = arith.constant 0 : index
    %19 = vector.load %arg25[%c0_32, %c5, %c0_33] : memref<8x10x128xf32, #tpu.memory_space<vmem>>, vector<8x5x128xf32>
    tpu.vector_store %arg25[%c0_32, %c5, %c0_33], %18 {strides = array<i32>} : memref<8x10x128xf32, #tpu.memory_space<vmem>>, vector<8x5x128xf32>,
    %c0_34 = arith.constant 0 : index
    %c0_35 = arith.constant 0 : index
    %20 = vector.load %arg1[%c0_34, %c0_35] : memref<256x7xf32, #tpu.memory_space<vmem>>, vector<256x7xf32>
    %c0_36 = arith.constant 0 : index
    %c0_37 = arith.constant 0 : index
    %21 = vector.load %arg2[%c0_36, %c0_37] : memref<7x32xf32, #tpu.memory_space<vmem>>, vector<7x32xf32>
    %cst_38 = arith.constant dense<0.000000e+00> : vector<256x32xf32>
    %22 = tpu.matmul %20, %21, %cst_38 {dimension_numbers = #tpu.dot_dimension_numbers<[1], [0], [0], [1], [0, 0, 1, 1], [], []>} : vector<256x7xf32>, vector<7x32xf32>, vector<256x32xf32> -> vector<256x32xf32>
    %c0_39 = arith.constant 0 : index
    %c0_40 = arith.constant 0 : index
    %23 = vector.load %arg3[%c0_39, %c0_40] : memref<1x32xf32, #tpu.memory_space<vmem>>, vector<1x32xf32>
    %24 = vector.broadcast %23 : vector<1x32xf32> to vector<256x32xf32>
    %25 = arith.addf %22, %24 : vector<256x32xf32>
    %cst_41 = arith.constant 0.000000e+00 : f32
    %26 = vector.broadcast %cst_41 : f32 to vector<256x32xf32>
    %27 = arith.maximumf %25, %26 : vector<256x32xf32>
    %28 = vector.shape_cast %27 : vector<256x32xf32> to vector<8x32x32xf32>
    %c0_42 = arith.constant 0 : index
    %c1 = arith.constant 1 : index
    %c0_43 = arith.constant 0 : index
    %29 = vector.load %arg21[%c0_42, %c1, %c0_43] : memref<8x34x32xf32, #tpu.memory_space<vmem>>, vector<8x32x32xf32>
    tpu.vector_store %arg21[%c0_42, %c1, %c0_43], %28 {strides = array<i32>} : memref<8x34x32xf32, #tpu.memory_space<vmem>>, vector<8x32x32xf32>,
    %c0_44 = arith.constant 0 : index
    %c0_45 = arith.constant 0 : index
    %c0_46 = arith.constant 0 : index
    %30 = tpu.strided_load %arg21[%c0_44, %c0_45, %c0_46] {strides = array<i32: 1, 2, 1>} : memref<8x34x32xf32, #tpu.memory_space<vmem>>, vector<8x16x32xf32>
    %c0_47 = arith.constant 0 : index
    %c1_48 = arith.constant 1 : index
    %c0_49 = arith.constant 0 : index
    %31 = tpu.strided_load %arg21[%c0_47, %c1_48, %c0_49] {strides = array<i32: 1, 2, 1>} : memref<8x34x32xf32, #tpu.memory_space<vmem>>, vector<8x16x32xf32>
    %32 = arith.maximumf %30, %31 : vector<8x16x32xf32>
    %c0_50 = arith.constant 0 : index
    %c2 = arith.constant 2 : index
    %c0_51 = arith.constant 0 : index
    %33 = tpu.strided_load %arg21[%c0_50, %c2, %c0_51] {strides = array<i32: 1, 2, 1>} : memref<8x34x32xf32, #tpu.memory_space<vmem>>, vector<8x16x32xf32>
    %34 = arith.maximumf %32, %33 : vector<8x16x32xf32>
    %c0_52 = arith.constant 0 : index
    %c1_53 = arith.constant 1 : index
    %c0_54 = arith.constant 0 : index
    %35 = vector.load %arg22[%c0_52, %c1_53, %c0_54] : memref<8x18x32xf32, #tpu.memory_space<vmem>>, vector<8x16x32xf32>
    tpu.vector_store %arg22[%c0_52, %c1_53, %c0_54], %34 {strides = array<i32>} : memref<8x18x32xf32, #tpu.memory_space<vmem>>, vector<8x16x32xf32>,
    %c0_55 = arith.constant 0 : index
    %c1_56 = arith.constant 1 : index
    %c0_57 = arith.constant 0 : index
    %36 = tpu.strided_load %arg22[%c0_55, %c1_56, %c0_57] {strides = array<i32: 1, 2, 1>} : memref<8x18x32xf32, #tpu.memory_space<vmem>>, vector<8x8x32xf32>
    %37 = vector.shape_cast %36 : vector<8x8x32xf32> to vector<64x32xf32>
    %c0_58 = arith.constant 0 : index
    %c0_59 = arith.constant 0 : index
    %38 = vector.load %arg8[%c0_58, %c0_59] : memref<32x64xf32, #tpu.memory_space<vmem>>, vector<32x64xf32>
    %cst_60 = arith.constant dense<0.000000e+00> : vector<64x64xf32>
    %39 = tpu.matmul %37, %38, %cst_60 {dimension_numbers = #tpu.dot_dimension_numbers<[1], [0], [0], [1], [0, 0, 1, 1], [], []>} : vector<64x32xf32>, vector<32x64xf32>, vector<64x64xf32> -> vector<64x64xf32>
    %c0_61 = arith.constant 0 : index
    %c0_62 = arith.constant 0 : index
    %40 = vector.load %arg9[%c0_61, %c0_62] : memref<1x64xf32, #tpu.memory_space<vmem>>, vector<1x64xf32>
    %41 = vector.broadcast %40 : vector<1x64xf32> to vector<64x64xf32>
    %42 = arith.addf %39, %41 : vector<64x64xf32>
    %c0_63 = arith.constant 0 : index
    %c0_64 = arith.constant 0 : index
    %c0_65 = arith.constant 0 : index
    %43 = tpu.strided_load %arg22[%c0_63, %c0_64, %c0_65] {strides = array<i32: 1, 2, 1>} : memref<8x18x32xf32, #tpu.memory_space<vmem>>, vector<8x8x32xf32>
    %44 = vector.shape_cast %43 : vector<8x8x32xf32> to vector<64x32xf32>
    %c0_66 = arith.constant 0 : index
    %c0_67 = arith.constant 0 : index
    %c0_68 = arith.constant 0 : index
    %45 = vector.load %arg4[%c0_66, %c0_67, %c0_68] : memref<3x32x64xf32, #tpu.memory_space<vmem>>, vector<1x32x64xf32>
    %46 = vector.shape_cast %45 : vector<1x32x64xf32> to vector<32x64xf32>
    %cst_69 = arith.constant dense<0.000000e+00> : vector<64x64xf32>
    %47 = tpu.matmul %44, %46, %cst_69 {dimension_numbers = #tpu.dot_dimension_numbers<[1], [0], [0], [1], [0, 0, 1, 1], [], []>} : vector<64x32xf32>, vector<32x64xf32>, vector<64x64xf32> -> vector<64x64xf32>
    %c0_70 = arith.constant 0 : index
    %c1_71 = arith.constant 1 : index
    %c0_72 = arith.constant 0 : index
    %48 = tpu.strided_load %arg22[%c0_70, %c1_71, %c0_72] {strides = array<i32: 1, 2, 1>} : memref<8x18x32xf32, #tpu.memory_space<vmem>>, vector<8x8x32xf32>
    %49 = vector.shape_cast %48 : vector<8x8x32xf32> to vector<64x32xf32>
    %c1_73 = arith.constant 1 : index
    %c0_74 = arith.constant 0 : index
    %c0_75 = arith.constant 0 : index
    %50 = vector.load %arg4[%c1_73, %c0_74, %c0_75] : memref<3x32x64xf32, #tpu.memory_space<vmem>>, vector<1x32x64xf32>
    %51 = vector.shape_cast %50 : vector<1x32x64xf32> to vector<32x64xf32>
    %cst_76 = arith.constant dense<0.000000e+00> : vector<64x64xf32>
    %52 = tpu.matmul %49, %51, %cst_76 {dimension_numbers = #tpu.dot_dimension_numbers<[1], [0], [0], [1], [0, 0, 1, 1], [], []>} : vector<64x32xf32>, vector<32x64xf32>, vector<64x64xf32> -> vector<64x64xf32>
    %53 = arith.addf %47, %52 : vector<64x64xf32>
    %c0_77 = arith.constant 0 : index
    %c2_78 = arith.constant 2 : index
    %c0_79 = arith.constant 0 : index
    %54 = tpu.strided_load %arg22[%c0_77, %c2_78, %c0_79] {strides = array<i32: 1, 2, 1>} : memref<8x18x32xf32, #tpu.memory_space<vmem>>, vector<8x8x32xf32>
    %55 = vector.shape_cast %54 : vector<8x8x32xf32> to vector<64x32xf32>
    %c2_80 = arith.constant 2 : index
    %c0_81 = arith.constant 0 : index
    %c0_82 = arith.constant 0 : index
    %56 = vector.load %arg4[%c2_80, %c0_81, %c0_82] : memref<3x32x64xf32, #tpu.memory_space<vmem>>, vector<1x32x64xf32>
    %57 = vector.shape_cast %56 : vector<1x32x64xf32> to vector<32x64xf32>
    %cst_83 = arith.constant dense<0.000000e+00> : vector<64x64xf32>
    %58 = tpu.matmul %55, %57, %cst_83 {dimension_numbers = #tpu.dot_dimension_numbers<[1], [0], [0], [1], [0, 0, 1, 1], [], []>} : vector<64x32xf32>, vector<32x64xf32>, vector<64x64xf32> -> vector<64x64xf32>
    %59 = arith.addf %53, %58 : vector<64x64xf32>
    %c0_84 = arith.constant 0 : index
    %c0_85 = arith.constant 0 : index
    %60 = vector.load %arg5[%c0_84, %c0_85] : memref<1x64xf32, #tpu.memory_space<vmem>>, vector<1x64xf32>
    %61 = vector.broadcast %60 : vector<1x64xf32> to vector<64x64xf32>
    %62 = arith.addf %59, %61 : vector<64x64xf32>
    %cst_86 = arith.constant 0.000000e+00 : f32
    %63 = vector.broadcast %cst_86 : f32 to vector<64x64xf32>
    %64 = arith.maximumf %62, %63 : vector<64x64xf32>
    %65 = vector.shape_cast %64 : vector<64x64xf32> to vector<8x8x64xf32>
    %c0_87 = arith.constant 0 : index
    %c1_88 = arith.constant 1 : index
    %c0_89 = arith.constant 0 : index
    %66 = vector.load %arg23[%c0_87, %c1_88, %c0_89] : memref<8x10x64xf32, #tpu.memory_space<vmem>>, vector<8x8x64xf32>
    tpu.vector_store %arg23[%c0_87, %c1_88, %c0_89], %65 {strides = array<i32>} : memref<8x10x64xf32, #tpu.memory_space<vmem>>, vector<8x8x64xf32>,
    %c0_90 = arith.constant 0 : index
    %c0_91 = arith.constant 0 : index
    %c0_92 = arith.constant 0 : index
    %67 = vector.load %arg23[%c0_90, %c0_91, %c0_92] : memref<8x10x64xf32, #tpu.memory_space<vmem>>, vector<8x8x64xf32>
    %68 = vector.shape_cast %67 : vector<8x8x64xf32> to vector<64x64xf32>
    %c0_93 = arith.constant 0 : index
    %c0_94 = arith.constant 0 : index
    %c0_95 = arith.constant 0 : index
    %69 = vector.load %arg6[%c0_93, %c0_94, %c0_95] : memref<3x64x64xf32, #tpu.memory_space<vmem>>, vector<1x64x64xf32>
    %70 = vector.shape_cast %69 : vector<1x64x64xf32> to vector<64x64xf32>
    %cst_96 = arith.constant dense<0.000000e+00> : vector<64x64xf32>
    %71 = tpu.matmul %68, %70, %cst_96 {dimension_numbers = #tpu.dot_dimension_numbers<[1], [0], [0], [1], [0, 0, 1, 1], [], []>} : vector<64x64xf32>, vector<64x64xf32>, vector<64x64xf32> -> vector<64x64xf32>
    %c0_97 = arith.constant 0 : index
    %c1_98 = arith.constant 1 : index
    %c0_99 = arith.constant 0 : index
    %72 = vector.load %arg23[%c0_97, %c1_98, %c0_99] : memref<8x10x64xf32, #tpu.memory_space<vmem>>, vector<8x8x64xf32>
    %73 = vector.shape_cast %72 : vector<8x8x64xf32> to vector<64x64xf32>
    %c1_100 = arith.constant 1 : index
    %c0_101 = arith.constant 0 : index
    %c0_102 = arith.constant 0 : index
    %74 = vector.load %arg6[%c1_100, %c0_101, %c0_102] : memref<3x64x64xf32, #tpu.memory_space<vmem>>, vector<1x64x64xf32>
    %75 = vector.shape_cast %74 : vector<1x64x64xf32> to vector<64x64xf32>
    %cst_103 = arith.constant dense<0.000000e+00> : vector<64x64xf32>
    %76 = tpu.matmul %73, %75, %cst_103 {dimension_numbers = #tpu.dot_dimension_numbers<[1], [0], [0], [1], [0, 0, 1, 1], [], []>} : vector<64x64xf32>, vector<64x64xf32>, vector<64x64xf32> -> vector<64x64xf32>
    %77 = arith.addf %71, %76 : vector<64x64xf32>
    %c0_104 = arith.constant 0 : index
    %c2_105 = arith.constant 2 : index
    %c0_106 = arith.constant 0 : index
    %78 = vector.load %arg23[%c0_104, %c2_105, %c0_106] : memref<8x10x64xf32, #tpu.memory_space<vmem>>, vector<8x8x64xf32>
    %79 = vector.shape_cast %78 : vector<8x8x64xf32> to vector<64x64xf32>
    %c2_107 = arith.constant 2 : index
    %c0_108 = arith.constant 0 : index
    %c0_109 = arith.constant 0 : index
    %80 = vector.load %arg6[%c2_107, %c0_108, %c0_109] : memref<3x64x64xf32, #tpu.memory_space<vmem>>, vector<1x64x64xf32>
    %81 = vector.shape_cast %80 : vector<1x64x64xf32> to vector<64x64xf32>
    %cst_110 = arith.constant dense<0.000000e+00> : vector<64x64xf32>
    %82 = tpu.matmul %79, %81, %cst_110 {dimension_numbers = #tpu.dot_dimension_numbers<[1], [0], [0], [1], [0, 0, 1, 1], [], []>} : vector<64x64xf32>, vector<64x64xf32>, vector<64x64xf32> -> vector<64x64xf32>
    %83 = arith.addf %77, %82 : vector<64x64xf32>
    %c0_111 = arith.constant 0 : index
    %c0_112 = arith.constant 0 : index
    %84 = vector.load %arg7[%c0_111, %c0_112] : memref<1x64xf32, #tpu.memory_space<vmem>>, vector<1x64xf32>
    %85 = vector.broadcast %84 : vector<1x64xf32> to vector<64x64xf32>
    %86 = arith.addf %83, %85 : vector<64x64xf32>
    %87 = arith.addf %86, %42 : vector<64x64xf32>
    %cst_113 = arith.constant 0.000000e+00 : f32
    %88 = vector.broadcast %cst_113 : f32 to vector<64x64xf32>
    %89 = arith.maximumf %87, %88 : vector<64x64xf32>
    %90 = vector.shape_cast %89 : vector<64x64xf32> to vector<8x8x64xf32>
    %c0_114 = arith.constant 0 : index
    %c1_115 = arith.constant 1 : index
    %c0_116 = arith.constant 0 : index
    %91 = vector.load %arg24[%c0_114, %c1_115, %c0_116] : memref<8x17x64xf32, #tpu.memory_space<vmem>>, vector<8x8x64xf32>
    tpu.vector_store %arg24[%c0_114, %c1_115, %c0_116], %90 {strides = array<i32>} : memref<8x17x64xf32, #tpu.memory_space<vmem>>, vector<8x8x64xf32>,
    %c0_117 = arith.constant 0 : index
    %c1_118 = arith.constant 1 : index
    %c0_119 = arith.constant 0 : index
    %92 = tpu.strided_load %arg24[%c0_117, %c1_118, %c0_119] {strides = array<i32: 1, 2, 1>} : memref<8x17x64xf32, #tpu.memory_space<vmem>>, vector<8x8x64xf32>
    %93 = vector.shape_cast %92 : vector<8x8x64xf32> to vector<64x64xf32>
    %c0_120 = arith.constant 0 : index
    %c0_121 = arith.constant 0 : index
    %94 = vector.load %arg14[%c0_120, %c0_121] : memref<64x128xf32, #tpu.memory_space<vmem>>, vector<64x128xf32>
    %cst_122 = arith.constant dense<0.000000e+00> : vector<64x128xf32>
    %95 = tpu.matmul %93, %94, %cst_122 {dimension_numbers = #tpu.dot_dimension_numbers<[1], [0], [0], [1], [0, 0, 1, 1], [], []>} : vector<64x64xf32>, vector<64x128xf32>, vector<64x128xf32> -> vector<64x128xf32>
    %c0_123 = arith.constant 0 : index
    %c0_124 = arith.constant 0 : index
    %96 = vector.load %arg15[%c0_123, %c0_124] : memref<1x128xf32, #tpu.memory_space<vmem>>, vector<1x128xf32>
    %97 = vector.broadcast %96 : vector<1x128xf32> to vector<64x128xf32>
    %98 = arith.addf %95, %97 : vector<64x128xf32>
    %c0_125 = arith.constant 0 : index
    %c0_126 = arith.constant 0 : index
    %c0_127 = arith.constant 0 : index
    %99 = tpu.strided_load %arg24[%c0_125, %c0_126, %c0_127] {strides = array<i32: 1, 2, 1>} : memref<8x17x64xf32, #tpu.memory_space<vmem>>, vector<8x8x64xf32>
    %100 = vector.shape_cast %99 : vector<8x8x64xf32> to vector<64x64xf32>
    %c0_128 = arith.constant 0 : index
    %c0_129 = arith.constant 0 : index
    %c0_130 = arith.constant 0 : index
    %101 = vector.load %arg10[%c0_128, %c0_129, %c0_130] : memref<3x64x128xf32, #tpu.memory_space<vmem>>, vector<1x64x128xf32>
    %102 = vector.shape_cast %101 : vector<1x64x128xf32> to vector<64x128xf32>
    %cst_131 = arith.constant dense<0.000000e+00> : vector<64x128xf32>
    %103 = tpu.matmul %100, %102, %cst_131 {dimension_numbers = #tpu.dot_dimension_numbers<[1], [0], [0], [1], [0, 0, 1, 1], [], []>} : vector<64x64xf32>, vector<64x128xf32>, vector<64x128xf32> -> vector<64x128xf32>
    %c0_132 = arith.constant 0 : index
    %c1_133 = arith.constant 1 : index
    %c0_134 = arith.constant 0 : index
    %104 = tpu.strided_load %arg24[%c0_132, %c1_133, %c0_134] {strides = array<i32: 1, 2, 1>} : memref<8x17x64xf32, #tpu.memory_space<vmem>>, vector<8x8x64xf32>
    %105 = vector.shape_cast %104 : vector<8x8x64xf32> to vector<64x64xf32>
    %c1_135 = arith.constant 1 : index
    %c0_136 = arith.constant 0 : index
    %c0_137 = arith.constant 0 : index
    %106 = vector.load %arg10[%c1_135, %c0_136, %c0_137] : memref<3x64x128xf32, #tpu.memory_space<vmem>>, vector<1x64x128xf32>
    %107 = vector.shape_cast %106 : vector<1x64x128xf32> to vector<64x128xf32>
    %cst_138 = arith.constant dense<0.000000e+00> : vector<64x128xf32>
    %108 = tpu.matmul %105, %107, %cst_138 {dimension_numbers = #tpu.dot_dimension_numbers<[1], [0], [0], [1], [0, 0, 1, 1], [], []>} : vector<64x64xf32>, vector<64x128xf32>, vector<64x128xf32> -> vector<64x128xf32>
    %109 = arith.addf %103, %108 : vector<64x128xf32>
    %c0_139 = arith.constant 0 : index
    %c2_140 = arith.constant 2 : index
    %c0_141 = arith.constant 0 : index
    %110 = tpu.strided_load %arg24[%c0_139, %c2_140, %c0_141] {strides = array<i32: 1, 2, 1>} : memref<8x17x64xf32, #tpu.memory_space<vmem>>, vector<8x8x64xf32>
    %111 = vector.shape_cast %110 : vector<8x8x64xf32> to vector<64x64xf32>
    %c2_142 = arith.constant 2 : index
    %c0_143 = arith.constant 0 : index
    %c0_144 = arith.constant 0 : index
    %112 = vector.load %arg10[%c2_142, %c0_143, %c0_144] : memref<3x64x128xf32, #tpu.memory_space<vmem>>, vector<1x64x128xf32>
    %113 = vector.shape_cast %112 : vector<1x64x128xf32> to vector<64x128xf32>
    %cst_145 = arith.constant dense<0.000000e+00> : vector<64x128xf32>
    %114 = tpu.matmul %111, %113, %cst_145 {dimension_numbers = #tpu.dot_dimension_numbers<[1], [0], [0], [1], [0, 0, 1, 1], [], []>} : vector<64x64xf32>, vector<64x128xf32>, vector<64x128xf32> -> vector<64x128xf32>
    %115 = arith.addf %109, %114 : vector<64x128xf32>
    %c0_146 = arith.constant 0 : index
    %c0_147 = arith.constant 0 : index
    %116 = vector.load %arg11[%c0_146, %c0_147] : memref<1x128xf32, #tpu.memory_space<vmem>>, vector<1x128xf32>
    %117 = vector.broadcast %116 : vector<1x128xf32> to vector<64x128xf32>
    %118 = arith.addf %115, %117 : vector<64x128xf32>
    %cst_148 = arith.constant 0.000000e+00 : f32
    %119 = vector.broadcast %cst_148 : f32 to vector<64x128xf32>
    %120 = arith.maximumf %118, %119 : vector<64x128xf32>
    %121 = vector.shape_cast %120 : vector<64x128xf32> to vector<8x8x128xf32>
    %122 = vector.extract_strided_slice %121 {offsets = [0, 0, 0], sizes = [8, 4, 128], strides = [1, 1, 1]} : vector<8x8x128xf32> to vector<8x4x128xf32>
    %c0_149 = arith.constant 0 : index
    %c1_150 = arith.constant 1 : index
    %c0_151 = arith.constant 0 : index
    %123 = vector.load %arg25[%c0_149, %c1_150, %c0_151] : memref<8x10x128xf32, #tpu.memory_space<vmem>>, vector<8x4x128xf32>
    tpu.vector_store %arg25[%c0_149, %c1_150, %c0_151], %122 {strides = array<i32>} : memref<8x10x128xf32, #tpu.memory_space<vmem>>, vector<8x4x128xf32>,
    %c0_152 = arith.constant 0 : index
    %c0_153 = arith.constant 0 : index
    %c0_154 = arith.constant 0 : index
    %124 = vector.load %arg25[%c0_152, %c0_153, %c0_154] : memref<8x10x128xf32, #tpu.memory_space<vmem>>, vector<8x8x128xf32>
    %125 = vector.shape_cast %124 : vector<8x8x128xf32> to vector<64x128xf32>
    %c0_155 = arith.constant 0 : index
    %c0_156 = arith.constant 0 : index
    %c0_157 = arith.constant 0 : index
    %126 = vector.load %arg12[%c0_155, %c0_156, %c0_157] : memref<3x128x128xf32, #tpu.memory_space<vmem>>, vector<1x128x128xf32>
    %127 = vector.shape_cast %126 : vector<1x128x128xf32> to vector<128x128xf32>
    %cst_158 = arith.constant dense<0.000000e+00> : vector<64x128xf32>
    %128 = tpu.matmul %125, %127, %cst_158 {dimension_numbers = #tpu.dot_dimension_numbers<[1], [0], [0], [1], [0, 0, 1, 1], [], []>} : vector<64x128xf32>, vector<128x128xf32>, vector<64x128xf32> -> vector<64x128xf32>
    %c0_159 = arith.constant 0 : index
    %c1_160 = arith.constant 1 : index
    %c0_161 = arith.constant 0 : index
    %129 = vector.load %arg25[%c0_159, %c1_160, %c0_161] : memref<8x10x128xf32, #tpu.memory_space<vmem>>, vector<8x8x128xf32>
    %130 = vector.shape_cast %129 : vector<8x8x128xf32> to vector<64x128xf32>
    %c1_162 = arith.constant 1 : index
    %c0_163 = arith.constant 0 : index
    %c0_164 = arith.constant 0 : index
    %131 = vector.load %arg12[%c1_162, %c0_163, %c0_164] : memref<3x128x128xf32, #tpu.memory_space<vmem>>, vector<1x128x128xf32>
    %132 = vector.shape_cast %131 : vector<1x128x128xf32> to vector<128x128xf32>
    %cst_165 = arith.constant dense<0.000000e+00> : vector<64x128xf32>
    %133 = tpu.matmul %130, %132, %cst_165 {dimension_numbers = #tpu.dot_dimension_numbers<[1], [0], [0], [1], [0, 0, 1, 1], [], []>} : vector<64x128xf32>, vector<128x128xf32>, vector<64x128xf32> -> vector<64x128xf32>
    %134 = arith.addf %128, %133 : vector<64x128xf32>
    %c0_166 = arith.constant 0 : index
    %c2_167 = arith.constant 2 : index
    %c0_168 = arith.constant 0 : index
    %135 = vector.load %arg25[%c0_166, %c2_167, %c0_168] : memref<8x10x128xf32, #tpu.memory_space<vmem>>, vector<8x8x128xf32>
    %136 = vector.shape_cast %135 : vector<8x8x128xf32> to vector<64x128xf32>
    %c2_169 = arith.constant 2 : index
    %c0_170 = arith.constant 0 : index
    %c0_171 = arith.constant 0 : index
    %137 = vector.load %arg12[%c2_169, %c0_170, %c0_171] : memref<3x128x128xf32, #tpu.memory_space<vmem>>, vector<1x128x128xf32>
    %138 = vector.shape_cast %137 : vector<1x128x128xf32> to vector<128x128xf32>
    %cst_172 = arith.constant dense<0.000000e+00> : vector<64x128xf32>
    %139 = tpu.matmul %136, %138, %cst_172 {dimension_numbers = #tpu.dot_dimension_numbers<[1], [0], [0], [1], [0, 0, 1, 1], [], []>} : vector<64x128xf32>, vector<128x128xf32>, vector<64x128xf32> -> vector<64x128xf32>
    %140 = arith.addf %134, %139 : vector<64x128xf32>
    %c0_173 = arith.constant 0 : index
    %c0_174 = arith.constant 0 : index
    %141 = vector.load %arg13[%c0_173, %c0_174] : memref<1x128xf32, #tpu.memory_space<vmem>>, vector<1x128xf32>
    %142 = vector.broadcast %141 : vector<1x128xf32> to vector<64x128xf32>
    %143 = arith.addf %140, %142 : vector<64x128xf32>
    %144 = arith.addf %143, %98 : vector<64x128xf32>
    %cst_175 = arith.constant 0.000000e+00 : f32
    %145 = vector.broadcast %cst_175 : f32 to vector<64x128xf32>
    %146 = arith.maximumf %144, %145 : vector<64x128xf32>
    %147 = vector.shape_cast %146 : vector<64x128xf32> to vector<8x8x128xf32>
    %148 = vector.extract_strided_slice %147 {offsets = [0, 0, 0], sizes = [8, 4, 128], strides = [1, 1, 1]} : vector<8x8x128xf32> to vector<8x4x128xf32>
    %cst_176 = arith.constant dense<0.000000e+00> : vector<8x128xf32>
    %149 = vector.multi_reduction <add>, %148, %cst_176 [1] : vector<8x4x128xf32> to vector<8x128xf32>
    %cst_177 = arith.constant 4.000000e+00 : f32
    %150 = vector.broadcast %cst_177 : f32 to vector<8x128xf32>
    %151 = arith.divf %149, %150 : vector<8x128xf32>
    %c0_178 = arith.constant 0 : index
    %c0_179 = arith.constant 0 : index
    %152 = vector.load %arg16[%c0_178, %c0_179] : memref<128x64xf32, #tpu.memory_space<vmem>>, vector<128x64xf32>
    %cst_180 = arith.constant dense<0.000000e+00> : vector<8x64xf32>
    %153 = tpu.matmul %151, %152, %cst_180 {dimension_numbers = #tpu.dot_dimension_numbers<[1], [0], [0], [1], [0, 0, 1, 1], [], []>} : vector<8x128xf32>, vector<128x64xf32>, vector<8x64xf32> -> vector<8x64xf32>
    %c0_181 = arith.constant 0 : index
    %c0_182 = arith.constant 0 : index
    %154 = vector.load %arg17[%c0_181, %c0_182] : memref<1x64xf32, #tpu.memory_space<vmem>>, vector<1x64xf32>
    %155 = vector.broadcast %154 : vector<1x64xf32> to vector<8x64xf32>
    %156 = arith.addf %153, %155 : vector<8x64xf32>
    %cst_183 = arith.constant 0.000000e+00 : f32
    %157 = vector.broadcast %cst_183 : f32 to vector<8x64xf32>
    %158 = arith.maximumf %156, %157 : vector<8x64xf32>
    %c0_184 = arith.constant 0 : index
    %c0_185 = arith.constant 0 : index
    %159 = vector.load %arg18[%c0_184, %c0_185] : memref<64x2xf32, #tpu.memory_space<vmem>>, vector<64x2xf32>
    %cst_186 = arith.constant dense<0.000000e+00> : vector<8x2xf32>
    %160 = tpu.matmul %158, %159, %cst_186 {dimension_numbers = #tpu.dot_dimension_numbers<[1], [0], [0], [1], [0, 0, 1, 1], [], []>} : vector<8x64xf32>, vector<64x2xf32>, vector<8x2xf32> -> vector<8x2xf32>
    %c0_187 = arith.constant 0 : index
    %c0_188 = arith.constant 0 : index
    %161 = vector.load %arg19[%c0_187, %c0_188] : memref<1x2xf32, #tpu.memory_space<vmem>>, vector<1x2xf32>
    %162 = vector.broadcast %161 : vector<1x2xf32> to vector<8x2xf32>
    %163 = arith.addf %160, %162 : vector<8x2xf32>
    %c0_189 = arith.constant 0 : index
    %c0_190 = arith.constant 0 : index
    %164 = vector.load %arg20[%c0_189, %c0_190] : memref<8x2xf32, #tpu.memory_space<vmem>>, vector<8x2xf32>
    tpu.vector_store %arg20[%c0_189, %c0_190], %163 {strides = array<i32>} : memref<8x2xf32, #tpu.memory_space<vmem>>, vector<8x2xf32>,
    return
  }
  func.func @transform_0(%arg0: i32) -> (i32, i32) {
    %c0_i32 = arith.constant 0 : i32
    %c0_i32_0 = arith.constant 0 : i32
    return %arg0, %c0_i32 : i32, i32
  }
  func.func @transform_1(%arg0: i32) -> (i32, i32) {
    %c0_i32 = arith.constant 0 : i32
    %c0_i32_0 = arith.constant 0 : i32
    %c0_i32_1 = arith.constant 0 : i32
    return %c0_i32, %c0_i32_0 : i32, i32
  }
  func.func @transform_2(%arg0: i32) -> (i32, i32) {
    %c0_i32 = arith.constant 0 : i32
    %c0_i32_0 = arith.constant 0 : i32
    %c0_i32_1 = arith.constant 0 : i32
    return %c0_i32, %c0_i32_0 : i32, i32
  }
  func.func @transform_3(%arg0: i32) -> (i32, i32, i32) {
    %c0_i32 = arith.constant 0 : i32
    %c0_i32_0 = arith.constant 0 : i32
    %c0_i32_1 = arith.constant 0 : i32
    %c0_i32_2 = arith.constant 0 : i32
    return %c0_i32, %c0_i32_0, %c0_i32_1 : i32, i32, i32
  }
  func.func @transform_4(%arg0: i32) -> (i32, i32) {
    %c0_i32 = arith.constant 0 : i32
    %c0_i32_0 = arith.constant 0 : i32
    %c0_i32_1 = arith.constant 0 : i32
    return %c0_i32, %c0_i32_0 : i32, i32
  }
  func.func @transform_5(%arg0: i32) -> (i32, i32, i32) {
    %c0_i32 = arith.constant 0 : i32
    %c0_i32_0 = arith.constant 0 : i32
    %c0_i32_1 = arith.constant 0 : i32
    %c0_i32_2 = arith.constant 0 : i32
    return %c0_i32, %c0_i32_0, %c0_i32_1 : i32, i32, i32
  }
  func.func @transform_6(%arg0: i32) -> (i32, i32) {
    %c0_i32 = arith.constant 0 : i32
    %c0_i32_0 = arith.constant 0 : i32
    %c0_i32_1 = arith.constant 0 : i32
    return %c0_i32, %c0_i32_0 : i32, i32
  }
  func.func @transform_7(%arg0: i32) -> (i32, i32) {
    %c0_i32 = arith.constant 0 : i32
    %c0_i32_0 = arith.constant 0 : i32
    %c0_i32_1 = arith.constant 0 : i32
    return %c0_i32, %c0_i32_0 : i32, i32
  }
  func.func @transform_8(%arg0: i32) -> (i32, i32) {
    %c0_i32 = arith.constant 0 : i32
    %c0_i32_0 = arith.constant 0 : i32
    %c0_i32_1 = arith.constant 0 : i32
    return %c0_i32, %c0_i32_0 : i32, i32
  }
  func.func @transform_9(%arg0: i32) -> (i32, i32, i32) {
    %c0_i32 = arith.constant 0 : i32
    %c0_i32_0 = arith.constant 0 : i32
    %c0_i32_1 = arith.constant 0 : i32
    %c0_i32_2 = arith.constant 0 : i32
    return %c0_i32, %c0_i32_0, %c0_i32_1 : i32, i32, i32
  }
  func.func @transform_10(%arg0: i32) -> (i32, i32) {
    %c0_i32 = arith.constant 0 : i32
    %c0_i32_0 = arith.constant 0 : i32
    %c0_i32_1 = arith.constant 0 : i32
    return %c0_i32, %c0_i32_0 : i32, i32
  }
  func.func @transform_11(%arg0: i32) -> (i32, i32, i32) {
    %c0_i32 = arith.constant 0 : i32
    %c0_i32_0 = arith.constant 0 : i32
    %c0_i32_1 = arith.constant 0 : i32
    %c0_i32_2 = arith.constant 0 : i32
    return %c0_i32, %c0_i32_0, %c0_i32_1 : i32, i32, i32
  }
  func.func @transform_12(%arg0: i32) -> (i32, i32) {
    %c0_i32 = arith.constant 0 : i32
    %c0_i32_0 = arith.constant 0 : i32
    %c0_i32_1 = arith.constant 0 : i32
    return %c0_i32, %c0_i32_0 : i32, i32
  }
  func.func @transform_13(%arg0: i32) -> (i32, i32) {
    %c0_i32 = arith.constant 0 : i32
    %c0_i32_0 = arith.constant 0 : i32
    %c0_i32_1 = arith.constant 0 : i32
    return %c0_i32, %c0_i32_0 : i32, i32
  }
  func.func @transform_14(%arg0: i32) -> (i32, i32) {
    %c0_i32 = arith.constant 0 : i32
    %c0_i32_0 = arith.constant 0 : i32
    %c0_i32_1 = arith.constant 0 : i32
    return %c0_i32, %c0_i32_0 : i32, i32
  }
  func.func @transform_15(%arg0: i32) -> (i32, i32) {
    %c0_i32 = arith.constant 0 : i32
    %c0_i32_0 = arith.constant 0 : i32
    %c0_i32_1 = arith.constant 0 : i32
    return %c0_i32, %c0_i32_0 : i32, i32
  }
  func.func @transform_16(%arg0: i32) -> (i32, i32) {
    %c0_i32 = arith.constant 0 : i32
    %c0_i32_0 = arith.constant 0 : i32
    %c0_i32_1 = arith.constant 0 : i32
    return %c0_i32, %c0_i32_0 : i32, i32
  }
  func.func @transform_17(%arg0: i32) -> (i32, i32) {
    %c0_i32 = arith.constant 0 : i32
    %c0_i32_0 = arith.constant 0 : i32
    %c0_i32_1 = arith.constant 0 : i32
    return %c0_i32, %c0_i32_0 : i32, i32
  }
  func.func @transform_18(%arg0: i32) -> (i32, i32) {
    %c0_i32 = arith.constant 0 : i32
    %c0_i32_0 = arith.constant 0 : i32
    %c0_i32_1 = arith.constant 0 : i32
    return %c0_i32, %c0_i32_0 : i32, i32
  }
  func.func @transform_19(%arg0: i32) -> (i32, i32) {
    %c0_i32 = arith.constant 0 : i32
    %c0_i32_0 = arith.constant 0 : i32
    return %arg0, %c0_i32 : i32, i32
  }
}

</mosaic_0001>

<llo_original>
// kernel: resnet1d_forward.1
$region0: #{resnet1d_forward.1}
  #allocation0 [shape = 'u32[]', space=smem, size = 0x4, offset = 0x4, fixed_abs, tag = 'smem constant byte address 0x4 - core index']
  #allocation1 [shape = 'u32[72,128]{1,0:T(1,128)}', space=vmem, size = 0x9000, scoped, tag = 'internal scratch']
  #allocation2 [shape = 'f32[8,34,32]{2,1,0:T(8,128)}', space=vmem, size = 0x28000, scoped, tag = 'scratch operand']
  #allocation3 [shape = 'f32[8,18,32]{2,1,0:T(8,128)}', space=vmem, size = 0x18000, scoped, tag = 'scratch operand']
  #allocation4 [shape = 'f32[8,10,64]{2,1,0:T(8,128)}', space=vmem, size = 0x10000, scoped, tag = 'scratch operand']
  #allocation5 [shape = 'f32[8,17,64]{2,1,0:T(8,128)}', space=vmem, size = 0x18000, scoped, tag = 'scratch operand']
  #allocation6 [shape = 'f32[8,10,128]{2,1,0:T(8,128)}', space=vmem, size = 0x10000, scoped, tag = 'scratch operand']
  %s0 = inlined_call_operand.vmem [shape: f32[512,7], index: 0, kind: input, shape index: {}]
  %s1 = inlined_call_operand.vmem [shape: f32[7,32], index: 1, kind: input, shape index: {}]
  %s2 = inlined_call_operand.vmem [shape: f32[1,32], index: 2, kind: input, shape index: {}]
  %s3 = inlined_call_operand.vmem [shape: f32[3,32,64], index: 3, kind: input, shape index: {}]
  %s4 = inlined_call_operand.vmem [shape: f32[1,64], index: 4, kind: input, shape index: {}]
  %s5 = inlined_call_operand.vmem [shape: f32[3,64,64], index: 5, kind: input, shape index: {}]
  %s6 = inlined_call_operand.vmem [shape: f32[1,64], index: 6, kind: input, shape index: {}]
  %s7 = inlined_call_operand.vmem [shape: f32[32,64], index: 7, kind: input, shape index: {}]
  %s8 = inlined_call_operand.vmem [shape: f32[1,64], index: 8, kind: input, shape index: {}]
  %s9 = inlined_call_operand.vmem [shape: f32[3,64,128], index: 9, kind: input, shape index: {}]
  %s10 = inlined_call_operand.hbm [shape: f32[1,128], index: 10, kind: input, shape index: {}]
  %s11 = inlined_call_operand.vmem [shape: f32[3,128,128], index: 11, kind: input, shape index: {}]
  %s12 = inlined_call_operand.hbm [shape: f32[1,128], index: 12, kind: input, shape index: {}]
  %s13 = inlined_call_operand.hbm [shape: f32[64,128], index: 13, kind: input, shape index: {}]
  %s14 = inlined_call_operand.hbm [shape: f32[1,128], index: 14, kind: input, shape index: {}]
  %s15 = inlined_call_operand.vmem [shape: f32[128,64], index: 15, kind: input, shape index: {}]
  %s16 = inlined_call_operand.hbm [shape: f32[1,64], index: 16, kind: input, shape index: {}]
  %s17 = inlined_call_operand.hbm [shape: f32[64,2], index: 17, kind: input, shape index: {}]
  %s18 = inlined_call_operand.hbm [shape: f32[1,2], index: 18, kind: input, shape index: {}]
  %s19 = inlined_call_operand.vmem [shape: f32[16,2], index: 19, kind: output, shape index: {}]
  %s20 = sld [smem:[#allocation0]]
  $region137: #{resnet1d_forward.1} parent=0
    _
  %s22 = ssub.s32 1, %s20
  %s23 = scalar_select 0, %s22, %s20
  $region1: #{resnet1d_forward.1} parent=0
    #allocation7 [shape = 'u8[512]{0}', space=vmem, size = 0x400, scoped, tag = 'input window, operand 10, single buffered']
    #allocation8 [shape = 's32[2]{0}', space=sflag, size = 0x8, scoped, tag = 'scoped memory for resnet1d_forward.1']
    #allocation9 [shape = 'u8[512]{0}', space=vmem, size = 0x400, scoped, tag = 'input window, operand 12, single buffered']
    #allocation10 [shape = 's32[1]{0}', space=sflag, size = 0x4, scoped, tag = 'scoped memory for resnet1d_forward.1']
    #allocation11 [shape = 'u8[32768]{0}', space=vmem, size = 0x8000, scoped, tag = 'input window, operand 13, single buffered']
    #allocation12 [shape = 'u8[512]{0}', space=vmem, size = 0x400, scoped, tag = 'input window, operand 14, single buffered']
    #allocation13 [shape = 's32[1]{0}', space=sflag, size = 0x4, scoped, tag = 'scoped memory for resnet1d_forward.1']
    #allocation14 [shape = 'u8[512]{0}', space=vmem, size = 0x400, scoped, tag = 'input window, operand 16, single buffered']
    #allocation15 [shape = 'u8[32768]{0}', space=vmem, size = 0x8000, scoped, tag = 'input window, operand 17, single buffered']
    #allocation16 [shape = 's32[1]{0}', space=sflag, size = 0x4, scoped, tag = 'scoped memory for resnet1d_forward.1']
    #allocation17 [shape = 'u8[512]{0}', space=vmem, size = 0x400, scoped, tag = 'input window, operand 18, single buffered']
    %24 = vsyncpa [#allocation8], 0
    %25 = vsyncpa [#allocation10], 0
    %26 = vsyncpa [#allocation13], 0
    %27 = vsyncpa [#allocation16], 0
    loop: start=0, step=1, limit=4
    $region2: #{resnet1d_forward.1} parent=1 // loop_pre_header
      _
    $region3: #{resnet1d_forward.1} parent=1 // loop_header
      %s29 = sphi 0, %s33
      %p30 = scmp.ge.s32.totalorder %s29, 4
      %s39 = sphi 0, %s41
      %s42 = sphi 0, %s39
      %s43 = sphi 0, %s42
      %s59 = sphi 0, %s43
      %s63 = sphi 0, %s63
      %s65 = sphi 0, %s63
      %s66 = sphi 0, %s65
      %s80 = sphi 0, %s66
      %s84 = sphi 0, %s84
      %s86 = sphi 0, %s84
      %s87 = sphi 0, %s86
      %s101 = sphi 0, %s87
      %s105 = sphi 0, %s105
      %s107 = sphi 0, %s105
      %s108 = sphi 0, %s107
      %s122 = sphi 0, %s108
      %s126 = sphi 0, %s126
      %s128 = sphi 0, %s126
      %s129 = sphi 0, %s128
      %s143 = sphi 0, %s129
      %s147 = sphi 0, %s147
      %s149 = sphi 0, %s147
      %s150 = sphi 0, %s149
      %s164 = sphi 0, %s150
      %s168 = sphi 0, %s168
      %s170 = sphi 0, %s168
      %s171 = sphi 0, %s170
      %s185 = sphi 0, %s171
      %s189 = sphi 0, %s189
      %s191 = sphi 0, %s189
      %s192 = sphi 0, %s191
      %s206 = sphi 0, %s192
      %s210 = sphi 0, %s210
      %s212 = sphi 0, %s210
      %s213 = sphi 0, %s212
      %s227 = sphi 0, %s213
      %s231 = sphi 0, %s231
      %s233 = sphi 0, %s231
      %s234 = sphi 0, %s233
      %s248 = sphi 0, %s234
      %s252 = sphi 0, %s252
      %s254 = sphi 0, %s252
      %s255 = sphi 0, %s254
      %s269 = sphi 0, %s255
      %s273 = sphi 0, %s273
      %s275 = sphi 0, %s273
      %s276 = sphi 0, %s275
      %s290 = sphi 0, %s276
      %s294 = sphi 0, %s294
      %s296 = sphi 0, %s294
      %s297 = sphi 0, %s296
      %s311 = sphi 0, %s297
      %s315 = sphi 0, %s315
      %s317 = sphi 0, %s315
      %s318 = sphi 0, %s317
      %s332 = sphi 0, %s318
      %s336 = sphi 0, %s336
      %s338 = sphi 0, %s336
      %s339 = sphi 0, %s338
      %s353 = sphi 0, %s339
      %s357 = sphi 0, %s357
      %s359 = sphi 0, %s357
      %s360 = sphi 0, %s359
      %s374 = sphi 0, %s360
      %s378 = sphi 0, %s378
      %s380 = sphi 0, %s378
      %s381 = sphi 0, %s380
      %s395 = sphi 0, %s381
      %s399 = sphi 0, %s399
      %s401 = sphi 0, %s399
      %s402 = sphi 0, %s401
      %s416 = sphi 0, %s402
      %s420 = sphi 0, %s420
      %s422 = sphi 0, %s420
      %s423 = sphi 0, %s422
      %s437 = sphi 0, %s423
      %s443 = sphi 0, %s445
      %s446 = sphi 0, %s443
      %s447 = sphi 0, %s446
      %s463 = sphi 0, %s447
    $region4: #{resnet1d_forward.1} parent=1 // loop_header_branch
      %32 = sbr.rel (%p30) target = $region8
    $region5: #{resnet1d_forward.1} parent=1 // loop_body
      %s34 = ssub.s32 %s29, 1
      %s35 = ssub.s32 %s29, 2
      %s36 = sadd.s32 %s29, 1
      %s37 = ssub.s32 %s29, %s36
      %p38 = scmp.eq.s32.totalorder %s37, 0
      %s40 = sadd.s32 %s39, 1
      %s41 = scalar_select %p38, %s39, %s40
      %p44 = pneg %p38
      %p45 = scmp.eq.s32.totalorder %s29, 1
      %p46 = por %p44, %p45
      %p47 = scmp.ne.s32.totalorder %s39, %s42
      %p48 = scmp.eq.s32.totalorder %s29, 0
      %p49 = por %p47, %p48
      %p50 = scmp.ne.s32.totalorder %s39, %s42
      %p51 = scmp.eq.s32.totalorder %s34, 1
      %p52 = por %p50, %p51
      %p53 = scmp.ne.s32.totalorder %s42, %s43
      %p54 = scmp.eq.s32.totalorder %s34, 0
      %p55 = por %p53, %p54
      %p56 = scmp.ne.s32.totalorder %s42, %s43
      %p57 = scmp.eq.s32.totalorder %s35, 1
      %p58 = por %p56, %p57
      %p60 = scmp.ne.s32.totalorder %s43, %s59
      %p61 = scmp.eq.s32.totalorder %s35, 0
      %p62 = por %p60, %p61
      %s64 = sadd.s32 %s63, 1
      %p67 = scmp.eq.s32.totalorder %s29, 1
      %p68 = scmp.ne.s32.totalorder %s63, %s65
      %p69 = scmp.eq.s32.totalorder %s29, 0
      %p70 = por %p68, %p69
      %p71 = scmp.ne.s32.totalorder %s63, %s65
      %p72 = scmp.eq.s32.totalorder %s34, 1
      %p73 = por %p71, %p72
      %p74 = scmp.ne.s32.totalorder %s65, %s66
      %p75 = scmp.eq.s32.totalorder %s34, 0
      %p76 = por %p74, %p75
      %p77 = scmp.ne.s32.totalorder %s65, %s66
      %p78 = scmp.eq.s32.totalorder %s35, 1
      %p79 = por %p77, %p78
      %p81 = scmp.ne.s32.totalorder %s66, %s80
      %p82 = scmp.eq.s32.totalorder %s35, 0
      %p83 = por %p81, %p82
      %s85 = sadd.s32 %s84, 1
      %p88 = scmp.eq.s32.totalorder %s29, 1
      %p89 = scmp.ne.s32.totalorder %s84, %s86
      %p90 = scmp.eq.s32.totalorder %s29, 0
      %p91 = por %p89, %p90
      %p92 = scmp.ne.s32.totalorder %s84, %s86
      %p93 = scmp.eq.s32.totalorder %s34, 1
      %p94 = por %p92, %p93
      %p95 = scmp.ne.s32.totalorder %s86, %s87
      %p96 = scmp.eq.s32.totalorder %s34, 0
      %p97 = por %p95, %p96
      %p98 = scmp.ne.s32.totalorder %s86, %s87
      %p99 = scmp.eq.s32.totalorder %s35, 1
      %p100 = por %p98, %p99
      %p102 = scmp.ne.s32.totalorder %s87, %s101
      %p103 = scmp.eq.s32.totalorder %s35, 0
      %p104 = por %p102, %p103
      %s106 = sadd.s32 %s105, 1
      %p109 = scmp.eq.s32.totalorder %s29, 1
      %p110 = scmp.ne.s32.totalorder %s105, %s107
      %p111 = scmp.eq.s32.totalorder %s29, 0
      %p112 = por %p110, %p111
      %p113 = scmp.ne.s32.totalorder %s105, %s107
      %p114 = scmp.eq.s32.totalorder %s34, 1
      %p115 = por %p113, %p114
      %p116 = scmp.ne.s32.totalorder %s107, %s108
      %p117 = scmp.eq.s32.totalorder %s34, 0
      %p118 = por %p116, %p117
      %p119 = scmp.ne.s32.totalorder %s107, %s108
      %p120 = scmp.eq.s32.totalorder %s35, 1
      %p121 = por %p119, %p120
      %p123 = scmp.ne.s32.totalorder %s108, %s122
      %p124 = scmp.eq.s32.totalorder %s35, 0
      %p125 = por %p123, %p124
      %s127 = sadd.s32 %s126, 1
      %p130 = scmp.eq.s32.totalorder %s29, 1
      %p131 = scmp.ne.s32.totalorder %s126, %s128
      %p132 = scmp.eq.s32.totalorder %s29, 0
      %p133 = por %p131, %p132
      %p134 = scmp.ne.s32.totalorder %s126, %s128
      %p135 = scmp.eq.s32.totalorder %s34, 1
      %p136 = por %p134, %p135
      %p137 = scmp.ne.s32.totalorder %s128, %s129
      %p138 = scmp.eq.s32.totalorder %s34, 0
      %p139 = por %p137, %p138
      %p140 = scmp.ne.s32.totalorder %s128, %s129
      %p141 = scmp.eq.s32.totalorder %s35, 1
      %p142 = por %p140, %p141
      %p144 = scmp.ne.s32.totalorder %s129, %s143
      %p145 = scmp.eq.s32.totalorder %s35, 0
      %p146 = por %p144, %p145
      %s148 = sadd.s32 %s147, 1
      %p151 = scmp.eq.s32.totalorder %s29, 1
      %p152 = scmp.ne.s32.totalorder %s147, %s149
      %p153 = scmp.eq.s32.totalorder %s29, 0
      %p154 = por %p152, %p153
      %p155 = scmp.ne.s32.totalorder %s147, %s149
      %p156 = scmp.eq.s32.totalorder %s34, 1
      %p157 = por %p155, %p156
      %p158 = scmp.ne.s32.totalorder %s149, %s150
      %p159 = scmp.eq.s32.totalorder %s34, 0
      %p160 = por %p158, %p159
      %p161 = scmp.ne.s32.totalorder %s149, %s150
      %p162 = scmp.eq.s32.totalorder %s35, 1
      %p163 = por %p161, %p162
      %p165 = scmp.ne.s32.totalorder %s150, %s164
      %p166 = scmp.eq.s32.totalorder %s35, 0
      %p167 = por %p165, %p166
      %s169 = sadd.s32 %s168, 1
      %p172 = scmp.eq.s32.totalorder %s29, 1
      %p173 = scmp.ne.s32.totalorder %s168, %s170
      %p174 = scmp.eq.s32.totalorder %s29, 0
      %p175 = por %p173, %p174
      %p176 = scmp.ne.s32.totalorder %s168, %s170
      %p177 = scmp.eq.s32.totalorder %s34, 1
      %p178 = por %p176, %p177
      %p179 = scmp.ne.s32.totalorder %s170, %s171
      %p180 = scmp.eq.s32.totalorder %s34, 0
      %p181 = por %p179, %p180
      %p182 = scmp.ne.s32.totalorder %s170, %s171
      %p183 = scmp.eq.s32.totalorder %s35, 1
      %p184 = por %p182, %p183
      %p186 = scmp.ne.s32.totalorder %s171, %s185
      %p187 = scmp.eq.s32.totalorder %s35, 0
      %p188 = por %p186, %p187
      %s190 = sadd.s32 %s189, 1
      %p193 = scmp.eq.s32.totalorder %s29, 1
      %p194 = scmp.ne.s32.totalorder %s189, %s191
      %p195 = scmp.eq.s32.totalorder %s29, 0
      %p196 = por %p194, %p195
      %p197 = scmp.ne.s32.totalorder %s189, %s191
      %p198 = scmp.eq.s32.totalorder %s34, 1
      %p199 = por %p197, %p198
      %p200 = scmp.ne.s32.totalorder %s191, %s192
      %p201 = scmp.eq.s32.totalorder %s34, 0
      %p202 = por %p200, %p201
      %p203 = scmp.ne.s32.totalorder %s191, %s192
      %p204 = scmp.eq.s32.totalorder %s35, 1
      %p205 = por %p203, %p204
      %p207 = scmp.ne.s32.totalorder %s192, %s206
      %p208 = scmp.eq.s32.totalorder %s35, 0
      %p209 = por %p207, %p208
      %s211 = sadd.s32 %s210, 1
      %p214 = scmp.eq.s32.totalorder %s29, 1
      %p215 = scmp.ne.s32.totalorder %s210, %s212
      %p216 = scmp.eq.s32.totalorder %s29, 0
      %p217 = por %p215, %p216
      %p218 = scmp.ne.s32.totalorder %s210, %s212
      %p219 = scmp.eq.s32.totalorder %s34, 1
      %p220 = por %p218, %p219
      %p221 = scmp.ne.s32.totalorder %s212, %s213
      %p222 = scmp.eq.s32.totalorder %s34, 0
      %p223 = por %p221, %p222
      %p224 = scmp.ne.s32.totalorder %s212, %s213
      %p225 = scmp.eq.s32.totalorder %s35, 1
      %p226 = por %p224, %p225
      %p228 = scmp.ne.s32.totalorder %s213, %s227
      %p229 = scmp.eq.s32.totalorder %s35, 0
      %p230 = por %p228, %p229
      %s232 = sadd.s32 %s231, 1
      %p235 = scmp.eq.s32.totalorder %s29, 1
      %p236 = scmp.ne.s32.totalorder %s231, %s233
      %p237 = scmp.eq.s32.totalorder %s29, 0
      %p238 = por %p236, %p237
      %p239 = scmp.ne.s32.totalorder %s231, %s233
      %p240 = scmp.eq.s32.totalorder %s34, 1
      %p241 = por %p239, %p240
      %p242 = scmp.ne.s32.totalorder %s233, %s234
      %p243 = scmp.eq.s32.totalorder %s34, 0
      %p244 = por %p242, %p243
      %p245 = scmp.ne.s32.totalorder %s233, %s234
      %p246 = scmp.eq.s32.totalorder %s35, 1
      %p247 = por %p245, %p246
      %p249 = scmp.ne.s32.totalorder %s234, %s248
      %p250 = scmp.eq.s32.totalorder %s35, 0
      %p251 = por %p249, %p250
      %s253 = sadd.s32 %s252, 1
      %p256 = scmp.eq.s32.totalorder %s29, 1
      %p257 = scmp.ne.s32.totalorder %s252, %s254
      %p258 = scmp.eq.s32.totalorder %s29, 0
      %p259 = por %p257, %p258
      %p260 = scmp.ne.s32.totalorder %s252, %s254
      %p261 = scmp.eq.s32.totalorder %s34, 1
      %p262 = por %p260, %p261
      %p263 = scmp.ne.s32.totalorder %s254, %s255
      %p264 = scmp.eq.s32.totalorder %s34, 0
      %p265 = por %p263, %p264
      %p266 = scmp.ne.s32.totalorder %s254, %s255
      %p267 = scmp.eq.s32.totalorder %s35, 1
      %p268 = por %p266, %p267
      %p270 = scmp.ne.s32.totalorder %s255, %s269
      %p271 = scmp.eq.s32.totalorder %s35, 0
      %p272 = por %p270, %p271
      %s274 = sadd.s32 %s273, 1
      %p277 = scmp.eq.s32.totalorder %s29, 1
      %p278 = scmp.ne.s32.totalorder %s273, %s275
      %p279 = scmp.eq.s32.totalorder %s29, 0
      %p280 = por %p278, %p279
      %p281 = scmp.ne.s32.totalorder %s273, %s275
      %p282 = scmp.eq.s32.totalorder %s34, 1
      %p283 = por %p281, %p282
      %p284 = scmp.ne.s32.totalorder %s275, %s276
      %p285 = scmp.eq.s32.totalorder %s34, 0
      %p286 = por %p284, %p285
      %p287 = scmp.ne.s32.totalorder %s275, %s276
      %p288 = scmp.eq.s32.totalorder %s35, 1
      %p289 = por %p287, %p288
      %p291 = scmp.ne.s32.totalorder %s276, %s290
      %p292 = scmp.eq.s32.totalorder %s35, 0
      %p293 = por %p291, %p292
      %s295 = sadd.s32 %s294, 1
      %p298 = scmp.eq.s32.totalorder %s29, 1
      %p299 = scmp.ne.s32.totalorder %s294, %s296
      %p300 = scmp.eq.s32.totalorder %s29, 0
      %p301 = por %p299, %p300
      %p302 = scmp.ne.s32.totalorder %s294, %s296
      %p303 = scmp.eq.s32.totalorder %s34, 1
      %p304 = por %p302, %p303
      %p305 = scmp.ne.s32.totalorder %s296, %s297
      %p306 = scmp.eq.s32.totalorder %s34, 0
      %p307 = por %p305, %p306
      %p308 = scmp.ne.s32.totalorder %s296, %s297
      %p309 = scmp.eq.s32.totalorder %s35, 1
      %p310 = por %p308, %p309
      %p312 = scmp.ne.s32.totalorder %s297, %s311
      %p313 = scmp.eq.s32.totalorder %s35, 0
      %p314 = por %p312, %p313
      %s316 = sadd.s32 %s315, 1
      %p319 = scmp.eq.s32.totalorder %s29, 1
      %p320 = scmp.ne.s32.totalorder %s315, %s317
      %p321 = scmp.eq.s32.totalorder %s29, 0
      %p322 = por %p320, %p321
      %p323 = scmp.ne.s32.totalorder %s315, %s317
      %p324 = scmp.eq.s32.totalorder %s34, 1
      %p325 = por %p323, %p324
      %p326 = scmp.ne.s32.totalorder %s317, %s318
      %p327 = scmp.eq.s32.totalorder %s34, 0
      %p328 = por %p326, %p327
      %p329 = scmp.ne.s32.totalorder %s317, %s318
      %p330 = scmp.eq.s32.totalorder %s35, 1
      %p331 = por %p329, %p330
      %p333 = scmp.ne.s32.totalorder %s318, %s332
      %p334 = scmp.eq.s32.totalorder %s35, 0
      %p335 = por %p333, %p334
      %s337 = sadd.s32 %s336, 1
      %p340 = scmp.eq.s32.totalorder %s29, 1
      %p341 = scmp.ne.s32.totalorder %s336, %s338
      %p342 = scmp.eq.s32.totalorder %s29, 0
      %p343 = por %p341, %p342
      %p344 = scmp.ne.s32.totalorder %s336, %s338
      %p345 = scmp.eq.s32.totalorder %s34, 1
      %p346 = por %p344, %p345
      %p347 = scmp.ne.s32.totalorder %s338, %s339
      %p348 = scmp.eq.s32.totalorder %s34, 0
      %p349 = por %p347, %p348
      %p350 = scmp.ne.s32.totalorder %s338, %s339
      %p351 = scmp.eq.s32.totalorder %s35, 1
      %p352 = por %p350, %p351
      %p354 = scmp.ne.s32.totalorder %s339, %s353
      %p355 = scmp.eq.s32.totalorder %s35, 0
      %p356 = por %p354, %p355
      %s358 = sadd.s32 %s357, 1
      %p361 = scmp.eq.s32.totalorder %s29, 1
      %p362 = scmp.ne.s32.totalorder %s357, %s359
      %p363 = scmp.eq.s32.totalorder %s29, 0
      %p364 = por %p362, %p363
      %p365 = scmp.ne.s32.totalorder %s357, %s359
      %p366 = scmp.eq.s32.totalorder %s34, 1
      %p367 = por %p365, %p366
      %p368 = scmp.ne.s32.totalorder %s359, %s360
      %p369 = scmp.eq.s32.totalorder %s34, 0
      %p370 = por %p368, %p369
      %p371 = scmp.ne.s32.totalorder %s359, %s360
      %p372 = scmp.eq.s32.totalorder %s35, 1
      %p373 = por %p371, %p372
      %p375 = scmp.ne.s32.totalorder %s360, %s374
      %p376 = scmp.eq.s32.totalorder %s35, 0
      %p377 = por %p375, %p376
      %s379 = sadd.s32 %s378, 1
      %p382 = scmp.eq.s32.totalorder %s29, 1
      %p383 = scmp.ne.s32.totalorder %s378, %s380
      %p384 = scmp.eq.s32.totalorder %s29, 0
      %p385 = por %p383, %p384
      %p386 = scmp.ne.s32.totalorder %s378, %s380
      %p387 = scmp.eq.s32.totalorder %s34, 1
      %p388 = por %p386, %p387
      %p389 = scmp.ne.s32.totalorder %s380, %s381
      %p390 = scmp.eq.s32.totalorder %s34, 0
      %p391 = por %p389, %p390
      %p392 = scmp.ne.s32.totalorder %s380, %s381
      %p393 = scmp.eq.s32.totalorder %s35, 1
      %p394 = por %p392, %p393
      %p396 = scmp.ne.s32.totalorder %s381, %s395
      %p397 = scmp.eq.s32.totalorder %s35, 0
      %p398 = por %p396, %p397
      %s400 = sadd.s32 %s399, 1
      %p403 = scmp.eq.s32.totalorder %s29, 1
      %p404 = scmp.ne.s32.totalorder %s399, %s401
      %p405 = scmp.eq.s32.totalorder %s29, 0
      %p406 = por %p404, %p405
      %p407 = scmp.ne.s32.totalorder %s399, %s401
      %p408 = scmp.eq.s32.totalorder %s34, 1
      %p409 = por %p407, %p408
      %p410 = scmp.ne.s32.totalorder %s401, %s402
      %p411 = scmp.eq.s32.totalorder %s34, 0
      %p412 = por %p410, %p411
      %p413 = scmp.ne.s32.totalorder %s401, %s402
      %p414 = scmp.eq.s32.totalorder %s35, 1
      %p415 = por %p413, %p414
      %p417 = scmp.ne.s32.totalorder %s402, %s416
      %p418 = scmp.eq.s32.totalorder %s35, 0
      %p419 = por %p417, %p418
      %s421 = sadd.s32 %s420, 1
      %p424 = scmp.eq.s32.totalorder %s29, 1
      %p425 = scmp.ne.s32.totalorder %s420, %s422
      %p426 = scmp.eq.s32.totalorder %s29, 0
      %p427 = por %p425, %p426
      %p428 = scmp.ne.s32.totalorder %s420, %s422
      %p429 = scmp.eq.s32.totalorder %s34, 1
      %p430 = por %p428, %p429
      %p431 = scmp.ne.s32.totalorder %s422, %s423
      %p432 = scmp.eq.s32.totalorder %s34, 0
      %p433 = por %p431, %p432
      %p434 = scmp.ne.s32.totalorder %s422, %s423
      %p435 = scmp.eq.s32.totalorder %s35, 1
      %p436 = por %p434, %p435
      %p438 = scmp.ne.s32.totalorder %s423, %s437
      %p439 = scmp.eq.s32.totalorder %s35, 0
      %p440 = por %p438, %p439
      %s441 = ssub.s32 %s29, %s36
      %p442 = scmp.eq.s32.totalorder %s441, 0
      %s444 = sadd.s32 %s443, 1
      %s445 = scalar_select %p442, %s443, %s444
      %p448 = pneg %p442
      %p449 = scmp.eq.s32.totalorder %s29, 1
      %p450 = por %p448, %p449
      %p451 = scmp.ne.s32.totalorder %s443, %s446
      %p452 = scmp.eq.s32.totalorder %s29, 0
      %p453 = por %p451, %p452
      %p454 = scmp.ne.s32.totalorder %s443, %s446
      %p455 = scmp.eq.s32.totalorder %s34, 1
      %p456 = por %p454, %p455
      %p457 = scmp.ne.s32.totalorder %s446, %s447
      %p458 = scmp.eq.s32.totalorder %s34, 0
      %p459 = por %p457, %p458
      %p460 = scmp.ne.s32.totalorder %s446, %s447
      %p461 = scmp.eq.s32.totalorder %s35, 1
      %p462 = por %p460, %p461
      %p464 = scmp.ne.s32.totalorder %s447, %s463
      %p465 = scmp.eq.s32.totalorder %s35, 0
      %p466 = por %p464, %p465
      %p467 = scmp.le.s32.totalorder 1, %s29
      %p468 = scmp.lt.s32.totalorder %s29, 3
      %p469 = pnand %p467, %p468
      %p470 = pneg %p469
      // Predicated region
      $region9: #{resnet1d_forward.1} parent=5 // pred_check
        _
      $region10: #{resnet1d_forward.1} parent=5 // pred_check_branch
        %472 = sbr.rel (%p469) target = $region12
      $region11: #{resnet1d_forward.1} parent=5 // pred_region
        %s473 = ssub.s32 %s29, 1
        // Predicated region
        $region13: #{resnet1d_forward.1} parent=11 // pred_check
          %p474 = pneg %p76
        $region14: #{resnet1d_forward.1} parent=11 // pred_check_branch
          %476 = sbr.rel (%p474) target = $region16
        $region15: #{resnet1d_forward.1} parent=11 // pred_region
          _
        $region16: #{resnet1d_forward.1} parent=11 // pred_fallthru
          _
        // Predicated region
        $region17: #{resnet1d_forward.1} parent=11 // pred_check
          %p477 = pneg %p97
        $region18: #{resnet1d_forward.1} parent=11 // pred_check_branch
          %479 = sbr.rel (%p477) target = $region20
        $region19: #{resnet1d_forward.1} parent=11 // pred_region
          _
        $region20: #{resnet1d_forward.1} parent=11 // pred_fallthru
          _
        // Predicated region
        $region21: #{resnet1d_forward.1} parent=11 // pred_check
          %p480 = pneg %p118
        $region22: #{resnet1d_forward.1} parent=11 // pred_check_branch
          %482 = sbr.rel (%p480) target = $region24
        $region23: #{resnet1d_forward.1} parent=11 // pred_region
          _
        $region24: #{resnet1d_forward.1} parent=11 // pred_fallthru
          _
        // Predicated region
        $region25: #{resnet1d_forward.1} parent=11 // pred_check
          %p483 = pneg %p139
        $region26: #{resnet1d_forward.1} parent=11 // pred_check_branch
          %485 = sbr.rel (%p483) target = $region28
        $region27: #{resnet1d_forward.1} parent=11 // pred_region
          _
        $region28: #{resnet1d_forward.1} parent=11 // pred_fallthru
          _
        // Predicated region
        $region29: #{resnet1d_forward.1} parent=11 // pred_check
          %p486 = pneg %p160
        $region30: #{resnet1d_forward.1} parent=11 // pred_check_branch
          %488 = sbr.rel (%p486) target = $region32
        $region31: #{resnet1d_forward.1} parent=11 // pred_region
          _
        $region32: #{resnet1d_forward.1} parent=11 // pred_fallthru
          _
        // Predicated region
        $region33: #{resnet1d_forward.1} parent=11 // pred_check
          %p489 = pneg %p181
        $region34: #{resnet1d_forward.1} parent=11 // pred_check_branch
          %491 = sbr.rel (%p489) target = $region36
        $region35: #{resnet1d_forward.1} parent=11 // pred_region
          _
        $region36: #{resnet1d_forward.1} parent=11 // pred_fallthru
          _
        // Predicated region
        $region37: #{resnet1d_forward.1} parent=11 // pred_check
          %p492 = pneg %p202
        $region38: #{resnet1d_forward.1} parent=11 // pred_check_branch
          %494 = sbr.rel (%p492) target = $region40
        $region39: #{resnet1d_forward.1} parent=11 // pred_region
          _
        $region40: #{resnet1d_forward.1} parent=11 // pred_fallthru
          _
        // Predicated region
        $region41: #{resnet1d_forward.1} parent=11 // pred_check
          %p495 = pneg %p223
        $region42: #{resnet1d_forward.1} parent=11 // pred_check_branch
          %497 = sbr.rel (%p495) target = $region44
        $region43: #{resnet1d_forward.1} parent=11 // pred_region
          _
        $region44: #{resnet1d_forward.1} parent=11 // pred_fallthru
          _
        // Predicated region
        $region45: #{resnet1d_forward.1} parent=11 // pred_check
          %p498 = pneg %p244
        $region46: #{resnet1d_forward.1} parent=11 // pred_check_branch
          %500 = sbr.rel (%p498) target = $region48
        $region47: #{resnet1d_forward.1} parent=11 // pred_region
          _
        $region48: #{resnet1d_forward.1} parent=11 // pred_fallthru
          _
        // Predicated region
        $region49: #{resnet1d_forward.1} parent=11 // pred_check
          %p501 = pneg %p265
        $region50: #{resnet1d_forward.1} parent=11 // pred_check_branch
          %503 = sbr.rel (%p501) target = $region52
        $region51: #{resnet1d_forward.1} parent=11 // pred_region
          %505 = vsyncadd [#allocation8], 0
          %s507 = sshll.u32 %s10, 4
          %s508 = int_to_ptr.hbm [resolvable:$true] %s507
          %s509 = sshll.u32 [#allocation7], 4
          %s510 = int_to_ptr.vmem [resolvable:$true] %s509
          %512 = dma.hbm_to_vmem [thread:$0]  %s508, 16, %s510, [#allocation8]
        $region52: #{resnet1d_forward.1} parent=11 // pred_fallthru
          _
        // Predicated region
        $region53: #{resnet1d_forward.1} parent=11 // pred_check
          %p513 = pneg %p286
        $region54: #{resnet1d_forward.1} parent=11 // pred_check_branch
          %515 = sbr.rel (%p513) target = $region56
        $region55: #{resnet1d_forward.1} parent=11 // pred_region
          _
        $region56: #{resnet1d_forward.1} parent=11 // pred_fallthru
          _
        // Predicated region
        $region57: #{resnet1d_forward.1} parent=11 // pred_check
          %p516 = pneg %p307
        $region58: #{resnet1d_forward.1} parent=11 // pred_check_branch
          %518 = sbr.rel (%p516) target = $region60
        $region59: #{resnet1d_forward.1} parent=11 // pred_region
          %520 = vsyncadd [#allocation10], 0
          %s522 = sshll.u32 %s12, 4
          %s523 = int_to_ptr.hbm [resolvable:$true] %s522
          %s524 = sshll.u32 [#allocation9], 4
          %s525 = int_to_ptr.vmem [resolvable:$true] %s524
          %527 = dma.hbm_to_vmem [thread:$0]  %s523, 16, %s525, [#allocation10]
        $region60: #{resnet1d_forward.1} parent=11 // pred_fallthru
          _
        // Predicated region
        $region61: #{resnet1d_forward.1} parent=11 // pred_check
          %p528 = pneg %p328
        $region62: #{resnet1d_forward.1} parent=11 // pred_check_branch
          %530 = sbr.rel (%p528) target = $region64
        $region63: #{resnet1d_forward.1} parent=11 // pred_region
          %532 = vsyncadd [#allocation10], 0
          %s533 = sshll.u32 %s13, 4
          %s534 = int_to_ptr.hbm [resolvable:$true] %s533
          %s535 = sshll.u32 [#allocation11], 4
          %s536 = int_to_ptr.vmem [resolvable:$true] %s535
          %541 = dma.hbm_to_vmem [thread:$0]  %s534, 1024, %s536, [#allocation10], 128, 128, 8
        $region64: #{resnet1d_forward.1} parent=11 // pred_fallthru
          _
        // Predicated region
        $region65: #{resnet1d_forward.1} parent=11 // pred_check
          %p542 = pneg %p349
        $region66: #{resnet1d_forward.1} parent=11 // pred_check_branch
          %544 = sbr.rel (%p542) target = $region68
        $region67: #{resnet1d_forward.1} parent=11 // pred_region
          %546 = vsyncadd [#allocation13], 0
          %s548 = sshll.u32 %s14, 4
          %s549 = int_to_ptr.hbm [resolvable:$true] %s548
          %s550 = sshll.u32 [#allocation12], 4
          %s551 = int_to_ptr.vmem [resolvable:$true] %s550
          %553 = dma.hbm_to_vmem [thread:$0]  %s549, 16, %s551, [#allocation13]
        $region68: #{resnet1d_forward.1} parent=11 // pred_fallthru
          _
        // Predicated region
        $region69: #{resnet1d_forward.1} parent=11 // pred_check
          %p554 = pneg %p370
        $region70: #{resnet1d_forward.1} parent=11 // pred_check_branch
          %556 = sbr.rel (%p554) target = $region72
        $region71: #{resnet1d_forward.1} parent=11 // pred_region
          _
        $region72: #{resnet1d_forward.1} parent=11 // pred_fallthru
          _
        // Predicated region
        $region73: #{resnet1d_forward.1} parent=11 // pred_check
          %p557 = pneg %p391
        $region74: #{resnet1d_forward.1} parent=11 // pred_check_branch
          %559 = sbr.rel (%p557) target = $region76
        $region75: #{resnet1d_forward.1} parent=11 // pred_region
          %561 = vsyncadd [#allocation13], 0
          %s563 = sshll.u32 %s16, 4
          %s564 = int_to_ptr.hbm [resolvable:$true] %s563
          %s565 = sshll.u32 [#allocation14], 4
          %s566 = int_to_ptr.vmem [resolvable:$true] %s565
          %568 = dma.hbm_to_vmem [thread:$0]  %s564, 16, %s566, [#allocation13]
        $region76: #{resnet1d_forward.1} parent=11 // pred_fallthru
          _
        // Predicated region
        $region77: #{resnet1d_forward.1} parent=11 // pred_check
          %p569 = pneg %p412
        $region78: #{resnet1d_forward.1} parent=11 // pred_check_branch
          %571 = sbr.rel (%p569) target = $region80
        $region79: #{resnet1d_forward.1} parent=11 // pred_region
          %573 = vsyncadd [#allocation16], 0
          %s574 = sshll.u32 %s17, 4
          %s575 = int_to_ptr.hbm [resolvable:$true] %s574
          %s576 = sshll.u32 [#allocation15], 4
          %s577 = int_to_ptr.vmem [resolvable:$true] %s576
          %582 = dma.hbm_to_vmem [thread:$0]  %s575, 1024, %s577, [#allocation16], 128, 128, 8
        $region80: #{resnet1d_forward.1} parent=11 // pred_fallthru
          _
        // Predicated region
        $region81: #{resnet1d_forward.1} parent=11 // pred_check
          %p583 = pneg %p433
        $region82: #{resnet1d_forward.1} parent=11 // pred_check_branch
          %585 = sbr.rel (%p583) target = $region84
        $region83: #{resnet1d_forward.1} parent=11 // pred_region
          %587 = vsyncadd [#allocation16], 0
          %s589 = sshll.u32 %s18, 4
          %s590 = int_to_ptr.hbm [resolvable:$true] %s589
          %s591 = sshll.u32 [#allocation17], 4
          %s592 = int_to_ptr.vmem [resolvable:$true] %s591
          %594 = dma.hbm_to_vmem [thread:$0]  %s590, 16, %s592, [#allocation16]
        $region84: #{resnet1d_forward.1} parent=11 // pred_fallthru
          _
      $region12: #{resnet1d_forward.1} parent=5 // pred_fallthru
        _
      %p595 = scmp.lt.s32.totalorder %s29, 2
      // Predicated region
      $region85: #{resnet1d_forward.1} parent=5 // pred_check
        %p596 = pneg %p595
      $region86: #{resnet1d_forward.1} parent=5 // pred_check_branch
        %598 = sbr.rel (%p596) target = $region88
      $region87: #{resnet1d_forward.1} parent=5 // pred_region
        // Predicated region
        $region89: #{resnet1d_forward.1} parent=87 // pred_check
          %p599 = pneg %p49
        $region90: #{resnet1d_forward.1} parent=87 // pred_check_branch
          %601 = sbr.rel (%p599) target = $region92
        $region91: #{resnet1d_forward.1} parent=87 // pred_region
          %s602 = smul.u32 32, %s29
          %p603 = scmp.lt.s32.totalorder %s602, 63
          %s604 = scalar_select %p603, %s602, 63
          %s605 = smul.addr %s604, 8
          %s606 = scalar_lea.vmem %s0, %s605
          %s607 = smul.u32 32, %s29
        $region92: #{resnet1d_forward.1} parent=87 // pred_fallthru
          _
      $region88: #{resnet1d_forward.1} parent=5 // pred_fallthru
        _
      %p608 = scmp.le.s32.totalorder 1, %s29
      %p609 = scmp.lt.s32.totalorder %s29, 3
      %p610 = pnand %p608, %p609
      %p611 = pneg %p610
      // Predicated region
      $region93: #{resnet1d_forward.1} parent=5 // pred_check
        _
      $region94: #{resnet1d_forward.1} parent=5 // pred_check_branch
        %613 = sbr.rel (%p610) target = $region96
      $region95: #{resnet1d_forward.1} parent=5 // pred_region
        %s614 = ssub.s32 %s29, 1
        // Predicated region
        $region97: #{resnet1d_forward.1} parent=95 // pred_check
          %p615 = pneg %p265
        $region98: #{resnet1d_forward.1} parent=95 // pred_check_branch
          %617 = sbr.rel (%p615) target = $region100
        $region99: #{resnet1d_forward.1} parent=95 // pred_region
          %619 = dma.done [#allocation8], 16
        $region100: #{resnet1d_forward.1} parent=95 // pred_fallthru
          _
        // Predicated region
        $region101: #{resnet1d_forward.1} parent=95 // pred_check
          %p620 = pneg %p307
        $region102: #{resnet1d_forward.1} parent=95 // pred_check_branch
          %622 = sbr.rel (%p620) target = $region104
        $region103: #{resnet1d_forward.1} parent=95 // pred_region
          %624 = dma.done [#allocation10], 16
        $region104: #{resnet1d_forward.1} parent=95 // pred_fallthru
          _
        // Predicated region
        $region105: #{resnet1d_forward.1} parent=95 // pred_check
          %p625 = pneg %p328
        $region106: #{resnet1d_forward.1} parent=95 // pred_check_branch
          %627 = sbr.rel (%p625) target = $region108
        $region107: #{resnet1d_forward.1} parent=95 // pred_region
          %629 = dma.done [#allocation10], 1024
        $region108: #{resnet1d_forward.1} parent=95 // pred_fallthru
          _
        // Predicated region
        $region109: #{resnet1d_forward.1} parent=95 // pred_check
          %p630 = pneg %p349
        $region110: #{resnet1d_forward.1} parent=95 // pred_check_branch
          %632 = sbr.rel (%p630) target = $region112
        $region111: #{resnet1d_forward.1} parent=95 // pred_region
          %634 = dma.done [#allocation13], 16
        $region112: #{resnet1d_forward.1} parent=95 // pred_fallthru
          _
        // Predicated region
        $region113: #{resnet1d_forward.1} parent=95 // pred_check
          %p635 = pneg %p391
        $region114: #{resnet1d_forward.1} parent=95 // pred_check_branch
          %637 = sbr.rel (%p635) target = $region116
        $region115: #{resnet1d_forward.1} parent=95 // pred_region
          %639 = dma.done [#allocation13], 16
        $region116: #{resnet1d_forward.1} parent=95 // pred_fallthru
          _
        // Predicated region
        $region117: #{resnet1d_forward.1} parent=95 // pred_check
          %p640 = pneg %p412
        $region118: #{resnet1d_forward.1} parent=95 // pred_check_branch
          %642 = sbr.rel (%p640) target = $region120
        $region119: #{resnet1d_forward.1} parent=95 // pred_region
          %644 = dma.done [#allocation16], 1024
        $region120: #{resnet1d_forward.1} parent=95 // pred_fallthru
          _
        // Predicated region
        $region121: #{resnet1d_forward.1} parent=95 // pred_check
          %p645 = pneg %p433
        $region122: #{resnet1d_forward.1} parent=95 // pred_check_branch
          %647 = sbr.rel (%p645) target = $region124
        $region123: #{resnet1d_forward.1} parent=95 // pred_region
          %649 = dma.done [#allocation16], 16
        $region124: #{resnet1d_forward.1} parent=95 // pred_fallthru
          _
        %s650 = smul.u32 32, %s34
        %p651 = scmp.lt.s32.totalorder %s650, 63
        %s652 = scalar_select %p651, %s650, 63
        %s653 = smul.addr %s652, 8
        %s654 = scalar_lea.vmem %s0, %s653
        %p655 = pneg %p55
        %p656 = pneg %p52
        %p657 = pneg %p76
        %p658 = pneg %p73
        %p659 = pneg %p97
        %p660 = pneg %p94
        %p661 = pneg %p118
        %p662 = pneg %p115
        %p663 = pneg %p139
        %p664 = pneg %p136
        %p665 = pneg %p160
        %p666 = pneg %p157
        %p667 = pneg %p181
        %p668 = pneg %p178
        %p669 = pneg %p202
        %p670 = pneg %p199
        %p671 = pneg %p223
        %p672 = pneg %p220
        %p673 = pneg %p244
        %p674 = pneg %p241
        %p675 = pneg %p265
        %p676 = pneg %p262
        %p677 = pneg %p286
        %p678 = pneg %p283
        %p679 = pneg %p307
        %p680 = pneg %p304
        %p681 = pneg %p328
        %p682 = pneg %p325
        %p683 = pneg %p349
        %p684 = pneg %p346
        %p685 = pneg %p370
        %p686 = pneg %p367
        %p687 = pneg %p391
        %p688 = pneg %p388
        %p689 = pneg %p412
        %p690 = pneg %p409
        %p691 = pneg %p433
        %p692 = pneg %p430
        %p693 = pneg %p459
        %p694 = pneg %p456
        %p695 = scmp.lt.s32.totalorder %s34, 1
        %s696 = scalar_select %p695, %s34, 1
        %s697 = smul.addr %s696, 8
        %s698 = scalar_lea.vmem %s19, %s697
        %s699 = smul.u32 32, %s34
        %p700 = scmp.lt.s32.totalorder %s699, 63
        %s701 = scalar_select %p700, %s699, 63
        %s702 = smul.addr %s701, 8
        %s703 = scalar_lea.vmem %s0, %s702
        %s704 = smul.u32 32, %s34
        %p705 = scmp.lt.s32.totalorder %s34, 1
        %s706 = scalar_select %p705, %s34, 1
        %s707 = smul.addr %s706, 8
        %s708 = scalar_lea.vmem %s19, %s707
        %vm709 = vcmask 253952
        %710 = vst.msk [vmem:[#allocation2] sm:$0x1] %vm709, 0.0
        %711 = vst.msk [vmem:[#allocation2 + $0x28] sm:$0x1] %vm709, 0.0
        %712 = vst.msk [vmem:[#allocation2 + $0x50] sm:$0x1] %vm709, 0.0
        %713 = vst.msk [vmem:[#allocation2 + $0x78] sm:$0x1] %vm709, 0.0
        %714 = vst.msk [vmem:[#allocation2 + $0xa0] sm:$0x1] %vm709, 0.0
        %715 = vst.msk [vmem:[#allocation2 + $0xc8] sm:$0x1] %vm709, 0.0
        %716 = vst.msk [vmem:[#allocation2 + $0xf0] sm:$0x1] %vm709, 0.0
        %717 = vst.msk [vmem:[#allocation2 + $0x118] sm:$0x1] %vm709, 0.0
        %718 = vst.msk [vmem:[#allocation2 + $0x21] sm:$0x1] %vm709, 0.0
        %719 = vst.msk [vmem:[#allocation2 + $0x49] sm:$0x1] %vm709, 0.0
        %720 = vst.msk [vmem:[#allocation2 + $0x71] sm:$0x1] %vm709, 0.0
        %721 = vst.msk [vmem:[#allocation2 + $0x99] sm:$0x1] %vm709, 0.0
        %722 = vst.msk [vmem:[#allocation2 + $0xc1] sm:$0x1] %vm709, 0.0
        %723 = vst.msk [vmem:[#allocation2 + $0xe9] sm:$0x1] %vm709, 0.0
        %724 = vst.msk [vmem:[#allocation2 + $0x111] sm:$0x1] %vm709, 0.0
        %725 = vst.msk [vmem:[#allocation2 + $0x139] sm:$0x1] %vm709, 0.0
        %726 = vst.msk [vmem:[#allocation3] sm:$0x1] %vm709, 0.0
        %727 = vst.msk [vmem:[#allocation3 + $0x18] sm:$0x1] %vm709, 0.0
        %728 = vst.msk [vmem:[#allocation3 + $0x30] sm:$0x1] %vm709, 0.0
        %729 = vst.msk [vmem:[#allocation3 + $0x48] sm:$0x1] %vm709, 0.0
        %730 = vst.msk [vmem:[#allocation3 + $0x60] sm:$0x1] %vm709, 0.0
        %731 = vst.msk [vmem:[#allocation3 + $0x78] sm:$0x1] %vm709, 0.0
        %732 = vst.msk [vmem:[#allocation3 + $0x90] sm:$0x1] %vm709, 0.0
        %733 = vst.msk [vmem:[#allocation3 + $0xa8] sm:$0x1] %vm709, 0.0
        %734 = vst.msk [vmem:[#allocation3 + $0x11] sm:$0x1] %vm709, 0.0
        %735 = vst.msk [vmem:[#allocation3 + $0x29] sm:$0x1] %vm709, 0.0
        %736 = vst.msk [vmem:[#allocation3 + $0x41] sm:$0x1] %vm709, 0.0
        %737 = vst.msk [vmem:[#allocation3 + $0x59] sm:$0x1] %vm709, 0.0
        %738 = vst.msk [vmem:[#allocation3 + $0x71] sm:$0x1] %vm709, 0.0
        %739 = vst.msk [vmem:[#allocation3 + $0x89] sm:$0x1] %vm709, 0.0
        %740 = vst.msk [vmem:[#allocation3 + $0xa1] sm:$0x1] %vm709, 0.0
        %741 = vst.msk [vmem:[#allocation3 + $0xb9] sm:$0x1] %vm709, 0.0
        %vm742 = vcmask 516096
        %743 = vst.msk [vmem:[#allocation4] sm:$0x1] %vm742, 0.0
        %744 = vst.msk [vmem:[#allocation4 + $0x10] sm:$0x1] %vm742, 0.0
        %745 = vst.msk [vmem:[#allocation4 + $0x20] sm:$0x1] %vm742, 0.0
        %746 = vst.msk [vmem:[#allocation4 + $0x30] sm:$0x1] %vm742, 0.0
        %747 = vst.msk [vmem:[#allocation4 + $0x40] sm:$0x1] %vm742, 0.0
        %748 = vst.msk [vmem:[#allocation4 + $0x50] sm:$0x1] %vm742, 0.0
        %749 = vst.msk [vmem:[#allocation4 + $0x60] sm:$0x1] %vm742, 0.0
        %750 = vst.msk [vmem:[#allocation4 + $0x70] sm:$0x1] %vm742, 0.0
        %751 = vst.msk [vmem:[#allocation4 + $0x9] sm:$0x1] %vm742, 0.0
        %752 = vst.msk [vmem:[#allocation4 + $0x19] sm:$0x1] %vm742, 0.0
        %753 = vst.msk [vmem:[#allocation4 + $0x29] sm:$0x1] %vm742, 0.0
        %754 = vst.msk [vmem:[#allocation4 + $0x39] sm:$0x1] %vm742, 0.0
        %755 = vst.msk [vmem:[#allocation4 + $0x49] sm:$0x1] %vm742, 0.0
        %756 = vst.msk [vmem:[#allocation4 + $0x59] sm:$0x1] %vm742, 0.0
        %757 = vst.msk [vmem:[#allocation4 + $0x69] sm:$0x1] %vm742, 0.0
        %758 = vst.msk [vmem:[#allocation4 + $0x79] sm:$0x1] %vm742, 0.0
        %759 = vst.msk [vmem:[#allocation5] sm:$0x1] %vm742, 0.0
        %760 = vst.msk [vmem:[#allocation5 + $0x18] sm:$0x1] %vm742, 0.0
        %761 = vst.msk [vmem:[#allocation5 + $0x30] sm:$0x1] %vm742, 0.0
        %762 = vst.msk [vmem:[#allocation5 + $0x48] sm:$0x1] %vm742, 0.0
        %763 = vst.msk [vmem:[#allocation5 + $0x60] sm:$0x1] %vm742, 0.0
        %764 = vst.msk [vmem:[#allocation5 + $0x78] sm:$0x1] %vm742, 0.0
        %765 = vst.msk [vmem:[#allocation5 + $0x90] sm:$0x1] %vm742, 0.0
        %766 = vst.msk [vmem:[#allocation5 + $0xa8] sm:$0x1] %vm742, 0.0
        %vm767 = vcmask 523264
        %768 = vst.msk [vmem:[#allocation5 + $0x9] sm:$0xff] %vm767, 0.0
        %769 = vst.msk [vmem:[#allocation5 + $0x21] sm:$0xff] %vm767, 0.0
        %770 = vst.msk [vmem:[#allocation5 + $0x39] sm:$0xff] %vm767, 0.0
        %771 = vst.msk [vmem:[#allocation5 + $0x51] sm:$0xff] %vm767, 0.0
        %772 = vst.msk [vmem:[#allocation5 + $0x69] sm:$0xff] %vm767, 0.0
        %773 = vst.msk [vmem:[#allocation5 + $0x81] sm:$0xff] %vm767, 0.0
        %774 = vst.msk [vmem:[#allocation5 + $0x99] sm:$0xff] %vm767, 0.0
        %775 = vst.msk [vmem:[#allocation5 + $0xb1] sm:$0xff] %vm767, 0.0
        %776 = vst [vmem:[#allocation6] sm:$0x1] 0.0
        %777 = vst [vmem:[#allocation6 + $0x10] sm:$0x1] 0.0
        %778 = vst [vmem:[#allocation6 + $0x20] sm:$0x1] 0.0
        %779 = vst [vmem:[#allocation6 + $0x30] sm:$0x1] 0.0
        %780 = vst [vmem:[#allocation6 + $0x40] sm:$0x1] 0.0
        %781 = vst [vmem:[#allocation6 + $0x50] sm:$0x1] 0.0
        %782 = vst [vmem:[#allocation6 + $0x60] sm:$0x1] 0.0
        %783 = vst [vmem:[#allocation6 + $0x70] sm:$0x1] 0.0
        %784 = vst [vmem:[#allocation6 + $0x5] sm:$0x1f] 0.0
        %785 = vst [vmem:[#allocation6 + $0x15] sm:$0x1f] 0.0
        %786 = vst [vmem:[#allocation6 + $0x25] sm:$0x1f] 0.0
        %787 = vst [vmem:[#allocation6 + $0x35] sm:$0x1f] 0.0
        %788 = vst [vmem:[#allocation6 + $0x45] sm:$0x1f] 0.0
        %789 = vst [vmem:[#allocation6 + $0x55] sm:$0x1f] 0.0
        %790 = vst [vmem:[#allocation6 + $0x65] sm:$0x1f] 0.0
        %791 = vst [vmem:[#allocation6 + $0x75] sm:$0x1f] 0.0
        %v792 = vld [vmem:[%s703] sm:$0xff]
        %v793 = vld [vmem:[%s703 + $0x8] sm:$0xff]
        %v794 = vld [vmem:[%s703 + $0x10] sm:$0xff]
        %v795 = vld [vmem:[%s703 + $0x18] sm:$0xff]
        %v796 = vld [vmem:[%s703 + $0x20] sm:$0xff]
        %v797 = vld [vmem:[%s703 + $0x28] sm:$0xff]
        %v798 = vld [vmem:[%s703 + $0x30] sm:$0xff]
        %v799 = vld [vmem:[%s703 + $0x38] sm:$0xff]
        %v800 = vld [vmem:[%s703 + $0x40] sm:$0xff]
        %v801 = vld [vmem:[%s703 + $0x48] sm:$0xff]
        %v802 = vld [vmem:[%s703 + $0x50] sm:$0xff]
        %v803 = vld [vmem:[%s703 + $0x58] sm:$0xff]
        %v804 = vld [vmem:[%s703 + $0x60] sm:$0xff]
        %v805 = vld [vmem:[%s703 + $0x68] sm:$0xff]
        %v806 = vld [vmem:[%s703 + $0x70] sm:$0xff]
        %v807 = vld [vmem:[%s703 + $0x78] sm:$0xff]
        %v808 = vld [vmem:[%s703 + $0x80] sm:$0xff]
        %v809 = vld [vmem:[%s703 + $0x88] sm:$0xff]
        %v810 = vld [vmem:[%s703 + $0x90] sm:$0xff]
        %v811 = vld [vmem:[%s703 + $0x98] sm:$0xff]
        %v812 = vld [vmem:[%s703 + $0xa0] sm:$0xff]
        %v813 = vld [vmem:[%s703 + $0xa8] sm:$0xff]
        %v814 = vld [vmem:[%s703 + $0xb0] sm:$0xff]
        %v815 = vld [vmem:[%s703 + $0xb8] sm:$0xff]
        %v816 = vld [vmem:[%s703 + $0xc0] sm:$0xff]
        %v817 = vld [vmem:[%s703 + $0xc8] sm:$0xff]
        %v818 = vld [vmem:[%s703 + $0xd0] sm:$0xff]
        %v819 = vld [vmem:[%s703 + $0xd8] sm:$0xff]
        %v820 = vld [vmem:[%s703 + $0xe0] sm:$0xff]
        %v821 = vld [vmem:[%s703 + $0xe8] sm:$0xff]
        %v822 = vld [vmem:[%s703 + $0xf0] sm:$0xff]
        %v823 = vld [vmem:[%s703 + $0xf8] sm:$0xff]
        %v824 = vld [vmem:[%s1] sm:$0x7f]
        %v825 = vld [vmem:[%s2] sm:$0x1]
        %v827 = vperm.slane %v825, 0
        %vm829 = vcmask 56320
        %v831 = vsel %vm829, %v792, 0
        %v834 = vsel %vm829, %v793, 0
        %v837 = vsel %vm829, %v794, 0
        %v840 = vsel %vm829, %v795, 0
        %v843 = vsel %vm829, %v796, 0
        %v846 = vsel %vm829, %v797, 0
        %v849 = vsel %vm829, %v798, 0
        %v852 = vsel %vm829, %v799, 0
        %v855 = vsel %vm829, %v800, 0
        %v858 = vsel %vm829, %v801, 0
        %v861 = vsel %vm829, %v802, 0
        %v864 = vsel %vm829, %v803, 0
        %v867 = vsel %vm829, %v804, 0
        %v870 = vsel %vm829, %v805, 0
        %v873 = vsel %vm829, %v806, 0
        %v876 = vsel %vm829, %v807, 0
        %v879 = vsel %vm829, %v808, 0
        %v882 = vsel %vm829, %v809, 0
        %v885 = vsel %vm829, %v810, 0
        %v888 = vsel %vm829, %v811, 0
        %v891 = vsel %vm829, %v812, 0
        %v894 = vsel %vm829, %v813, 0
        %v897 = vsel %vm829, %v814, 0
        %v900 = vsel %vm829, %v815, 0
        %v903 = vsel %vm829, %v816, 0
        %v906 = vsel %vm829, %v817, 0
        %v909 = vsel %vm829, %v818, 0
        %v912 = vsel %vm829, %v819, 0
        %v915 = vsel %vm829, %v820, 0
        %v918 = vsel %vm829, %v821, 0
        %v921 = vsel %vm829, %v822, 0
        %v924 = vsel %vm829, %v823, 0
        %vm926 = vcmask 1046528
        %v928 = vsel %vm926, %v824, 0
        %930 = vmatpush.msra.mxu0 0.0
        %931 = vmatpush.msra.mxu0 0.0
        %932 = vmatpush.msra.mxu0 0.0
        %933 = vmatpush.msra.mxu0 0.0
        %934 = vmatpush.msra.mxu0 0.0
        %935 = vmatpush.msra.mxu0 0.0
        %936 = vmatpush.msra.mxu0 0.0
        %937 = vmatpush.msra.mxu0 0.0
        %938 = vmatpush.msra.mxu0 0.0
        %939 = vmatpush.msra.mxu0 0.0
        %940 = vmatpush.msra.mxu0 0.0
        %941 = vmatpush.msra.mxu0 0.0
        %942 = vmatpush.msra.mxu0 0.0
        %943 = vmatpush.msra.mxu0 0.0
        %944 = vmatpush.msra.mxu0 0.0
        %945 = vmatpush.msra.mxu0 %v928
        %946 = vmatmul.f32.gmra.mxu0 %v831
        %v947 = vpop.f32.mrf.mxu0
        %v948 = vadd.f32 %v827, %v947
        %949 = vmatmul.f32.gmra.mxu0 %v834
        %v950 = vpop.f32.mrf.mxu0
        %v951 = vadd.f32 %v827, %v950
        %952 = vmatmul.f32.gmra.mxu0 %v837
        %v953 = vpop.f32.mrf.mxu0
        %v954 = vadd.f32 %v827, %v953
        %955 = vmatmul.f32.gmra.mxu0 %v840
        %v956 = vpop.f32.mrf.mxu0
        %v957 = vadd.f32 %v827, %v956
        %958 = vmatmul.f32.gmra.mxu0 %v843
        %v959 = vpop.f32.mrf.mxu0
        %v960 = vadd.f32 %v827, %v959
        %961 = vmatmul.f32.gmra.mxu0 %v846
        %v962 = vpop.f32.mrf.mxu0
        %v963 = vadd.f32 %v827, %v962
        %964 = vmatmul.f32.gmra.mxu0 %v849
        %v965 = vpop.f32.mrf.mxu0
        %v966 = vadd.f32 %v827, %v965
        %967 = vmatmul.f32.gmra.mxu0 %v852
        %v968 = vpop.f32.mrf.mxu0
        %v969 = vadd.f32 %v827, %v968
        %970 = vmatmul.f32.gmra.mxu0 %v855
        %v971 = vpop.f32.mrf.mxu0
        %v972 = vadd.f32 %v827, %v971
        %973 = vmatmul.f32.gmra.mxu0 %v858
        %v974 = vpop.f32.mrf.mxu0
        %v975 = vadd.f32 %v827, %v974
        %976 = vmatmul.f32.gmra.mxu0 %v861
        %v977 = vpop.f32.mrf.mxu0
        %v978 = vadd.f32 %v827, %v977
        %979 = vmatmul.f32.gmra.mxu0 %v864
        %v980 = vpop.f32.mrf.mxu0
        %v981 = vadd.f32 %v827, %v980
        %982 = vmatmul.f32.gmra.mxu0 %v867
        %v983 = vpop.f32.mrf.mxu0
        %v984 = vadd.f32 %v827, %v983
        %985 = vmatmul.f32.gmra.mxu0 %v870
        %v986 = vpop.f32.mrf.mxu0
        %v987 = vadd.f32 %v827, %v986
        %988 = vmatmul.f32.gmra.mxu0 %v873
        %v989 = vpop.f32.mrf.mxu0
        %v990 = vadd.f32 %v827, %v989
        %991 = vmatmul.f32.gmra.mxu0 %v876
        %v992 = vpop.f32.mrf.mxu0
        %v993 = vadd.f32 %v827, %v992
        %994 = vmatmul.f32.gmra.mxu0 %v879
        %v995 = vpop.f32.mrf.mxu0
        %v996 = vadd.f32 %v827, %v995
        %997 = vmatmul.f32.gmra.mxu0 %v882
        %v998 = vpop.f32.mrf.mxu0
        %v999 = vadd.f32 %v827, %v998
        %1000 = vmatmul.f32.gmra.mxu0 %v885
        %v1001 = vpop.f32.mrf.mxu0
        %v1002 = vadd.f32 %v827, %v1001
        %1003 = vmatmul.f32.gmra.mxu0 %v888
        %v1004 = vpop.f32.mrf.mxu0
        %v1005 = vadd.f32 %v827, %v1004
        %1006 = vmatmul.f32.gmra.mxu0 %v891
        %v1007 = vpop.f32.mrf.mxu0
        %v1008 = vadd.f32 %v827, %v1007
        %1009 = vmatmul.f32.gmra.mxu0 %v894
        %v1010 = vpop.f32.mrf.mxu0
        %v1011 = vadd.f32 %v827, %v1010
        %1012 = vmatmul.f32.gmra.mxu0 %v897
        %v1013 = vpop.f32.mrf.mxu0
        %v1014 = vadd.f32 %v827, %v1013
        %1015 = vmatmul.f32.gmra.mxu0 %v900
        %v1016 = vpop.f32.mrf.mxu0
        %v1017 = vadd.f32 %v827, %v1016
        %1018 = vmatmul.f32.gmra.mxu0 %v903
        %v1019 = vpop.f32.mrf.mxu0
        %v1020 = vadd.f32 %v827, %v1019
        %1021 = vmatmul.f32.gmra.mxu0 %v906
        %v1022 = vpop.f32.mrf.mxu0
        %v1023 = vadd.f32 %v827, %v1022
        %1024 = vmatmul.f32.gmra.mxu0 %v909
        %v1025 = vpop.f32.mrf.mxu0
        %v1026 = vadd.f32 %v827, %v1025
        %1027 = vmatmul.f32.gmra.mxu0 %v912
        %v1028 = vpop.f32.mrf.mxu0
        %v1029 = vadd.f32 %v827, %v1028
        %1030 = vmatmul.f32.gmra.mxu0 %v915
        %v1031 = vpop.f32.mrf.mxu0
        %v1032 = vadd.f32 %v827, %v1031
        %1033 = vmatmul.f32.gmra.mxu0 %v918
        %v1034 = vpop.f32.mrf.mxu0
        %v1035 = vadd.f32 %v827, %v1034
        %1036 = vmatmul.f32.gmra.mxu0 %v921
        %v1037 = vpop.f32.mrf.mxu0
        %v1038 = vadd.f32 %v827, %v1037
        %1039 = vmatmul.f32.gmra.mxu0 %v924
        %v1040 = vpop.f32.mrf.mxu0
        %v1041 = vadd.f32 %v827, %v1040
        %1042 = vdwg.mxu0
        %v1043 = vmax.f32 %v948, 0.0
        %v1044 = vmax.f32 %v951, 0.0
        %v1045 = vmax.f32 %v954, 0.0
        %v1046 = vmax.f32 %v957, 0.0
        %v1047 = vmax.f32 %v960, 0.0
        %v1048 = vmax.f32 %v963, 0.0
        %v1049 = vmax.f32 %v966, 0.0
        %v1050 = vmax.f32 %v969, 0.0
        %v1051 = vmax.f32 %v972, 0.0
        %v1052 = vmax.f32 %v975, 0.0
        %v1053 = vmax.f32 %v978, 0.0
        %v1054 = vmax.f32 %v981, 0.0
        %v1055 = vmax.f32 %v984, 0.0
        %v1056 = vmax.f32 %v987, 0.0
        %v1057 = vmax.f32 %v990, 0.0
        %v1058 = vmax.f32 %v993, 0.0
        %v1059 = vmax.f32 %v996, 0.0
        %v1060 = vmax.f32 %v999, 0.0
        %v1061 = vmax.f32 %v1002, 0.0
        %v1062 = vmax.f32 %v1005, 0.0
        %v1063 = vmax.f32 %v1008, 0.0
        %v1064 = vmax.f32 %v1011, 0.0
        %v1065 = vmax.f32 %v1014, 0.0
        %v1066 = vmax.f32 %v1017, 0.0
        %v1067 = vmax.f32 %v1020, 0.0
        %v1068 = vmax.f32 %v1023, 0.0
        %v1069 = vmax.f32 %v1026, 0.0
        %v1070 = vmax.f32 %v1029, 0.0
        %v1071 = vmax.f32 %v1032, 0.0
        %v1072 = vmax.f32 %v1035, 0.0
        %v1073 = vmax.f32 %v1038, 0.0
        %v1074 = vmax.f32 %v1041, 0.0
        %vm1075 = vcmask 261120
        %1076 = vst.msk [vmem:[#allocation2 + $0x1] sm:$0xff] %vm1075, %v1043
        %1077 = vst.msk [vmem:[#allocation2 + $0x9] sm:$0xff] %vm1075, %v1044
        %1078 = vst.msk [vmem:[#allocation2 + $0x11] sm:$0xff] %vm1075, %v1045
        %1079 = vst.msk [vmem:[#allocation2 + $0x19] sm:$0xff] %vm1075, %v1046
        %1080 = vst.msk [vmem:[#allocation2 + $0x29] sm:$0xff] %vm1075, %v1047
        %1081 = vst.msk [vmem:[#allocation2 + $0x31] sm:$0xff] %vm1075, %v1048
        %1082 = vst.msk [vmem:[#allocation2 + $0x39] sm:$0xff] %vm1075, %v1049
        %1083 = vst.msk [vmem:[#allocation2 + $0x41] sm:$0xff] %vm1075, %v1050
        %1084 = vst.msk [vmem:[#allocation2 + $0x51] sm:$0xff] %vm1075, %v1051
        %1085 = vst.msk [vmem:[#allocation2 + $0x59] sm:$0xff] %vm1075, %v1052
        %1086 = vst.msk [vmem:[#allocation2 + $0x61] sm:$0xff] %vm1075, %v1053
        %1087 = vst.msk [vmem:[#allocation2 + $0x69] sm:$0xff] %vm1075, %v1054
        %1088 = vst.msk [vmem:[#allocation2 + $0x79] sm:$0xff] %vm1075, %v1055
        %1089 = vst.msk [vmem:[#allocation2 + $0x81] sm:$0xff] %vm1075, %v1056
        %1090 = vst.msk [vmem:[#allocation2 + $0x89] sm:$0xff] %vm1075, %v1057
        %1091 = vst.msk [vmem:[#allocation2 + $0x91] sm:$0xff] %vm1075, %v1058
        %1092 = vst.msk [vmem:[#allocation2 + $0xa1] sm:$0xff] %vm1075, %v1059
        %1093 = vst.msk [vmem:[#allocation2 + $0xa9] sm:$0xff] %vm1075, %v1060
        %1094 = vst.msk [vmem:[#allocation2 + $0xb1] sm:$0xff] %vm1075, %v1061
        %1095 = vst.msk [vmem:[#allocation2 + $0xb9] sm:$0xff] %vm1075, %v1062
        %1096 = vst.msk [vmem:[#allocation2 + $0xc9] sm:$0xff] %vm1075, %v1063
        %1097 = vst.msk [vmem:[#allocation2 + $0xd1] sm:$0xff] %vm1075, %v1064
        %1098 = vst.msk [vmem:[#allocation2 + $0xd9] sm:$0xff] %vm1075, %v1065
        %1099 = vst.msk [vmem:[#allocation2 + $0xe1] sm:$0xff] %vm1075, %v1066
        %1100 = vst.msk [vmem:[#allocation2 + $0xf1] sm:$0xff] %vm1075, %v1067
        %1101 = vst.msk [vmem:[#allocation2 + $0xf9] sm:$0xff] %vm1075, %v1068
        %1102 = vst.msk [vmem:[#allocation2 + $0x101] sm:$0xff] %vm1075, %v1069
        %1103 = vst.msk [vmem:[#allocation2 + $0x109] sm:$0xff] %vm1075, %v1070
        %1104 = vst.msk [vmem:[#allocation2 + $0x119] sm:$0xff] %vm1075, %v1071
        %1105 = vst.msk [vmem:[#allocation2 + $0x121] sm:$0xff] %vm1075, %v1072
        %1106 = vst.msk [vmem:[#allocation2 + $0x129] sm:$0xff] %vm1075, %v1073
        %1107 = vst.msk [vmem:[#allocation2 + $0x131] sm:$0xff] %vm1075, %v1074
        %v1108 = vld [vmem:[#allocation2] ss:$2 sm:$0xff]
        %s1109 = scalar_lea.vmem [#allocation2], 16
        %v1110 = vld [vmem:[%s1109] ss:$2 sm:$0xff]
        %s1111 = scalar_lea.vmem [#allocation2], 40
        %v1112 = vld [vmem:[%s1111] ss:$2 sm:$0xff]
        %s1113 = scalar_lea.vmem [#allocation2], 56
        %v1114 = vld [vmem:[%s1113] ss:$2 sm:$0xff]
        %s1115 = scalar_lea.vmem [#allocation2], 80
        %v1116 = vld [vmem:[%s1115] ss:$2 sm:$0xff]
        %s1117 = scalar_lea.vmem [#allocation2], 96
        %v1118 = vld [vmem:[%s1117] ss:$2 sm:$0xff]
        %s1119 = scalar_lea.vmem [#allocation2], 120
        %v1120 = vld [vmem:[%s1119] ss:$2 sm:$0xff]
        %s1121 = scalar_lea.vmem [#allocation2], 136
        %v1122 = vld [vmem:[%s1121] ss:$2 sm:$0xff]
        %s1123 = scalar_lea.vmem [#allocation2], 160
        %v1124 = vld [vmem:[%s1123] ss:$2 sm:$0xff]
        %s1125 = scalar_lea.vmem [#allocation2], 176
        %v1126 = vld [vmem:[%s1125] ss:$2 sm:$0xff]
        %s1127 = scalar_lea.vmem [#allocation2], 200
        %v1128 = vld [vmem:[%s1127] ss:$2 sm:$0xff]
        %s1129 = scalar_lea.vmem [#allocation2], 216
        %v1130 = vld [vmem:[%s1129] ss:$2 sm:$0xff]
        %s1131 = scalar_lea.vmem [#allocation2], 240
        %v1132 = vld [vmem:[%s1131] ss:$2 sm:$0xff]
        %s1133 = scalar_lea.vmem [#allocation2], 256
        %v1134 = vld [vmem:[%s1133] ss:$2 sm:$0xff]
        %s1135 = scalar_lea.vmem [#allocation2], 280
        %v1136 = vld [vmem:[%s1135] ss:$2 sm:$0xff]
        %s1137 = scalar_lea.vmem [#allocation2], 296
        %v1138 = vld [vmem:[%s1137] ss:$2 sm:$0xff]
        %s1139 = scalar_lea.vmem [#allocation2], 1
        %v1140 = vld [vmem:[%s1139] ss:$2 sm:$0xff]
        %s1141 = scalar_lea.vmem [#allocation2], 17
        %v1142 = vld [vmem:[%s1141] ss:$2 sm:$0xff]
        %s1143 = scalar_lea.vmem [#allocation2], 41
        %v1144 = vld [vmem:[%s1143] ss:$2 sm:$0xff]
        %s1145 = scalar_lea.vmem [#allocation2], 57
        %v1146 = vld [vmem:[%s1145] ss:$2 sm:$0xff]
        %s1147 = scalar_lea.vmem [#allocation2], 81
        %v1148 = vld [vmem:[%s1147] ss:$2 sm:$0xff]
        %s1149 = scalar_lea.vmem [#allocation2], 97
        %v1150 = vld [vmem:[%s1149] ss:$2 sm:$0xff]
        %s1151 = scalar_lea.vmem [#allocation2], 121
        %v1152 = vld [vmem:[%s1151] ss:$2 sm:$0xff]
        %s1153 = scalar_lea.vmem [#allocation2], 137
        %v1154 = vld [vmem:[%s1153] ss:$2 sm:$0xff]
        %s1155 = scalar_lea.vmem [#allocation2], 161
        %v1156 = vld [vmem:[%s1155] ss:$2 sm:$0xff]
        %s1157 = scalar_lea.vmem [#allocation2], 177
        %v1158 = vld [vmem:[%s1157] ss:$2 sm:$0xff]
        %s1159 = scalar_lea.vmem [#allocation2], 201
        %v1160 = vld [vmem:[%s1159] ss:$2 sm:$0xff]
        %s1161 = scalar_lea.vmem [#allocation2], 217
        %v1162 = vld [vmem:[%s1161] ss:$2 sm:$0xff]
        %s1163 = scalar_lea.vmem [#allocation2], 241
        %v1164 = vld [vmem:[%s1163] ss:$2 sm:$0xff]
        %s1165 = scalar_lea.vmem [#allocation2], 257
        %v1166 = vld [vmem:[%s1165] ss:$2 sm:$0xff]
        %s1167 = scalar_lea.vmem [#allocation2], 281
        %v1168 = vld [vmem:[%s1167] ss:$2 sm:$0xff]
        %s1169 = scalar_lea.vmem [#allocation2], 297
        %v1170 = vld [vmem:[%s1169] ss:$2 sm:$0xff]
        %v1171 = vmax.f32 %v1108, %v1140
        %v1172 = vmax.f32 %v1110, %v1142
        %v1173 = vmax.f32 %v1112, %v1144
        %v1174 = vmax.f32 %v1114, %v1146
        %v1175 = vmax.f32 %v1116, %v1148
        %v1176 = vmax.f32 %v1118, %v1150
        %v1177 = vmax.f32 %v1120, %v1152
        %v1178 = vmax.f32 %v1122, %v1154
        %v1179 = vmax.f32 %v1124, %v1156
        %v1180 = vmax.f32 %v1126, %v1158
        %v1181 = vmax.f32 %v1128, %v1160
        %v1182 = vmax.f32 %v1130, %v1162
        %v1183 = vmax.f32 %v1132, %v1164
        %v1184 = vmax.f32 %v1134, %v1166
        %v1185 = vmax.f32 %v1136, %v1168
        %v1186 = vmax.f32 %v1138, %v1170
        %s1187 = scalar_lea.vmem [#allocation2], 2
        %v1188 = vld [vmem:[%s1187] ss:$2 sm:$0xff]
        %s1189 = scalar_lea.vmem [#allocation2], 18
        %v1190 = vld [vmem:[%s1189] ss:$2 sm:$0xff]
        %s1191 = scalar_lea.vmem [#allocation2], 42
        %v1192 = vld [vmem:[%s1191] ss:$2 sm:$0xff]
        %s1193 = scalar_lea.vmem [#allocation2], 58
        %v1194 = vld [vmem:[%s1193] ss:$2 sm:$0xff]
        %s1195 = scalar_lea.vmem [#allocation2], 82
        %v1196 = vld [vmem:[%s1195] ss:$2 sm:$0xff]
        %s1197 = scalar_lea.vmem [#allocation2], 98
        %v1198 = vld [vmem:[%s1197] ss:$2 sm:$0xff]
        %s1199 = scalar_lea.vmem [#allocation2], 122
        %v1200 = vld [vmem:[%s1199] ss:$2 sm:$0xff]
        %s1201 = scalar_lea.vmem [#allocation2], 138
        %v1202 = vld [vmem:[%s1201] ss:$2 sm:$0xff]
        %s1203 = scalar_lea.vmem [#allocation2], 162
        %v1204 = vld [vmem:[%s1203] ss:$2 sm:$0xff]
        %s1205 = scalar_lea.vmem [#allocation2], 178
        %v1206 = vld [vmem:[%s1205] ss:$2 sm:$0xff]
        %s1207 = scalar_lea.vmem [#allocation2], 202
        %v1208 = vld [vmem:[%s1207] ss:$2 sm:$0xff]
        %s1209 = scalar_lea.vmem [#allocation2], 218
        %v1210 = vld [vmem:[%s1209] ss:$2 sm:$0xff]
        %s1211 = scalar_lea.vmem [#allocation2], 242
        %v1212 = vld [vmem:[%s1211] ss:$2 sm:$0xff]
        %s1213 = scalar_lea.vmem [#allocation2], 258
        %v1214 = vld [vmem:[%s1213] ss:$2 sm:$0xff]
        %s1215 = scalar_lea.vmem [#allocation2], 282
        %v1216 = vld [vmem:[%s1215] ss:$2 sm:$0xff]
        %s1217 = scalar_lea.vmem [#allocation2], 298
        %v1218 = vld [vmem:[%s1217] ss:$2 sm:$0xff]
        %v1219 = vmax.f32 %v1171, %v1188
        %v1220 = vmax.f32 %v1172, %v1190
        %v1221 = vmax.f32 %v1173, %v1192
        %v1222 = vmax.f32 %v1174, %v1194
        %v1223 = vmax.f32 %v1175, %v1196
        %v1224 = vmax.f32 %v1176, %v1198
        %v1225 = vmax.f32 %v1177, %v1200
        %v1226 = vmax.f32 %v1178, %v1202
        %v1227 = vmax.f32 %v1179, %v1204
        %v1228 = vmax.f32 %v1180, %v1206
        %v1229 = vmax.f32 %v1181, %v1208
        %v1230 = vmax.f32 %v1182, %v1210
        %v1231 = vmax.f32 %v1183, %v1212
        %v1232 = vmax.f32 %v1184, %v1214
        %v1233 = vmax.f32 %v1185, %v1216
        %v1234 = vmax.f32 %v1186, %v1218
        %1235 = vst.msk [vmem:[#allocation3 + $0x1] sm:$0xff] %vm1075, %v1219
        %1236 = vst.msk [vmem:[#allocation3 + $0x9] sm:$0xff] %vm1075, %v1220
        %1237 = vst.msk [vmem:[#allocation3 + $0x19] sm:$0xff] %vm1075, %v1221
        %1238 = vst.msk [vmem:[#allocation3 + $0x21] sm:$0xff] %vm1075, %v1222
        %1239 = vst.msk [vmem:[#allocation3 + $0x31] sm:$0xff] %vm1075, %v1223
        %1240 = vst.msk [vmem:[#allocation3 + $0x39] sm:$0xff] %vm1075, %v1224
        %1241 = vst.msk [vmem:[#allocation3 + $0x49] sm:$0xff] %vm1075, %v1225
        %1242 = vst.msk [vmem:[#allocation3 + $0x51] sm:$0xff] %vm1075, %v1226
        %1243 = vst.msk [vmem:[#allocation3 + $0x61] sm:$0xff] %vm1075, %v1227
        %1244 = vst.msk [vmem:[#allocation3 + $0x69] sm:$0xff] %vm1075, %v1228
        %1245 = vst.msk [vmem:[#allocation3 + $0x79] sm:$0xff] %vm1075, %v1229
        %1246 = vst.msk [vmem:[#allocation3 + $0x81] sm:$0xff] %vm1075, %v1230
        %1247 = vst.msk [vmem:[#allocation3 + $0x91] sm:$0xff] %vm1075, %v1231
        %1248 = vst.msk [vmem:[#allocation3 + $0x99] sm:$0xff] %vm1075, %v1232
        %1249 = vst.msk [vmem:[#allocation3 + $0xa9] sm:$0xff] %vm1075, %v1233
        %1250 = vst.msk [vmem:[#allocation3 + $0xb1] sm:$0xff] %vm1075, %v1234
        %s1251 = scalar_lea.vmem [#allocation3], 1
        %v1252 = vld [vmem:[%s1251] ss:$2 sm:$0xff]
        %s1253 = scalar_lea.vmem [#allocation3], 25
        %v1254 = vld [vmem:[%s1253] ss:$2 sm:$0xff]
        %s1255 = scalar_lea.vmem [#allocation3], 49
        %v1256 = vld [vmem:[%s1255] ss:$2 sm:$0xff]
        %s1257 = scalar_lea.vmem [#allocation3], 73
        %v1258 = vld [vmem:[%s1257] ss:$2 sm:$0xff]
        %s1259 = scalar_lea.vmem [#allocation3], 97
        %v1260 = vld [vmem:[%s1259] ss:$2 sm:$0xff]
        %s1261 = scalar_lea.vmem [#allocation3], 121
        %v1262 = vld [vmem:[%s1261] ss:$2 sm:$0xff]
        %s1263 = scalar_lea.vmem [#allocation3], 145
        %v1264 = vld [vmem:[%s1263] ss:$2 sm:$0xff]
        %s1265 = scalar_lea.vmem [#allocation3], 169
        %v1266 = vld [vmem:[%s1265] ss:$2 sm:$0xff]
        %v1267 = vld [vmem:[%s7] sm:$0xff]
        %v1268 = vld [vmem:[%s7 + $0x8] sm:$0xff]
        %v1269 = vld [vmem:[%s7 + $0x10] sm:$0xff]
        %v1270 = vld [vmem:[%s7 + $0x18] sm:$0xff]
        %v1271 = vld [vmem:[%s8] sm:$0x1]
        %v1273 = vperm.slane %v1271, 0
        %v1276 = vsel %vm1075, %v1252, 0
        %v1279 = vsel %vm1075, %v1254, 0
        %v1282 = vsel %vm1075, %v1256, 0
        %v1285 = vsel %vm1075, %v1258, 0
        %v1288 = vsel %vm1075, %v1260, 0
        %v1291 = vsel %vm1075, %v1262, 0
        %v1294 = vsel %vm1075, %v1264, 0
        %v1297 = vsel %vm1075, %v1266, 0
        %1299 = vmatpush.msra.mxu0 0.0
        %1300 = vmatpush.msra.mxu0 0.0
        %1301 = vmatpush.msra.mxu0 0.0
        %1302 = vmatpush.msra.mxu0 0.0
        %1303 = vmatpush.msra.mxu0 0.0
        %1304 = vmatpush.msra.mxu0 0.0
        %1305 = vmatpush.msra.mxu0 0.0
        %1306 = vmatpush.msra.mxu0 0.0
        %1307 = vmatpush.msra.mxu0 0.0
        %1308 = vmatpush.msra.mxu0 0.0
        %1309 = vmatpush.msra.mxu0 0.0
        %1310 = vmatpush.msra.mxu0 0.0
        %1311 = vmatpush.msra.mxu0 %v1270
        %1312 = vmatpush.msra.mxu0 %v1269
        %1313 = vmatpush.msra.mxu0 %v1268
        %1314 = vmatpush.msra.mxu0 %v1267
        %1315 = vmatmul.f32.gmra.mxu0 %v1276
        %v1316 = vpop.f32.mrf.mxu0
        %v1317 = vadd.f32 %v1273, %v1316
        %1318 = vmatmul.f32.gmra.mxu0 %v1279
        %v1319 = vpop.f32.mrf.mxu0
        %v1320 = vadd.f32 %v1273, %v1319
        %1321 = vmatmul.f32.gmra.mxu0 %v1282
        %v1322 = vpop.f32.mrf.mxu0
        %v1323 = vadd.f32 %v1273, %v1322
        %1324 = vmatmul.f32.gmra.mxu0 %v1285
        %v1325 = vpop.f32.mrf.mxu0
        %v1326 = vadd.f32 %v1273, %v1325
        %1327 = vmatmul.f32.gmra.mxu0 %v1288
        %v1328 = vpop.f32.mrf.mxu0
        %v1329 = vadd.f32 %v1273, %v1328
        %1330 = vmatmul.f32.gmra.mxu0 %v1291
        %v1331 = vpop.f32.mrf.mxu0
        %v1332 = vadd.f32 %v1273, %v1331
        %1333 = vmatmul.f32.gmra.mxu0 %v1294
        %v1334 = vpop.f32.mrf.mxu0
        %v1335 = vadd.f32 %v1273, %v1334
        %1336 = vmatmul.f32.gmra.mxu0 %v1297
        %v1337 = vpop.f32.mrf.mxu0
        %v1338 = vadd.f32 %v1273, %v1337
        %1339 = vdwg.mxu0
        %v1340 = vld [vmem:[#allocation3] ss:$2 sm:$0xff]
        %s1341 = scalar_lea.vmem [#allocation3], 24
        %v1342 = vld [vmem:[%s1341] ss:$2 sm:$0xff]
        %s1343 = scalar_lea.vmem [#allocation3], 48
        %v1344 = vld [vmem:[%s1343] ss:$2 sm:$0xff]
        %s1345 = scalar_lea.vmem [#allocation3], 72
        %v1346 = vld [vmem:[%s1345] ss:$2 sm:$0xff]
        %s1347 = scalar_lea.vmem [#allocation3], 96
        %v1348 = vld [vmem:[%s1347] ss:$2 sm:$0xff]
        %s1349 = scalar_lea.vmem [#allocation3], 120
        %v1350 = vld [vmem:[%s1349] ss:$2 sm:$0xff]
        %s1351 = scalar_lea.vmem [#allocation3], 144
        %v1352 = vld [vmem:[%s1351] ss:$2 sm:$0xff]
        %s1353 = scalar_lea.vmem [#allocation3], 168
        %v1354 = vld [vmem:[%s1353] ss:$2 sm:$0xff]
        %v1355 = vld [vmem:[%s3] sm:$0xff]
        %v1356 = vld [vmem:[%s3 + $0x8] sm:$0xff]
        %v1357 = vld [vmem:[%s3 + $0x10] sm:$0xff]
        %v1358 = vld [vmem:[%s3 + $0x18] sm:$0xff]
        %s1359 = scalar_lea.vmem %s3, 32
        %v1360 = vld [vmem:[%s1359] sm:$0xff]
        %v1361 = vld [vmem:[%s1359 + $0x8] sm:$0xff]
        %v1362 = vld [vmem:[%s1359 + $0x10] sm:$0xff]
        %v1363 = vld [vmem:[%s1359 + $0x18] sm:$0xff]
        %1364 = vmatpush.msra.mxu0 0.0
        %1365 = vmatpush.msra.mxu0 0.0
        %1366 = vmatpush.msra.mxu0 0.0
        %1367 = vmatpush.msra.mxu0 0.0
        %1368 = vmatpush.msra.mxu0 0.0
        %1369 = vmatpush.msra.mxu0 0.0
        %1370 = vmatpush.msra.mxu0 0.0
        %1371 = vmatpush.msra.mxu0 0.0
        %1372 = vmatpush.msra.mxu0 0.0
        %1373 = vmatpush.msra.mxu0 0.0
        %1374 = vmatpush.msra.mxu0 0.0
        %1375 = vmatpush.msra.mxu0 0.0
        %1376 = vmatpush.msra.mxu0 %v1363
        %1377 = vmatpush.msra.mxu0 %v1362
        %1378 = vmatpush.msra.mxu0 %v1361
        %1379 = vmatpush.msra.mxu0 %v1360
        %1380 = vmatmul.f32.gmra.mxu0 %v1276
        %v1381 = vpop.f32.mrf.mxu0
        %v1382 = vadd.f32 0.0, %v1381
        %1383 = vmatmul.f32.gmra.mxu0 %v1279
        %v1384 = vpop.f32.mrf.mxu0
        %v1385 = vadd.f32 0.0, %v1384
        %1386 = vmatmul.f32.gmra.mxu0 %v1282
        %v1387 = vpop.f32.mrf.mxu0
        %v1388 = vadd.f32 0.0, %v1387
        %1389 = vmatmul.f32.gmra.mxu0 %v1285
        %v1390 = vpop.f32.mrf.mxu0
        %v1391 = vadd.f32 0.0, %v1390
        %1392 = vmatmul.f32.gmra.mxu0 %v1288
        %v1393 = vpop.f32.mrf.mxu0
        %v1394 = vadd.f32 0.0, %v1393
        %1395 = vmatmul.f32.gmra.mxu0 %v1291
        %v1396 = vpop.f32.mrf.mxu0
        %v1397 = vadd.f32 0.0, %v1396
        %1398 = vmatmul.f32.gmra.mxu0 %v1294
        %v1399 = vpop.f32.mrf.mxu0
        %v1400 = vadd.f32 0.0, %v1399
        %1401 = vmatmul.f32.gmra.mxu0 %v1297
        %v1402 = vpop.f32.mrf.mxu0
        %v1403 = vadd.f32 0.0, %v1402
        %1404 = vdwg.mxu0
        %v1406 = vsel %vm1075, %v1340, 0
        %v1409 = vsel %vm1075, %v1342, 0
        %v1412 = vsel %vm1075, %v1344, 0
        %v1415 = vsel %vm1075, %v1346, 0
        %v1418 = vsel %vm1075, %v1348, 0
        %v1421 = vsel %vm1075, %v1350, 0
        %v1424 = vsel %vm1075, %v1352, 0
        %v1427 = vsel %vm1075, %v1354, 0
        %1429 = vmatpush.msra.mxu0 0.0
        %1430 = vmatpush.msra.mxu0 0.0
        %1431 = vmatpush.msra.mxu0 0.0
        %1432 = vmatpush.msra.mxu0 0.0
        %1433 = vmatpush.msra.mxu0 0.0
        %1434 = vmatpush.msra.mxu0 0.0
        %1435 = vmatpush.msra.mxu0 0.0
        %1436 = vmatpush.msra.mxu0 0.0
        %1437 = vmatpush.msra.mxu0 0.0
        %1438 = vmatpush.msra.mxu0 0.0
        %1439 = vmatpush.msra.mxu0 0.0
        %1440 = vmatpush.msra.mxu0 0.0
        %1441 = vmatpush.msra.mxu0 %v1358
        %1442 = vmatpush.msra.mxu0 %v1357
        %1443 = vmatpush.msra.mxu0 %v1356
        %1444 = vmatpush.msra.mxu0 %v1355
        %1445 = vmatmul.f32.gmra.mxu0 %v1406
        %v1446 = vpop.f32.mrf.mxu0
        %v1447 = vadd.f32 %v1382, %v1446
        %1448 = vmatmul.f32.gmra.mxu0 %v1409
        %v1449 = vpop.f32.mrf.mxu0
        %v1450 = vadd.f32 %v1385, %v1449
        %1451 = vmatmul.f32.gmra.mxu0 %v1412
        %v1452 = vpop.f32.mrf.mxu0
        %v1453 = vadd.f32 %v1388, %v1452
        %1454 = vmatmul.f32.gmra.mxu0 %v1415
        %v1455 = vpop.f32.mrf.mxu0
        %v1456 = vadd.f32 %v1391, %v1455
        %1457 = vmatmul.f32.gmra.mxu0 %v1418
        %v1458 = vpop.f32.mrf.mxu0
        %v1459 = vadd.f32 %v1394, %v1458
        %1460 = vmatmul.f32.gmra.mxu0 %v1421
        %v1461 = vpop.f32.mrf.mxu0
        %v1462 = vadd.f32 %v1397, %v1461
        %1463 = vmatmul.f32.gmra.mxu0 %v1424
        %v1464 = vpop.f32.mrf.mxu0
        %v1465 = vadd.f32 %v1400, %v1464
        %1466 = vmatmul.f32.gmra.mxu0 %v1427
        %v1467 = vpop.f32.mrf.mxu0
        %v1468 = vadd.f32 %v1403, %v1467
        %1469 = vdwg.mxu0
        %s1470 = scalar_lea.vmem [#allocation3], 2
        %v1471 = vld [vmem:[%s1470] ss:$2 sm:$0xff]
        %s1472 = scalar_lea.vmem [#allocation3], 26
        %v1473 = vld [vmem:[%s1472] ss:$2 sm:$0xff]
        %s1474 = scalar_lea.vmem [#allocation3], 50
        %v1475 = vld [vmem:[%s1474] ss:$2 sm:$0xff]
        %s1476 = scalar_lea.vmem [#allocation3], 74
        %v1477 = vld [vmem:[%s1476] ss:$2 sm:$0xff]
        %s1478 = scalar_lea.vmem [#allocation3], 98
        %v1479 = vld [vmem:[%s1478] ss:$2 sm:$0xff]
        %s1480 = scalar_lea.vmem [#allocation3], 122
        %v1481 = vld [vmem:[%s1480] ss:$2 sm:$0xff]
        %s1482 = scalar_lea.vmem [#allocation3], 146
        %v1483 = vld [vmem:[%s1482] ss:$2 sm:$0xff]
        %s1484 = scalar_lea.vmem [#allocation3], 170
        %v1485 = vld [vmem:[%s1484] ss:$2 sm:$0xff]
        %s1486 = scalar_lea.vmem %s3, 64
        %v1487 = vld [vmem:[%s1486] sm:$0xff]
        %v1488 = vld [vmem:[%s1486 + $0x8] sm:$0xff]
        %v1489 = vld [vmem:[%s1486 + $0x10] sm:$0xff]
        %v1490 = vld [vmem:[%s1486 + $0x18] sm:$0xff]
        %v1492 = vsel %vm1075, %v1471, 0
        %v1495 = vsel %vm1075, %v1473, 0
        %v1498 = vsel %vm1075, %v1475, 0
        %v1501 = vsel %vm1075, %v1477, 0
        %v1504 = vsel %vm1075, %v1479, 0
        %v1507 = vsel %vm1075, %v1481, 0
        %v1510 = vsel %vm1075, %v1483, 0
        %v1513 = vsel %vm1075, %v1485, 0
        %1515 = vmatpush.msra.mxu0 0.0
        %1516 = vmatpush.msra.mxu0 0.0
        %1517 = vmatpush.msra.mxu0 0.0
        %1518 = vmatpush.msra.mxu0 0.0
        %1519 = vmatpush.msra.mxu0 0.0
        %1520 = vmatpush.msra.mxu0 0.0
        %1521 = vmatpush.msra.mxu0 0.0
        %1522 = vmatpush.msra.mxu0 0.0
        %1523 = vmatpush.msra.mxu0 0.0
        %1524 = vmatpush.msra.mxu0 0.0
        %1525 = vmatpush.msra.mxu0 0.0
        %1526 = vmatpush.msra.mxu0 0.0
        %1527 = vmatpush.msra.mxu0 %v1490
        %1528 = vmatpush.msra.mxu0 %v1489
        %1529 = vmatpush.msra.mxu0 %v1488
        %1530 = vmatpush.msra.mxu0 %v1487
        %1531 = vmatmul.f32.gmra.mxu0 %v1492
        %v1532 = vpop.f32.mrf.mxu0
        %v1533 = vadd.f32 0.0, %v1532
        %1534 = vmatmul.f32.gmra.mxu0 %v1495
        %v1535 = vpop.f32.mrf.mxu0
        %v1536 = vadd.f32 0.0, %v1535
        %1537 = vmatmul.f32.gmra.mxu0 %v1498
        %v1538 = vpop.f32.mrf.mxu0
        %v1539 = vadd.f32 0.0, %v1538
        %1540 = vmatmul.f32.gmra.mxu0 %v1501
        %v1541 = vpop.f32.mrf.mxu0
        %v1542 = vadd.f32 0.0, %v1541
        %1543 = vmatmul.f32.gmra.mxu0 %v1504
        %v1544 = vpop.f32.mrf.mxu0
        %v1545 = vadd.f32 0.0, %v1544
        %1546 = vmatmul.f32.gmra.mxu0 %v1507
        %v1547 = vpop.f32.mrf.mxu0
        %v1548 = vadd.f32 0.0, %v1547
        %1549 = vmatmul.f32.gmra.mxu0 %v1510
        %v1550 = vpop.f32.mrf.mxu0
        %v1551 = vadd.f32 0.0, %v1550
        %1552 = vmatmul.f32.gmra.mxu0 %v1513
        %v1553 = vpop.f32.mrf.mxu0
        %v1554 = vadd.f32 0.0, %v1553
        %1555 = vdwg.mxu0
        %v1556 = vadd.f32 %v1447, %v1533
        %v1557 = vadd.f32 %v1450, %v1536
        %v1558 = vadd.f32 %v1453, %v1539
        %v1559 = vadd.f32 %v1456, %v1542
        %v1560 = vadd.f32 %v1459, %v1545
        %v1561 = vadd.f32 %v1462, %v1548
        %v1562 = vadd.f32 %v1465, %v1551
        %v1563 = vadd.f32 %v1468, %v1554
        %v1564 = vld [vmem:[%s4] sm:$0x1]
        %v1566 = vperm.slane %v1564, 0
        %v1568 = vadd.f32 %v1556, %v1566
        %v1569 = vadd.f32 %v1557, %v1566
        %v1570 = vadd.f32 %v1558, %v1566
        %v1571 = vadd.f32 %v1559, %v1566
        %v1572 = vadd.f32 %v1560, %v1566
        %v1573 = vadd.f32 %v1561, %v1566
        %v1574 = vadd.f32 %v1562, %v1566
        %v1575 = vadd.f32 %v1563, %v1566
        %v1576 = vmax.f32 %v1568, 0.0
        %v1577 = vmax.f32 %v1569, 0.0
        %v1578 = vmax.f32 %v1570, 0.0
        %v1579 = vmax.f32 %v1571, 0.0
        %v1580 = vmax.f32 %v1572, 0.0
        %v1581 = vmax.f32 %v1573, 0.0
        %v1582 = vmax.f32 %v1574, 0.0
        %v1583 = vmax.f32 %v1575, 0.0
        %1584 = vst.msk [vmem:[#allocation4 + $0x1] sm:$0xff] %vm767, %v1576
        %1585 = vst.msk [vmem:[#allocation4 + $0x11] sm:$0xff] %vm767, %v1577
        %1586 = vst.msk [vmem:[#allocation4 + $0x21] sm:$0xff] %vm767, %v1578
        %1587 = vst.msk [vmem:[#allocation4 + $0x31] sm:$0xff] %vm767, %v1579
        %1588 = vst.msk [vmem:[#allocation4 + $0x41] sm:$0xff] %vm767, %v1580
        %1589 = vst.msk [vmem:[#allocation4 + $0x51] sm:$0xff] %vm767, %v1581
        %1590 = vst.msk [vmem:[#allocation4 + $0x61] sm:$0xff] %vm767, %v1582
        %1591 = vst.msk [vmem:[#allocation4 + $0x71] sm:$0xff] %vm767, %v1583
        %v1592 = vld [vmem:[#allocation4] sm:$0xff]
        %v1593 = vld [vmem:[#allocation4 + $0x10] sm:$0xff]
        %v1594 = vld [vmem:[#allocation4 + $0x20] sm:$0xff]
        %v1595 = vld [vmem:[#allocation4 + $0x30] sm:$0xff]
        %v1596 = vld [vmem:[#allocation4 + $0x40] sm:$0xff]
        %v1597 = vld [vmem:[#allocation4 + $0x50] sm:$0xff]
        %v1598 = vld [vmem:[#allocation4 + $0x60] sm:$0xff]
        %v1599 = vld [vmem:[#allocation4 + $0x70] sm:$0xff]
        %v1600 = vld [vmem:[%s5] sm:$0xff]
        %v1601 = vld [vmem:[%s5 + $0x8] sm:$0xff]
        %v1602 = vld [vmem:[%s5 + $0x10] sm:$0xff]
        %v1603 = vld [vmem:[%s5 + $0x18] sm:$0xff]
        %v1604 = vld [vmem:[%s5 + $0x20] sm:$0xff]
        %v1605 = vld [vmem:[%s5 + $0x28] sm:$0xff]
        %v1606 = vld [vmem:[%s5 + $0x30] sm:$0xff]
        %v1607 = vld [vmem:[%s5 + $0x38] sm:$0xff]
        %v1608 = vld [vmem:[#allocation4 + $0x1] sm:$0xff]
        %v1609 = vld [vmem:[#allocation4 + $0x11] sm:$0xff]
        %v1610 = vld [vmem:[#allocation4 + $0x21] sm:$0xff]
        %v1611 = vld [vmem:[#allocation4 + $0x31] sm:$0xff]
        %v1612 = vld [vmem:[#allocation4 + $0x41] sm:$0xff]
        %v1613 = vld [vmem:[#allocation4 + $0x51] sm:$0xff]
        %v1614 = vld [vmem:[#allocation4 + $0x61] sm:$0xff]
        %v1615 = vld [vmem:[#allocation4 + $0x71] sm:$0xff]
        %s1616 = scalar_lea.vmem %s5, 64
        %v1617 = vld [vmem:[%s1616] sm:$0xff]
        %v1618 = vld [vmem:[%s1616 + $0x8] sm:$0xff]
        %v1619 = vld [vmem:[%s1616 + $0x10] sm:$0xff]
        %v1620 = vld [vmem:[%s1616 + $0x18] sm:$0xff]
        %v1621 = vld [vmem:[%s1616 + $0x20] sm:$0xff]
        %v1622 = vld [vmem:[%s1616 + $0x28] sm:$0xff]
        %v1623 = vld [vmem:[%s1616 + $0x30] sm:$0xff]
        %v1624 = vld [vmem:[%s1616 + $0x38] sm:$0xff]
        %v1626 = vsel %vm767, %v1608, 0
        %v1629 = vsel %vm767, %v1609, 0
        %v1632 = vsel %vm767, %v1610, 0
        %v1635 = vsel %vm767, %v1611, 0
        %v1638 = vsel %vm767, %v1612, 0
        %v1641 = vsel %vm767, %v1613, 0
        %v1644 = vsel %vm767, %v1614, 0
        %v1647 = vsel %vm767, %v1615, 0
        %1649 = vmatpush.msra.mxu0 0.0
        %1650 = vmatpush.msra.mxu0 0.0
        %1651 = vmatpush.msra.mxu0 0.0
        %1652 = vmatpush.msra.mxu0 0.0
        %1653 = vmatpush.msra.mxu0 0.0
        %1654 = vmatpush.msra.mxu0 0.0
        %1655 = vmatpush.msra.mxu0 0.0
        %1656 = vmatpush.msra.mxu0 0.0
        %1657 = vmatpush.msra.mxu0 %v1624
        %1658 = vmatpush.msra.mxu0 %v1623
        %1659 = vmatpush.msra.mxu0 %v1622
        %1660 = vmatpush.msra.mxu0 %v1621
        %1661 = vmatpush.msra.mxu0 %v1620
        %1662 = vmatpush.msra.mxu0 %v1619
        %1663 = vmatpush.msra.mxu0 %v1618
        %1664 = vmatpush.msra.mxu0 %v1617
        %1665 = vmatmul.f32.gmra.mxu0 %v1626
        %v1666 = vpop.f32.mrf.mxu0
        %v1667 = vadd.f32 0.0, %v1666
        %1668 = vmatmul.f32.gmra.mxu0 %v1629
        %v1669 = vpop.f32.mrf.mxu0
        %v1670 = vadd.f32 0.0, %v1669
        %1671 = vmatmul.f32.gmra.mxu0 %v1632
        %v1672 = vpop.f32.mrf.mxu0
        %v1673 = vadd.f32 0.0, %v1672
        %1674 = vmatmul.f32.gmra.mxu0 %v1635
        %v1675 = vpop.f32.mrf.mxu0
        %v1676 = vadd.f32 0.0, %v1675
        %1677 = vmatmul.f32.gmra.mxu0 %v1638
        %v1678 = vpop.f32.mrf.mxu0
        %v1679 = vadd.f32 0.0, %v1678
        %1680 = vmatmul.f32.gmra.mxu0 %v1641
        %v1681 = vpop.f32.mrf.mxu0
        %v1682 = vadd.f32 0.0, %v1681
        %1683 = vmatmul.f32.gmra.mxu0 %v1644
        %v1684 = vpop.f32.mrf.mxu0
        %v1685 = vadd.f32 0.0, %v1684
        %1686 = vmatmul.f32.gmra.mxu0 %v1647
        %v1687 = vpop.f32.mrf.mxu0
        %v1688 = vadd.f32 0.0, %v1687
        %1689 = vdwg.mxu0
        %v1691 = vsel %vm767, %v1592, 0
        %v1694 = vsel %vm767, %v1593, 0
        %v1697 = vsel %vm767, %v1594, 0
        %v1700 = vsel %vm767, %v1595, 0
        %v1703 = vsel %vm767, %v1596, 0
        %v1706 = vsel %vm767, %v1597, 0
        %v1709 = vsel %vm767, %v1598, 0
        %v1712 = vsel %vm767, %v1599, 0
        %1714 = vmatpush.msra.mxu0 0.0
        %1715 = vmatpush.msra.mxu0 0.0
        %1716 = vmatpush.msra.mxu0 0.0
        %1717 = vmatpush.msra.mxu0 0.0
        %1718 = vmatpush.msra.mxu0 0.0
        %1719 = vmatpush.msra.mxu0 0.0
        %1720 = vmatpush.msra.mxu0 0.0
        %1721 = vmatpush.msra.mxu0 0.0
        %1722 = vmatpush.msra.mxu0 %v1607
        %1723 = vmatpush.msra.mxu0 %v1606
        %1724 = vmatpush.msra.mxu0 %v1605
        %1725 = vmatpush.msra.mxu0 %v1604
        %1726 = vmatpush.msra.mxu0 %v1603
        %1727 = vmatpush.msra.mxu0 %v1602
        %1728 = vmatpush.msra.mxu0 %v1601
        %1729 = vmatpush.msra.mxu0 %v1600
        %1730 = vmatmul.f32.gmra.mxu0 %v1691
        %v1731 = vpop.f32.mrf.mxu0
        %v1732 = vadd.f32 %v1667, %v1731
        %1733 = vmatmul.f32.gmra.mxu0 %v1694
        %v1734 = vpop.f32.mrf.mxu0
        %v1735 = vadd.f32 %v1670, %v1734
        %1736 = vmatmul.f32.gmra.mxu0 %v1697
        %v1737 = vpop.f32.mrf.mxu0
        %v1738 = vadd.f32 %v1673, %v1737
        %1739 = vmatmul.f32.gmra.mxu0 %v1700
        %v1740 = vpop.f32.mrf.mxu0
        %v1741 = vadd.f32 %v1676, %v1740
        %1742 = vmatmul.f32.gmra.mxu0 %v1703
        %v1743 = vpop.f32.mrf.mxu0
        %v1744 = vadd.f32 %v1679, %v1743
        %1745 = vmatmul.f32.gmra.mxu0 %v1706
        %v1746 = vpop.f32.mrf.mxu0
        %v1747 = vadd.f32 %v1682, %v1746
        %1748 = vmatmul.f32.gmra.mxu0 %v1709
        %v1749 = vpop.f32.mrf.mxu0
        %v1750 = vadd.f32 %v1685, %v1749
        %1751 = vmatmul.f32.gmra.mxu0 %v1712
        %v1752 = vpop.f32.mrf.mxu0
        %v1753 = vadd.f32 %v1688, %v1752
        %1754 = vdwg.mxu0
        %v1755 = vld [vmem:[#allocation4 + $0x2] sm:$0xff]
        %v1756 = vld [vmem:[#allocation4 + $0x12] sm:$0xff]
        %v1757 = vld [vmem:[#allocation4 + $0x22] sm:$0xff]
        %v1758 = vld [vmem:[#allocation4 + $0x32] sm:$0xff]
        %v1759 = vld [vmem:[#allocation4 + $0x42] sm:$0xff]
        %v1760 = vld [vmem:[#allocation4 + $0x52] sm:$0xff]
        %v1761 = vld [vmem:[#allocation4 + $0x62] sm:$0xff]
        %v1762 = vld [vmem:[#allocation4 + $0x72] sm:$0xff]
        %s1763 = scalar_lea.vmem %s5, 128
        %v1764 = vld [vmem:[%s1763] sm:$0xff]
        %v1765 = vld [vmem:[%s1763 + $0x8] sm:$0xff]
        %v1766 = vld [vmem:[%s1763 + $0x10] sm:$0xff]
        %v1767 = vld [vmem:[%s1763 + $0x18] sm:$0xff]
        %v1768 = vld [vmem:[%s1763 + $0x20] sm:$0xff]
        %v1769 = vld [vmem:[%s1763 + $0x28] sm:$0xff]
        %v1770 = vld [vmem:[%s1763 + $0x30] sm:$0xff]
        %v1771 = vld [vmem:[%s1763 + $0x38] sm:$0xff]
        %v1773 = vsel %vm767, %v1755, 0
        %v1776 = vsel %vm767, %v1756, 0
        %v1779 = vsel %vm767, %v1757, 0
        %v1782 = vsel %vm767, %v1758, 0
        %v1785 = vsel %vm767, %v1759, 0
        %v1788 = vsel %vm767, %v1760, 0
        %v1791 = vsel %vm767, %v1761, 0
        %v1794 = vsel %vm767, %v1762, 0
        %1796 = vmatpush.msra.mxu0 0.0
        %1797 = vmatpush.msra.mxu0 0.0
        %1798 = vmatpush.msra.mxu0 0.0
        %1799 = vmatpush.msra.mxu0 0.0
        %1800 = vmatpush.msra.mxu0 0.0
        %1801 = vmatpush.msra.mxu0 0.0
        %1802 = vmatpush.msra.mxu0 0.0
        %1803 = vmatpush.msra.mxu0 0.0
        %1804 = vmatpush.msra.mxu0 %v1771
        %1805 = vmatpush.msra.mxu0 %v1770
        %1806 = vmatpush.msra.mxu0 %v1769
        %1807 = vmatpush.msra.mxu0 %v1768
        %1808 = vmatpush.msra.mxu0 %v1767
        %1809 = vmatpush.msra.mxu0 %v1766
        %1810 = vmatpush.msra.mxu0 %v1765
        %1811 = vmatpush.msra.mxu0 %v1764
        %1812 = vmatmul.f32.gmra.mxu0 %v1773
        %v1813 = vpop.f32.mrf.mxu0
        %v1814 = vadd.f32 0.0, %v1813
        %1815 = vmatmul.f32.gmra.mxu0 %v1776
        %v1816 = vpop.f32.mrf.mxu0
        %v1817 = vadd.f32 0.0, %v1816
        %1818 = vmatmul.f32.gmra.mxu0 %v1779
        %v1819 = vpop.f32.mrf.mxu0
        %v1820 = vadd.f32 0.0, %v1819
        %1821 = vmatmul.f32.gmra.mxu0 %v1782
        %v1822 = vpop.f32.mrf.mxu0
        %v1823 = vadd.f32 0.0, %v1822
        %1824 = vmatmul.f32.gmra.mxu0 %v1785
        %v1825 = vpop.f32.mrf.mxu0
        %v1826 = vadd.f32 0.0, %v1825
        %1827 = vmatmul.f32.gmra.mxu0 %v1788
        %v1828 = vpop.f32.mrf.mxu0
        %v1829 = vadd.f32 0.0, %v1828
        %1830 = vmatmul.f32.gmra.mxu0 %v1791
        %v1831 = vpop.f32.mrf.mxu0
        %v1832 = vadd.f32 0.0, %v1831
        %1833 = vmatmul.f32.gmra.mxu0 %v1794
        %v1834 = vpop.f32.mrf.mxu0
        %v1835 = vadd.f32 0.0, %v1834
        %1836 = vdwg.mxu0
        %v1837 = vadd.f32 %v1732, %v1814
        %v1838 = vadd.f32 %v1735, %v1817
        %v1839 = vadd.f32 %v1738, %v1820
        %v1840 = vadd.f32 %v1741, %v1823
        %v1841 = vadd.f32 %v1744, %v1826
        %v1842 = vadd.f32 %v1747, %v1829
        %v1843 = vadd.f32 %v1750, %v1832
        %v1844 = vadd.f32 %v1753, %v1835
        %v1845 = vld [vmem:[%s6] sm:$0x1]
        %v1847 = vperm.slane %v1845, 0
        %v1849 = vadd.f32 %v1837, %v1847
        %v1850 = vadd.f32 %v1838, %v1847
        %v1851 = vadd.f32 %v1839, %v1847
        %v1852 = vadd.f32 %v1840, %v1847
        %v1853 = vadd.f32 %v1841, %v1847
        %v1854 = vadd.f32 %v1842, %v1847
        %v1855 = vadd.f32 %v1843, %v1847
        %v1856 = vadd.f32 %v1844, %v1847
        %v1857 = vadd.f32 %v1849, %v1317
        %v1858 = vadd.f32 %v1850, %v1320
        %v1859 = vadd.f32 %v1851, %v1323
        %v1860 = vadd.f32 %v1852, %v1326
        %v1861 = vadd.f32 %v1853, %v1329
        %v1862 = vadd.f32 %v1854, %v1332
        %v1863 = vadd.f32 %v1855, %v1335
        %v1864 = vadd.f32 %v1856, %v1338
        %v1865 = vmax.f32 %v1857, 0.0
        %v1866 = vmax.f32 %v1858, 0.0
        %v1867 = vmax.f32 %v1859, 0.0
        %v1868 = vmax.f32 %v1860, 0.0
        %v1869 = vmax.f32 %v1861, 0.0
        %v1870 = vmax.f32 %v1862, 0.0
        %v1871 = vmax.f32 %v1863, 0.0
        %v1872 = vmax.f32 %v1864, 0.0
        %1873 = vst.msk [vmem:[#allocation5 + $0x1] sm:$0xff] %vm767, %v1865
        %1874 = vst.msk [vmem:[#allocation5 + $0x19] sm:$0xff] %vm767, %v1866
        %1875 = vst.msk [vmem:[#allocation5 + $0x31] sm:$0xff] %vm767, %v1867
        %1876 = vst.msk [vmem:[#allocation5 + $0x49] sm:$0xff] %vm767, %v1868
        %1877 = vst.msk [vmem:[#allocation5 + $0x61] sm:$0xff] %vm767, %v1869
        %1878 = vst.msk [vmem:[#allocation5 + $0x79] sm:$0xff] %vm767, %v1870
        %1879 = vst.msk [vmem:[#allocation5 + $0x91] sm:$0xff] %vm767, %v1871
        %1880 = vst.msk [vmem:[#allocation5 + $0xa9] sm:$0xff] %vm767, %v1872
        %s1881 = scalar_lea.vmem [#allocation5], 1
        %v1882 = vld [vmem:[%s1881] ss:$2 sm:$0xff]
        %s1883 = scalar_lea.vmem [#allocation5], 25
        %v1884 = vld [vmem:[%s1883] ss:$2 sm:$0xff]
        %s1885 = scalar_lea.vmem [#allocation5], 49
        %v1886 = vld [vmem:[%s1885] ss:$2 sm:$0xff]
        %s1887 = scalar_lea.vmem [#allocation5], 73
        %v1888 = vld [vmem:[%s1887] ss:$2 sm:$0xff]
        %s1889 = scalar_lea.vmem [#allocation5], 97
        %v1890 = vld [vmem:[%s1889] ss:$2 sm:$0xff]
        %s1891 = scalar_lea.vmem [#allocation5], 121
        %v1892 = vld [vmem:[%s1891] ss:$2 sm:$0xff]
        %s1893 = scalar_lea.vmem [#allocation5], 145
        %v1894 = vld [vmem:[%s1893] ss:$2 sm:$0xff]
        %s1895 = scalar_lea.vmem [#allocation5], 169
        %v1896 = vld [vmem:[%s1895] ss:$2 sm:$0xff]
        %v1897 = vld [vmem:[#allocation11] sm:$0xff]
        %v1898 = vld [vmem:[#allocation11 + $0x8] sm:$0xff]
        %v1899 = vld [vmem:[#allocation11 + $0x10] sm:$0xff]
        %v1900 = vld [vmem:[#allocation11 + $0x18] sm:$0xff]
        %v1901 = vld [vmem:[#allocation11 + $0x20] sm:$0xff]
        %v1902 = vld [vmem:[#allocation11 + $0x28] sm:$0xff]
        %v1903 = vld [vmem:[#allocation11 + $0x30] sm:$0xff]
        %v1904 = vld [vmem:[#allocation11 + $0x38] sm:$0xff]
        %v1905 = vld [vmem:[#allocation12] sm:$0x1]
        %v1907 = vperm.slane %v1905, 0
        %v1910 = vsel %vm767, %v1882, 0
        %v1913 = vsel %vm767, %v1884, 0
        %v1916 = vsel %vm767, %v1886, 0
        %v1919 = vsel %vm767, %v1888, 0
        %v1922 = vsel %vm767, %v1890, 0
        %v1925 = vsel %vm767, %v1892, 0
        %v1928 = vsel %vm767, %v1894, 0
        %v1931 = vsel %vm767, %v1896, 0
        %1933 = vmatpush.msra.mxu0 0.0
        %1934 = vmatpush.msra.mxu0 0.0
        %1935 = vmatpush.msra.mxu0 0.0
        %1936 = vmatpush.msra.mxu0 0.0
        %1937 = vmatpush.msra.mxu0 0.0
        %1938 = vmatpush.msra.mxu0 0.0
        %1939 = vmatpush.msra.mxu0 0.0
        %1940 = vmatpush.msra.mxu0 0.0
        %1941 = vmatpush.msra.mxu0 %v1904
        %1942 = vmatpush.msra.mxu0 %v1903
        %1943 = vmatpush.msra.mxu0 %v1902
        %1944 = vmatpush.msra.mxu0 %v1901
        %1945 = vmatpush.msra.mxu0 %v1900
        %1946 = vmatpush.msra.mxu0 %v1899
        %1947 = vmatpush.msra.mxu0 %v1898
        %1948 = vmatpush.msra.mxu0 %v1897
        %1949 = vmatmul.f32.gmra.mxu0 %v1910
        %v1950 = vpop.f32.mrf.mxu0
        %v1951 = vadd.f32 %v1907, %v1950
        %1952 = vmatmul.f32.gmra.mxu0 %v1913
        %v1953 = vpop.f32.mrf.mxu0
        %v1954 = vadd.f32 %v1907, %v1953
        %1955 = vmatmul.f32.gmra.mxu0 %v1916
        %v1956 = vpop.f32.mrf.mxu0
        %v1957 = vadd.f32 %v1907, %v1956
        %1958 = vmatmul.f32.gmra.mxu0 %v1919
        %v1959 = vpop.f32.mrf.mxu0
        %v1960 = vadd.f32 %v1907, %v1959
        %1961 = vmatmul.f32.gmra.mxu0 %v1922
        %v1962 = vpop.f32.mrf.mxu0
        %v1963 = vadd.f32 %v1907, %v1962
        %1964 = vmatmul.f32.gmra.mxu0 %v1925
        %v1965 = vpop.f32.mrf.mxu0
        %v1966 = vadd.f32 %v1907, %v1965
        %1967 = vmatmul.f32.gmra.mxu0 %v1928
        %v1968 = vpop.f32.mrf.mxu0
        %v1969 = vadd.f32 %v1907, %v1968
        %1970 = vmatmul.f32.gmra.mxu0 %v1931
        %v1971 = vpop.f32.mrf.mxu0
        %v1972 = vadd.f32 %v1907, %v1971
        %1973 = vdwg.mxu0
        %v1974 = vld [vmem:[#allocation5] ss:$2 sm:$0xff]
        %s1975 = scalar_lea.vmem [#allocation5], 24
        %v1976 = vld [vmem:[%s1975] ss:$2 sm:$0xff]
        %s1977 = scalar_lea.vmem [#allocation5], 48
        %v1978 = vld [vmem:[%s1977] ss:$2 sm:$0xff]
        %s1979 = scalar_lea.vmem [#allocation5], 72
        %v1980 = vld [vmem:[%s1979] ss:$2 sm:$0xff]
        %s1981 = scalar_lea.vmem [#allocation5], 96
        %v1982 = vld [vmem:[%s1981] ss:$2 sm:$0xff]
        %s1983 = scalar_lea.vmem [#allocation5], 120
        %v1984 = vld [vmem:[%s1983] ss:$2 sm:$0xff]
        %s1985 = scalar_lea.vmem [#allocation5], 144
        %v1986 = vld [vmem:[%s1985] ss:$2 sm:$0xff]
        %s1987 = scalar_lea.vmem [#allocation5], 168
        %v1988 = vld [vmem:[%s1987] ss:$2 sm:$0xff]
        %v1989 = vld [vmem:[%s9] sm:$0xff]
        %v1990 = vld [vmem:[%s9 + $0x8] sm:$0xff]
        %v1991 = vld [vmem:[%s9 + $0x10] sm:$0xff]
        %v1992 = vld [vmem:[%s9 + $0x18] sm:$0xff]
        %v1993 = vld [vmem:[%s9 + $0x20] sm:$0xff]
        %v1994 = vld [vmem:[%s9 + $0x28] sm:$0xff]
        %v1995 = vld [vmem:[%s9 + $0x30] sm:$0xff]
        %v1996 = vld [vmem:[%s9 + $0x38] sm:$0xff]
        %s1997 = scalar_lea.vmem %s9, 64
        %v1998 = vld [vmem:[%s1997] sm:$0xff]
        %v1999 = vld [vmem:[%s1997 + $0x8] sm:$0xff]
        %v2000 = vld [vmem:[%s1997 + $0x10] sm:$0xff]
        %v2001 = vld [vmem:[%s1997 + $0x18] sm:$0xff]
        %v2002 = vld [vmem:[%s1997 + $0x20] sm:$0xff]
        %v2003 = vld [vmem:[%s1997 + $0x28] sm:$0xff]
        %v2004 = vld [vmem:[%s1997 + $0x30] sm:$0xff]
        %v2005 = vld [vmem:[%s1997 + $0x38] sm:$0xff]
        %2006 = vmatpush.msra.mxu0 0.0
        %2007 = vmatpush.msra.mxu0 0.0
        %2008 = vmatpush.msra.mxu0 0.0
        %2009 = vmatpush.msra.mxu0 0.0
        %2010 = vmatpush.msra.mxu0 0.0
        %2011 = vmatpush.msra.mxu0 0.0
        %2012 = vmatpush.msra.mxu0 0.0
        %2013 = vmatpush.msra.mxu0 0.0
        %2014 = vmatpush.msra.mxu0 %v2005
        %2015 = vmatpush.msra.mxu0 %v2004
        %2016 = vmatpush.msra.mxu0 %v2003
        %2017 = vmatpush.msra.mxu0 %v2002
        %2018 = vmatpush.msra.mxu0 %v2001
        %2019 = vmatpush.msra.mxu0 %v2000
        %2020 = vmatpush.msra.mxu0 %v1999
        %2021 = vmatpush.msra.mxu0 %v1998
        %2022 = vmatmul.f32.gmra.mxu0 %v1910
        %v2023 = vpop.f32.mrf.mxu0
        %v2024 = vadd.f32 0.0, %v2023
        %2025 = vmatmul.f32.gmra.mxu0 %v1913
        %v2026 = vpop.f32.mrf.mxu0
        %v2027 = vadd.f32 0.0, %v2026
        %2028 = vmatmul.f32.gmra.mxu0 %v1916
        %v2029 = vpop.f32.mrf.mxu0
        %v2030 = vadd.f32 0.0, %v2029
        %2031 = vmatmul.f32.gmra.mxu0 %v1919
        %v2032 = vpop.f32.mrf.mxu0
        %v2033 = vadd.f32 0.0, %v2032
        %2034 = vmatmul.f32.gmra.mxu0 %v1922
        %v2035 = vpop.f32.mrf.mxu0
        %v2036 = vadd.f32 0.0, %v2035
        %2037 = vmatmul.f32.gmra.mxu0 %v1925
        %v2038 = vpop.f32.mrf.mxu0
        %v2039 = vadd.f32 0.0, %v2038
        %2040 = vmatmul.f32.gmra.mxu0 %v1928
        %v2041 = vpop.f32.mrf.mxu0
        %v2042 = vadd.f32 0.0, %v2041
        %2043 = vmatmul.f32.gmra.mxu0 %v1931
        %v2044 = vpop.f32.mrf.mxu0
        %v2045 = vadd.f32 0.0, %v2044
        %2046 = vdwg.mxu0
        %v2048 = vsel %vm767, %v1974, 0
        %v2051 = vsel %vm767, %v1976, 0
        %v2054 = vsel %vm767, %v1978, 0
        %v2057 = vsel %vm767, %v1980, 0
        %v2060 = vsel %vm767, %v1982, 0
        %v2063 = vsel %vm767, %v1984, 0
        %v2066 = vsel %vm767, %v1986, 0
        %v2069 = vsel %vm767, %v1988, 0
        %2071 = vmatpush.msra.mxu0 0.0
        %2072 = vmatpush.msra.mxu0 0.0
        %2073 = vmatpush.msra.mxu0 0.0
        %2074 = vmatpush.msra.mxu0 0.0
        %2075 = vmatpush.msra.mxu0 0.0
        %2076 = vmatpush.msra.mxu0 0.0
        %2077 = vmatpush.msra.mxu0 0.0
        %2078 = vmatpush.msra.mxu0 0.0
        %2079 = vmatpush.msra.mxu0 %v1996
        %2080 = vmatpush.msra.mxu0 %v1995
        %2081 = vmatpush.msra.mxu0 %v1994
        %2082 = vmatpush.msra.mxu0 %v1993
        %2083 = vmatpush.msra.mxu0 %v1992
        %2084 = vmatpush.msra.mxu0 %v1991
        %2085 = vmatpush.msra.mxu0 %v1990
        %2086 = vmatpush.msra.mxu0 %v1989
        %2087 = vmatmul.f32.gmra.mxu0 %v2048
        %v2088 = vpop.f32.mrf.mxu0
        %v2089 = vadd.f32 %v2024, %v2088
        %2090 = vmatmul.f32.gmra.mxu0 %v2051
        %v2091 = vpop.f32.mrf.mxu0
        %v2092 = vadd.f32 %v2027, %v2091
        %2093 = vmatmul.f32.gmra.mxu0 %v2054
        %v2094 = vpop.f32.mrf.mxu0
        %v2095 = vadd.f32 %v2030, %v2094
        %2096 = vmatmul.f32.gmra.mxu0 %v2057
        %v2097 = vpop.f32.mrf.mxu0
        %v2098 = vadd.f32 %v2033, %v2097
        %2099 = vmatmul.f32.gmra.mxu0 %v2060
        %v2100 = vpop.f32.mrf.mxu0
        %v2101 = vadd.f32 %v2036, %v2100
        %2102 = vmatmul.f32.gmra.mxu0 %v2063
        %v2103 = vpop.f32.mrf.mxu0
        %v2104 = vadd.f32 %v2039, %v2103
        %2105 = vmatmul.f32.gmra.mxu0 %v2066
        %v2106 = vpop.f32.mrf.mxu0
        %v2107 = vadd.f32 %v2042, %v2106
        %2108 = vmatmul.f32.gmra.mxu0 %v2069
        %v2109 = vpop.f32.mrf.mxu0
        %v2110 = vadd.f32 %v2045, %v2109
        %2111 = vdwg.mxu0
        %s2112 = scalar_lea.vmem [#allocation5], 2
        %v2113 = vld [vmem:[%s2112] ss:$2 sm:$0xff]
        %s2114 = scalar_lea.vmem [#allocation5], 26
        %v2115 = vld [vmem:[%s2114] ss:$2 sm:$0xff]
        %s2116 = scalar_lea.vmem [#allocation5], 50
        %v2117 = vld [vmem:[%s2116] ss:$2 sm:$0xff]
        %s2118 = scalar_lea.vmem [#allocation5], 74
        %v2119 = vld [vmem:[%s2118] ss:$2 sm:$0xff]
        %s2120 = scalar_lea.vmem [#allocation5], 98
        %v2121 = vld [vmem:[%s2120] ss:$2 sm:$0xff]
        %s2122 = scalar_lea.vmem [#allocation5], 122
        %v2123 = vld [vmem:[%s2122] ss:$2 sm:$0xff]
        %s2124 = scalar_lea.vmem [#allocation5], 146
        %v2125 = vld [vmem:[%s2124] ss:$2 sm:$0xff]
        %s2126 = scalar_lea.vmem [#allocation5], 170
        %v2127 = vld [vmem:[%s2126] ss:$2 sm:$0xff]
        %s2128 = scalar_lea.vmem %s9, 128
        %v2129 = vld [vmem:[%s2128] sm:$0xff]
        %v2130 = vld [vmem:[%s2128 + $0x8] sm:$0xff]
        %v2131 = vld [vmem:[%s2128 + $0x10] sm:$0xff]
        %v2132 = vld [vmem:[%s2128 + $0x18] sm:$0xff]
        %v2133 = vld [vmem:[%s2128 + $0x20] sm:$0xff]
        %v2134 = vld [vmem:[%s2128 + $0x28] sm:$0xff]
        %v2135 = vld [vmem:[%s2128 + $0x30] sm:$0xff]
        %v2136 = vld [vmem:[%s2128 + $0x38] sm:$0xff]
        %v2138 = vsel %vm767, %v2113, 0
        %v2141 = vsel %vm767, %v2115, 0
        %v2144 = vsel %vm767, %v2117, 0
        %v2147 = vsel %vm767, %v2119, 0
        %v2150 = vsel %vm767, %v2121, 0
        %v2153 = vsel %vm767, %v2123, 0
        %v2156 = vsel %vm767, %v2125, 0
        %v2159 = vsel %vm767, %v2127, 0
        %2161 = vmatpush.msra.mxu0 0.0
        %2162 = vmatpush.msra.mxu0 0.0
        %2163 = vmatpush.msra.mxu0 0.0
        %2164 = vmatpush.msra.mxu0 0.0
        %2165 = vmatpush.msra.mxu0 0.0
        %2166 = vmatpush.msra.mxu0 0.0
        %2167 = vmatpush.msra.mxu0 0.0
        %2168 = vmatpush.msra.mxu0 0.0
        %2169 = vmatpush.msra.mxu0 %v2136
        %2170 = vmatpush.msra.mxu0 %v2135
        %2171 = vmatpush.msra.mxu0 %v2134
        %2172 = vmatpush.msra.mxu0 %v2133
        %2173 = vmatpush.msra.mxu0 %v2132
        %2174 = vmatpush.msra.mxu0 %v2131
        %2175 = vmatpush.msra.mxu0 %v2130
        %2176 = vmatpush.msra.mxu0 %v2129
        %2177 = vmatmul.f32.gmra.mxu0 %v2138
        %v2178 = vpop.f32.mrf.mxu0
        %v2179 = vadd.f32 0.0, %v2178
        %2180 = vmatmul.f32.gmra.mxu0 %v2141
        %v2181 = vpop.f32.mrf.mxu0
        %v2182 = vadd.f32 0.0, %v2181
        %2183 = vmatmul.f32.gmra.mxu0 %v2144
        %v2184 = vpop.f32.mrf.mxu0
        %v2185 = vadd.f32 0.0, %v2184
        %2186 = vmatmul.f32.gmra.mxu0 %v2147
        %v2187 = vpop.f32.mrf.mxu0
        %v2188 = vadd.f32 0.0, %v2187
        %2189 = vmatmul.f32.gmra.mxu0 %v2150
        %v2190 = vpop.f32.mrf.mxu0
        %v2191 = vadd.f32 0.0, %v2190
        %2192 = vmatmul.f32.gmra.mxu0 %v2153
        %v2193 = vpop.f32.mrf.mxu0
        %v2194 = vadd.f32 0.0, %v2193
        %2195 = vmatmul.f32.gmra.mxu0 %v2156
        %v2196 = vpop.f32.mrf.mxu0
        %v2197 = vadd.f32 0.0, %v2196
        %2198 = vmatmul.f32.gmra.mxu0 %v2159
        %v2199 = vpop.f32.mrf.mxu0
        %v2200 = vadd.f32 0.0, %v2199
        %2201 = vdwg.mxu0
        %v2202 = vadd.f32 %v2089, %v2179
        %v2203 = vadd.f32 %v2092, %v2182
        %v2204 = vadd.f32 %v2095, %v2185
        %v2205 = vadd.f32 %v2098, %v2188
        %v2206 = vadd.f32 %v2101, %v2191
        %v2207 = vadd.f32 %v2104, %v2194
        %v2208 = vadd.f32 %v2107, %v2197
        %v2209 = vadd.f32 %v2110, %v2200
        %v2210 = vld [vmem:[#allocation7] sm:$0x1]
        %v2212 = vperm.slane %v2210, 0
        %v2214 = vadd.f32 %v2202, %v2212
        %v2215 = vadd.f32 %v2203, %v2212
        %v2216 = vadd.f32 %v2204, %v2212
        %v2217 = vadd.f32 %v2205, %v2212
        %v2218 = vadd.f32 %v2206, %v2212
        %v2219 = vadd.f32 %v2207, %v2212
        %v2220 = vadd.f32 %v2208, %v2212
        %v2221 = vadd.f32 %v2209, %v2212
        %v2222 = vmax.f32 %v2214, 0.0
        %v2223 = vmax.f32 %v2215, 0.0
        %v2224 = vmax.f32 %v2216, 0.0
        %v2225 = vmax.f32 %v2217, 0.0
        %v2226 = vmax.f32 %v2218, 0.0
        %v2227 = vmax.f32 %v2219, 0.0
        %v2228 = vmax.f32 %v2220, 0.0
        %v2229 = vmax.f32 %v2221, 0.0
        %2230 = vst [vmem:[#allocation6 + $0x1] sm:$0xf] %v2222
        %2231 = vst [vmem:[#allocation6 + $0x11] sm:$0xf] %v2223
        %2232 = vst [vmem:[#allocation6 + $0x21] sm:$0xf] %v2224
        %2233 = vst [vmem:[#allocation6 + $0x31] sm:$0xf] %v2225
        %2234 = vst [vmem:[#allocation6 + $0x41] sm:$0xf] %v2226
        %2235 = vst [vmem:[#allocation6 + $0x51] sm:$0xf] %v2227
        %2236 = vst [vmem:[#allocation6 + $0x61] sm:$0xf] %v2228
        %2237 = vst [vmem:[#allocation6 + $0x71] sm:$0xf] %v2229
        %v2238 = vld [vmem:[#allocation6] sm:$0xff]
        %v2239 = vld [vmem:[#allocation6 + $0x10] sm:$0xff]
        %v2240 = vld [vmem:[#allocation6 + $0x20] sm:$0xff]
        %v2241 = vld [vmem:[#allocation6 + $0x30] sm:$0xff]
        %v2242 = vld [vmem:[#allocation6 + $0x40] sm:$0xff]
        %v2243 = vld [vmem:[#allocation6 + $0x50] sm:$0xff]
        %v2244 = vld [vmem:[#allocation6 + $0x60] sm:$0xff]
        %v2245 = vld [vmem:[#allocation6 + $0x70] sm:$0xff]
        %v2246 = vld [vmem:[%s11] sm:$0xff]
        %v2247 = vld [vmem:[%s11 + $0x8] sm:$0xff]
        %v2248 = vld [vmem:[%s11 + $0x10] sm:$0xff]
        %v2249 = vld [vmem:[%s11 + $0x18] sm:$0xff]
        %v2250 = vld [vmem:[%s11 + $0x20] sm:$0xff]
        %v2251 = vld [vmem:[%s11 + $0x28] sm:$0xff]
        %v2252 = vld [vmem:[%s11 + $0x30] sm:$0xff]
        %v2253 = vld [vmem:[%s11 + $0x38] sm:$0xff]
        %v2254 = vld [vmem:[%s11 + $0x40] sm:$0xff]
        %v2255 = vld [vmem:[%s11 + $0x48] sm:$0xff]
        %v2256 = vld [vmem:[%s11 + $0x50] sm:$0xff]
        %v2257 = vld [vmem:[%s11 + $0x58] sm:$0xff]
        %v2258 = vld [vmem:[%s11 + $0x60] sm:$0xff]
        %v2259 = vld [vmem:[%s11 + $0x68] sm:$0xff]
        %v2260 = vld [vmem:[%s11 + $0x70] sm:$0xff]
        %v2261 = vld [vmem:[%s11 + $0x78] sm:$0xff]
        %v2262 = vld [vmem:[#allocation6 + $0x1] sm:$0xff]
        %v2263 = vld [vmem:[#allocation6 + $0x11] sm:$0xff]
        %v2264 = vld [vmem:[#allocation6 + $0x21] sm:$0xff]
        %v2265 = vld [vmem:[#allocation6 + $0x31] sm:$0xff]
        %v2266 = vld [vmem:[#allocation6 + $0x41] sm:$0xff]
        %v2267 = vld [vmem:[#allocation6 + $0x51] sm:$0xff]
        %v2268 = vld [vmem:[#allocation6 + $0x61] sm:$0xff]
        %v2269 = vld [vmem:[#allocation6 + $0x71] sm:$0xff]
        %s2270 = scalar_lea.vmem %s11, 128
        %v2271 = vld [vmem:[%s2270] sm:$0xff]
        %v2272 = vld [vmem:[%s2270 + $0x8] sm:$0xff]
        %v2273 = vld [vmem:[%s2270 + $0x10] sm:$0xff]
        %v2274 = vld [vmem:[%s2270 + $0x18] sm:$0xff]
        %v2275 = vld [vmem:[%s2270 + $0x20] sm:$0xff]
        %v2276 = vld [vmem:[%s2270 + $0x28] sm:$0xff]
        %v2277 = vld [vmem:[%s2270 + $0x30] sm:$0xff]
        %v2278 = vld [vmem:[%s2270 + $0x38] sm:$0xff]
        %v2279 = vld [vmem:[%s2270 + $0x40] sm:$0xff]
        %v2280 = vld [vmem:[%s2270 + $0x48] sm:$0xff]
        %v2281 = vld [vmem:[%s2270 + $0x50] sm:$0xff]
        %v2282 = vld [vmem:[%s2270 + $0x58] sm:$0xff]
        %v2283 = vld [vmem:[%s2270 + $0x60] sm:$0xff]
        %v2284 = vld [vmem:[%s2270 + $0x68] sm:$0xff]
        %v2285 = vld [vmem:[%s2270 + $0x70] sm:$0xff]
        %v2286 = vld [vmem:[%s2270 + $0x78] sm:$0xff]
        %2287 = vmatpush.msra.mxu0 %v2286
        %2288 = vmatpush.msra.mxu0 %v2285
        %2289 = vmatpush.msra.mxu0 %v2284
        %2290 = vmatpush.msra.mxu0 %v2283
        %2291 = vmatpush.msra.mxu0 %v2282
        %2292 = vmatpush.msra.mxu0 %v2281
        %2293 = vmatpush.msra.mxu0 %v2280
        %2294 = vmatpush.msra.mxu0 %v2279
        %2295 = vmatpush.msra.mxu0 %v2278
        %2296 = vmatpush.msra.mxu0 %v2277
        %2297 = vmatpush.msra.mxu0 %v2276
        %2298 = vmatpush.msra.mxu0 %v2275
        %2299 = vmatpush.msra.mxu0 %v2274
        %2300 = vmatpush.msra.mxu0 %v2273
        %2301 = vmatpush.msra.mxu0 %v2272
        %2302 = vmatpush.msra.mxu0 %v2271
        %2303 = vmatmul.f32.gmra.mxu0 %v2262
        %v2304 = vpop.f32.mrf.mxu0
        %v2305 = vadd.f32 0.0, %v2304
        %2306 = vmatmul.f32.gmra.mxu0 %v2263
        %v2307 = vpop.f32.mrf.mxu0
        %v2308 = vadd.f32 0.0, %v2307
        %2309 = vmatmul.f32.gmra.mxu0 %v2264
        %v2310 = vpop.f32.mrf.mxu0
        %v2311 = vadd.f32 0.0, %v2310
        %2312 = vmatmul.f32.gmra.mxu0 %v2265
        %v2313 = vpop.f32.mrf.mxu0
        %v2314 = vadd.f32 0.0, %v2313
        %2315 = vmatmul.f32.gmra.mxu0 %v2266
        %v2316 = vpop.f32.mrf.mxu0
        %v2317 = vadd.f32 0.0, %v2316
        %2318 = vmatmul.f32.gmra.mxu0 %v2267
        %v2319 = vpop.f32.mrf.mxu0
        %v2320 = vadd.f32 0.0, %v2319
        %2321 = vmatmul.f32.gmra.mxu0 %v2268
        %v2322 = vpop.f32.mrf.mxu0
        %v2323 = vadd.f32 0.0, %v2322
        %2324 = vmatmul.f32.gmra.mxu0 %v2269
        %v2325 = vpop.f32.mrf.mxu0
        %v2326 = vadd.f32 0.0, %v2325
        %2327 = vdwg.mxu0
        %2328 = vmatpush.msra.mxu0 %v2261
        %2329 = vmatpush.msra.mxu0 %v2260
        %2330 = vmatpush.msra.mxu0 %v2259
        %2331 = vmatpush.msra.mxu0 %v2258
        %2332 = vmatpush.msra.mxu0 %v2257
        %2333 = vmatpush.msra.mxu0 %v2256
        %2334 = vmatpush.msra.mxu0 %v2255
        %2335 = vmatpush.msra.mxu0 %v2254
        %2336 = vmatpush.msra.mxu0 %v2253
        %2337 = vmatpush.msra.mxu0 %v2252
        %2338 = vmatpush.msra.mxu0 %v2251
        %2339 = vmatpush.msra.mxu0 %v2250
        %2340 = vmatpush.msra.mxu0 %v2249
        %2341 = vmatpush.msra.mxu0 %v2248
        %2342 = vmatpush.msra.mxu0 %v2247
        %2343 = vmatpush.msra.mxu0 %v2246
        %2344 = vmatmul.f32.gmra.mxu0 %v2238
        %v2345 = vpop.f32.mrf.mxu0
        %v2346 = vadd.f32 %v2305, %v2345
        %2347 = vmatmul.f32.gmra.mxu0 %v2239
        %v2348 = vpop.f32.mrf.mxu0
        %v2349 = vadd.f32 %v2308, %v2348
        %2350 = vmatmul.f32.gmra.mxu0 %v2240
        %v2351 = vpop.f32.mrf.mxu0
        %v2352 = vadd.f32 %v2311, %v2351
        %2353 = vmatmul.f32.gmra.mxu0 %v2241
        %v2354 = vpop.f32.mrf.mxu0
        %v2355 = vadd.f32 %v2314, %v2354
        %2356 = vmatmul.f32.gmra.mxu0 %v2242
        %v2357 = vpop.f32.mrf.mxu0
        %v2358 = vadd.f32 %v2317, %v2357
        %2359 = vmatmul.f32.gmra.mxu0 %v2243
        %v2360 = vpop.f32.mrf.mxu0
        %v2361 = vadd.f32 %v2320, %v2360
        %2362 = vmatmul.f32.gmra.mxu0 %v2244
        %v2363 = vpop.f32.mrf.mxu0
        %v2364 = vadd.f32 %v2323, %v2363
        %2365 = vmatmul.f32.gmra.mxu0 %v2245
        %v2366 = vpop.f32.mrf.mxu0
        %v2367 = vadd.f32 %v2326, %v2366
        %2368 = vdwg.mxu0
        %v2369 = vld [vmem:[#allocation6 + $0x2] sm:$0xff]
        %v2370 = vld [vmem:[#allocation6 + $0x12] sm:$0xff]
        %v2371 = vld [vmem:[#allocation6 + $0x22] sm:$0xff]
        %v2372 = vld [vmem:[#allocation6 + $0x32] sm:$0xff]
        %v2373 = vld [vmem:[#allocation6 + $0x42] sm:$0xff]
        %v2374 = vld [vmem:[#allocation6 + $0x52] sm:$0xff]
        %v2375 = vld [vmem:[#allocation6 + $0x62] sm:$0xff]
        %v2376 = vld [vmem:[#allocation6 + $0x72] sm:$0xff]
        %s2377 = scalar_lea.vmem %s11, 256
        %v2378 = vld [vmem:[%s2377] sm:$0xff]
        %v2379 = vld [vmem:[%s2377 + $0x8] sm:$0xff]
        %v2380 = vld [vmem:[%s2377 + $0x10] sm:$0xff]
        %v2381 = vld [vmem:[%s2377 + $0x18] sm:$0xff]
        %v2382 = vld [vmem:[%s2377 + $0x20] sm:$0xff]
        %v2383 = vld [vmem:[%s2377 + $0x28] sm:$0xff]
        %v2384 = vld [vmem:[%s2377 + $0x30] sm:$0xff]
        %v2385 = vld [vmem:[%s2377 + $0x38] sm:$0xff]
        %v2386 = vld [vmem:[%s2377 + $0x40] sm:$0xff]
        %v2387 = vld [vmem:[%s2377 + $0x48] sm:$0xff]
        %v2388 = vld [vmem:[%s2377 + $0x50] sm:$0xff]
        %v2389 = vld [vmem:[%s2377 + $0x58] sm:$0xff]
        %v2390 = vld [vmem:[%s2377 + $0x60] sm:$0xff]
        %v2391 = vld [vmem:[%s2377 + $0x68] sm:$0xff]
        %v2392 = vld [vmem:[%s2377 + $0x70] sm:$0xff]
        %v2393 = vld [vmem:[%s2377 + $0x78] sm:$0xff]
        %2394 = vmatpush.msra.mxu0 %v2393
        %2395 = vmatpush.msra.mxu0 %v2392
        %2396 = vmatpush.msra.mxu0 %v2391
        %2397 = vmatpush.msra.mxu0 %v2390
        %2398 = vmatpush.msra.mxu0 %v2389
        %2399 = vmatpush.msra.mxu0 %v2388
        %2400 = vmatpush.msra.mxu0 %v2387
        %2401 = vmatpush.msra.mxu0 %v2386
        %2402 = vmatpush.msra.mxu0 %v2385
        %2403 = vmatpush.msra.mxu0 %v2384
        %2404 = vmatpush.msra.mxu0 %v2383
        %2405 = vmatpush.msra.mxu0 %v2382
        %2406 = vmatpush.msra.mxu0 %v2381
        %2407 = vmatpush.msra.mxu0 %v2380
        %2408 = vmatpush.msra.mxu0 %v2379
        %2409 = vmatpush.msra.mxu0 %v2378
        %2410 = vmatmul.f32.gmra.mxu0 %v2369
        %v2411 = vpop.f32.mrf.mxu0
        %v2412 = vadd.f32 0.0, %v2411
        %2413 = vmatmul.f32.gmra.mxu0 %v2370
        %v2414 = vpop.f32.mrf.mxu0
        %v2415 = vadd.f32 0.0, %v2414
        %2416 = vmatmul.f32.gmra.mxu0 %v2371
        %v2417 = vpop.f32.mrf.mxu0
        %v2418 = vadd.f32 0.0, %v2417
        %2419 = vmatmul.f32.gmra.mxu0 %v2372
        %v2420 = vpop.f32.mrf.mxu0
        %v2421 = vadd.f32 0.0, %v2420
        %2422 = vmatmul.f32.gmra.mxu0 %v2373
        %v2423 = vpop.f32.mrf.mxu0
        %v2424 = vadd.f32 0.0, %v2423
        %2425 = vmatmul.f32.gmra.mxu0 %v2374
        %v2426 = vpop.f32.mrf.mxu0
        %v2427 = vadd.f32 0.0, %v2426
        %2428 = vmatmul.f32.gmra.mxu0 %v2375
        %v2429 = vpop.f32.mrf.mxu0
        %v2430 = vadd.f32 0.0, %v2429
        %2431 = vmatmul.f32.gmra.mxu0 %v2376
        %v2432 = vpop.f32.mrf.mxu0
        %v2433 = vadd.f32 0.0, %v2432
        %2434 = vdwg.mxu0
        %v2435 = vadd.f32 %v2346, %v2412
        %v2436 = vadd.f32 %v2349, %v2415
        %v2437 = vadd.f32 %v2352, %v2418
        %v2438 = vadd.f32 %v2355, %v2421
        %v2439 = vadd.f32 %v2358, %v2424
        %v2440 = vadd.f32 %v2361, %v2427
        %v2441 = vadd.f32 %v2364, %v2430
        %v2442 = vadd.f32 %v2367, %v2433
        %v2443 = vld [vmem:[#allocation9] sm:$0x1]
        %v2445 = vperm.slane %v2443, 0
        %v2447 = vadd.f32 %v2435, %v2445
        %v2448 = vadd.f32 %v2436, %v2445
        %v2449 = vadd.f32 %v2437, %v2445
        %v2450 = vadd.f32 %v2438, %v2445
        %v2451 = vadd.f32 %v2439, %v2445
        %v2452 = vadd.f32 %v2440, %v2445
        %v2453 = vadd.f32 %v2441, %v2445
        %v2454 = vadd.f32 %v2442, %v2445
        %v2455 = vadd.f32 %v2447, %v1951
        %v2456 = vadd.f32 %v2448, %v1954
        %v2457 = vadd.f32 %v2449, %v1957
        %v2458 = vadd.f32 %v2450, %v1960
        %v2459 = vadd.f32 %v2451, %v1963
        %v2460 = vadd.f32 %v2452, %v1966
        %v2461 = vadd.f32 %v2453, %v1969
        %v2462 = vadd.f32 %v2454, %v1972
        %v2463 = vmax.f32 %v2455, 0.0
        %v2464 = vmax.f32 %v2456, 0.0
        %v2465 = vmax.f32 %v2457, 0.0
        %v2466 = vmax.f32 %v2458, 0.0
        %v2467 = vmax.f32 %v2459, 0.0
        %v2468 = vmax.f32 %v2460, 0.0
        %v2469 = vmax.f32 %v2461, 0.0
        %v2470 = vmax.f32 %v2462, 0.0
        %vm2471 = vcmask 1043456
        %v2472 = vsel %vm2471, %v2463, 0.0
        %v2473 = vrot.slane %v2472, 4
        %v2474 = vadd.f32 %v2472, %v2473
        %v2475 = vrot.slane %v2474, 2
        %v2476 = vadd.f32 %v2474, %v2475
        %v2477 = vrot.slane %v2476, 1
        %v2478 = vadd.f32 %v2476, %v2477
        %v2479 = vsel %vm2471, %v2464, 0.0
        %v2480 = vrot.slane %v2479, 4
        %v2481 = vadd.f32 %v2479, %v2480
        %v2482 = vrot.slane %v2481, 2
        %v2483 = vadd.f32 %v2481, %v2482
        %v2484 = vrot.slane %v2483, 1
        %v2485 = vadd.f32 %v2483, %v2484
        %v2486 = vsel %vm2471, %v2465, 0.0
        %v2487 = vrot.slane %v2486, 4
        %v2488 = vadd.f32 %v2486, %v2487
        %v2489 = vrot.slane %v2488, 2
        %v2490 = vadd.f32 %v2488, %v2489
        %v2491 = vrot.slane %v2490, 1
        %v2492 = vadd.f32 %v2490, %v2491
        %v2493 = vsel %vm2471, %v2466, 0.0
        %v2494 = vrot.slane %v2493, 4
        %v2495 = vadd.f32 %v2493, %v2494
        %v2496 = vrot.slane %v2495, 2
        %v2497 = vadd.f32 %v2495, %v2496
        %v2498 = vrot.slane %v2497, 1
        %v2499 = vadd.f32 %v2497, %v2498
        %v2500 = vsel %vm2471, %v2467, 0.0
        %v2501 = vrot.slane %v2500, 4
        %v2502 = vadd.f32 %v2500, %v2501
        %v2503 = vrot.slane %v2502, 2
        %v2504 = vadd.f32 %v2502, %v2503
        %v2505 = vrot.slane %v2504, 1
        %v2506 = vadd.f32 %v2504, %v2505
        %v2507 = vsel %vm2471, %v2468, 0.0
        %v2508 = vrot.slane %v2507, 4
        %v2509 = vadd.f32 %v2507, %v2508
        %v2510 = vrot.slane %v2509, 2
        %v2511 = vadd.f32 %v2509, %v2510
        %v2512 = vrot.slane %v2511, 1
        %v2513 = vadd.f32 %v2511, %v2512
        %v2514 = vsel %vm2471, %v2469, 0.0
        %v2515 = vrot.slane %v2514, 4
        %v2516 = vadd.f32 %v2514, %v2515
        %v2517 = vrot.slane %v2516, 2
        %v2518 = vadd.f32 %v2516, %v2517
        %v2519 = vrot.slane %v2518, 1
        %v2520 = vadd.f32 %v2518, %v2519
        %v2521 = vsel %vm2471, %v2470, 0.0
        %v2522 = vrot.slane %v2521, 4
        %v2523 = vadd.f32 %v2521, %v2522
        %v2524 = vrot.slane %v2523, 2
        %v2525 = vadd.f32 %v2523, %v2524
        %v2526 = vrot.slane %v2525, 1
        %v2527 = vadd.f32 %v2525, %v2526
        %v2528 = vrcp.pop 4.0
        %v2529 = vmul.f32 4.0, %v2528
        %v2530 = vsub.f32 1.0, %v2529
        %v2531 = vmul.f32 %v2528, %v2530
        %v2532 = vadd.f32 %v2528, %v2531
        %vm2533 = vweird.f32 %v2528
        %v2534 = vsel %vm2533, %v2528, %v2532
        %v2535 = vmul.f32 %v2478, %v2534
        %v2536 = vmul.f32 %v2485, %v2534
        %v2537 = vmul.f32 %v2492, %v2534
        %v2538 = vmul.f32 %v2499, %v2534
        %v2539 = vmul.f32 %v2506, %v2534
        %v2540 = vmul.f32 %v2513, %v2534
        %v2541 = vmul.f32 %v2520, %v2534
        %v2542 = vmul.f32 %v2527, %v2534
        %v2543 = vld [vmem:[%s15] sm:$0xff]
        %v2544 = vld [vmem:[%s15 + $0x8] sm:$0xff]
        %v2545 = vld [vmem:[%s15 + $0x10] sm:$0xff]
        %v2546 = vld [vmem:[%s15 + $0x18] sm:$0xff]
        %v2547 = vld [vmem:[%s15 + $0x20] sm:$0xff]
        %v2548 = vld [vmem:[%s15 + $0x28] sm:$0xff]
        %v2549 = vld [vmem:[%s15 + $0x30] sm:$0xff]
        %v2550 = vld [vmem:[%s15 + $0x38] sm:$0xff]
        %v2551 = vld [vmem:[%s15 + $0x40] sm:$0xff]
        %v2552 = vld [vmem:[%s15 + $0x48] sm:$0xff]
        %v2553 = vld [vmem:[%s15 + $0x50] sm:$0xff]
        %v2554 = vld [vmem:[%s15 + $0x58] sm:$0xff]
        %v2555 = vld [vmem:[%s15 + $0x60] sm:$0xff]
        %v2556 = vld [vmem:[%s15 + $0x68] sm:$0xff]
        %v2557 = vld [vmem:[%s15 + $0x70] sm:$0xff]
        %v2558 = vld [vmem:[%s15 + $0x78] sm:$0xff]
        %v2559 = vld [vmem:[#allocation14] sm:$0x1]
        %v2561 = vperm.slane %v2559, 0
        %vm2571 = vcmask 1041409
        %v2572 = vsel %vm2571, %v2536, %v2535
        %vm2573 = vcmask 1042434
        %v2574 = vsel %vm2573, %v2537, %v2572
        %vm2575 = vcmask 1043459
        %v2576 = vsel %vm2575, %v2538, %v2574
        %vm2577 = vcmask 1044484
        %v2578 = vsel %vm2577, %v2539, %v2576
        %vm2579 = vcmask 1045509
        %v2580 = vsel %vm2579, %v2540, %v2578
        %vm2581 = vcmask 1046534
        %v2582 = vsel %vm2581, %v2541, %v2580
        %vm2583 = vcmask 1047559
        %v2584 = vsel %vm2583, %v2542, %v2582
        %2586 = vmatpush.msra.mxu0 %v2558
        %2587 = vmatpush.msra.mxu0 %v2557
        %2588 = vmatpush.msra.mxu0 %v2556
        %2589 = vmatpush.msra.mxu0 %v2555
        %2590 = vmatpush.msra.mxu0 %v2554
        %2591 = vmatpush.msra.mxu0 %v2553
        %2592 = vmatpush.msra.mxu0 %v2552
        %2593 = vmatpush.msra.mxu0 %v2551
        %2594 = vmatpush.msra.mxu0 %v2550
        %2595 = vmatpush.msra.mxu0 %v2549
        %2596 = vmatpush.msra.mxu0 %v2548
        %2597 = vmatpush.msra.mxu0 %v2547
        %2598 = vmatpush.msra.mxu0 %v2546
        %2599 = vmatpush.msra.mxu0 %v2545
        %2600 = vmatpush.msra.mxu0 %v2544
        %2601 = vmatpush.msra.mxu0 %v2543
        %2602 = vmatmul.f32.gmra.mxu0 %v2584
        %v2603 = vpop.f32.mrf.mxu0
        %v2604 = vadd.f32 %v2561, %v2603
        %2605 = vdwg.mxu0
        %v2606 = vmax.f32 %v2604, 0.0
        %v2607 = vld [vmem:[#allocation15] sm:$0xff]
        %v2608 = vld [vmem:[#allocation15 + $0x8] sm:$0xff]
        %v2609 = vld [vmem:[#allocation15 + $0x10] sm:$0xff]
        %v2610 = vld [vmem:[#allocation15 + $0x18] sm:$0xff]
        %v2611 = vld [vmem:[#allocation15 + $0x20] sm:$0xff]
        %v2612 = vld [vmem:[#allocation15 + $0x28] sm:$0xff]
        %v2613 = vld [vmem:[#allocation15 + $0x30] sm:$0xff]
        %v2614 = vld [vmem:[#allocation15 + $0x38] sm:$0xff]
        %v2615 = vld [vmem:[#allocation17] sm:$0x1]
        %v2617 = vperm.slane %v2615, 0
        %v2620 = vsel %vm767, %v2606, 0
        %2622 = vmatpush.msra.mxu0 0.0
        %2623 = vmatpush.msra.mxu0 0.0
        %2624 = vmatpush.msra.mxu0 0.0
        %2625 = vmatpush.msra.mxu0 0.0
        %2626 = vmatpush.msra.mxu0 0.0
        %2627 = vmatpush.msra.mxu0 0.0
        %2628 = vmatpush.msra.mxu0 0.0
        %2629 = vmatpush.msra.mxu0 0.0
        %2630 = vmatpush.msra.mxu0 %v2614
        %2631 = vmatpush.msra.mxu0 %v2613
        %2632 = vmatpush.msra.mxu0 %v2612
        %2633 = vmatpush.msra.mxu0 %v2611
        %2634 = vmatpush.msra.mxu0 %v2610
        %2635 = vmatpush.msra.mxu0 %v2609
        %2636 = vmatpush.msra.mxu0 %v2608
        %2637 = vmatpush.msra.mxu0 %v2607
        %2638 = vmatmul.f32.gmra.mxu0 %v2620
        %v2639 = vpop.f32.mrf.mxu0
        %v2640 = vadd.f32 %v2617, %v2639
        %2641 = vdwg.mxu0
        %vm2642 = vcmask 15360
        %2643 = vst.msk [vmem:[%s708] sm:$0xff] %vm2642, %v2640
        %p2644 = scmp.lt.s32.totalorder %s34, 1
        %s2645 = scalar_select %p2644, %s34, 1
        %s2646 = smul.addr %s2645, 8
        %s2647 = scalar_lea.vmem %s19, %s2646
        // Predicated region
        $region125: #{resnet1d_forward.1} parent=95 // pred_check
          %p2648 = pneg %p456
        $region126: #{resnet1d_forward.1} parent=95 // pred_check_branch
          %2650 = sbr.rel (%p2648) target = $region128
        $region127: #{resnet1d_forward.1} parent=95 // pred_region
          _
        $region128: #{resnet1d_forward.1} parent=95 // pred_fallthru
          _
      $region96: #{resnet1d_forward.1} parent=5 // pred_fallthru
        _
      %p2651 = scmp.le.s32.totalorder 2, %s29
      // Predicated region
      $region129: #{resnet1d_forward.1} parent=5 // pred_check
        %p2652 = pneg %p2651
      $region130: #{resnet1d_forward.1} parent=5 // pred_check_branch
        %2654 = sbr.rel (%p2652) target = $region132
      $region131: #{resnet1d_forward.1} parent=5 // pred_region
        %s2655 = ssub.s32 %s29, 2
        // Predicated region
        $region133: #{resnet1d_forward.1} parent=131 // pred_check
          %p2656 = pneg %p462
        $region134: #{resnet1d_forward.1} parent=131 // pred_check_branch
          %2658 = sbr.rel (%p2656) target = $region136
        $region135: #{resnet1d_forward.1} parent=131 // pred_region
          %p2659 = scmp.lt.s32.totalorder %s35, 1
          %s2660 = scalar_select %p2659, %s35, 1
          %s2661 = smul.addr %s2660, 8
          %s2662 = scalar_lea.vmem %s19, %s2661
        $region136: #{resnet1d_forward.1} parent=131 // pred_fallthru
          _
      $region132: #{resnet1d_forward.1} parent=5 // pred_fallthru
        _
    $region6: #{resnet1d_forward.1} parent=1 // loop_footer
      %s33 = sadd.s32 1, %s29
    $region7: #{resnet1d_forward.1} parent=1 // loop_footer_branch
      %28 = sbr.rel target = $region3
    $region8: #{resnet1d_forward.1} parent=1 // loop_exit
      _
    %2663 = vsyncpa [#allocation8], 1
    %s2664 = scalar_lea.sflag [#allocation8], 1
    %2665 = vsyncpa %s2664, 1
    %2666 = vsyncpa [#allocation10], 1
    %2667 = vsyncpa [#allocation13], 1
    %2668 = vsyncpa [#allocation16], 1

</llo_original>
